<compile_context>
chip_gen: v7x
topology: tpu7x:2x2x1
jax: 0.10.0
libtpu: 0.0.40
codegen_flags: <defaults>
</compile_context>

<pallas_src>
import functools
import math

import jax
import jax.numpy as jnp
from jax.experimental import pallas as pl
from jax.experimental.pallas import tpu as pltpu


def _gelu_tanh(x):
  # TODO(synk): PyTorch nn.GELU() default is the exact erf formulation; the
  # tanh approximation is used here (erf lowering in Mosaic is uncertain);
  # max deviation ~3e-3 and the JAX reference below uses the same formula.
  c = math.sqrt(2.0 / math.pi)
  return 0.5 * x * (1.0 + jnp.tanh(c * (x + 0.044715 * x * x * x)))


def encoder_stack_kernel(
    x_ref,
    wqkv_ref, bqkv_ref, wo_ref, bo_ref, ln1g_ref, ln1b_ref,
    w1_ref, b1_ref, w2_ref, b2_ref, ln2g_ref, ln2b_ref,
    out_ref,
    *, num_heads, num_layers):
  TB, S, D = x_ref.shape
  Dh = D // num_heads
  N = TB * S
  scale = 1.0 / math.sqrt(Dh)
  bf16 = jnp.bfloat16

  # flatten the batch tile: all row-wise matmuls run on (TB*S, D)
  h = x_ref[...].astype(jnp.float32).reshape(N, D)

  for l in range(num_layers):           # static unroll over layers
    # ---- load per-layer parameters once (hoisted broadcasts) ----
    wqkv = wqkv_ref[l]                              # (D, 3D)  bf16
    bqkv = bqkv_ref[l].astype(jnp.float32)          # (1, 3D)
    wo = wo_ref[l]                                  # (D, D)   bf16
    bo = bo_ref[l].astype(jnp.float32)              # (1, D)
    g1 = ln1g_ref[l].astype(jnp.float32)
    be1 = ln1b_ref[l].astype(jnp.float32)
    w1 = w1_ref[l]                                  # (D, F)   bf16
    b1 = b1_ref[l].astype(jnp.float32)              # (1, F)
    w2 = w2_ref[l]                                  # (F, D)   bf16
    b2 = b2_ref[l].astype(jnp.float32)              # (1, D)
    g2 = ln2g_ref[l].astype(jnp.float32)
    be2 = ln2b_ref[l].astype(jnp.float32)

    # ---- fused QKV projection over all TB*S rows (MXU, f32 accumulation) ----
    qkv = jnp.dot(h.astype(bf16), wqkv,
                  preferred_element_type=jnp.float32) + bqkv       # (N, 3D)
    q = (qkv[:, 0:D] * scale).reshape(TB, S, D)   # fold 1/sqrt(Dh) into q once
    k = qkv[:, D:2 * D].reshape(TB, S, D)
    v = qkv[:, 2 * D:3 * D].reshape(TB, S, D)

    # ---- self-attention, batched over the batch tile; heads via lane slices ----
    head_ctx = []
    for hh in range(num_heads):
      sl = slice(hh * Dh, (hh + 1) * Dh)
      qh = q[:, :, sl].astype(bf16)                 # (TB, S, Dh)
      kh = k[:, :, sl].astype(bf16)
      vh = v[:, :, sl].astype(bf16)
      sc = jnp.einsum('bqd,bkd->bqk', qh, kh,
                      preferred_element_type=jnp.float32)          # (TB, S, S)
      sc = sc - jnp.max(sc, axis=-1, keepdims=True)
      p = jnp.exp(sc)
      p = p * pl.reciprocal(jnp.sum(p, axis=-1, keepdims=True), approx=True)
      head_ctx.append(
          jnp.einsum('bqk,bkd->bqd', p.astype(bf16), vh,
                     preferred_element_type=jnp.float32))          # (TB, S, Dh)
    ctx = jnp.concatenate(head_ctx, axis=-1).reshape(N, D)

    attn = jnp.dot(ctx.astype(bf16), wo,
                   preferred_element_type=jnp.float32) + bo        # (N, D)

    # ---- residual + LayerNorm 1 (post-LN) ----
    r1 = h + attn
    mu1 = jnp.mean(r1, axis=-1, keepdims=True)
    var1 = jnp.mean((r1 - mu1) ** 2, axis=-1, keepdims=True)
    n1 = (r1 - mu1) * jax.lax.rsqrt(var1 + 1e-5) * g1 + be1

    # ---- feed-forward (GELU) on all TB*S rows ----
    f = jnp.dot(n1.astype(bf16), w1,
                preferred_element_type=jnp.float32) + b1           # (N, F)
    f = _gelu_tanh(f)
    f = jnp.dot(f.astype(bf16), w2,
                preferred_element_type=jnp.float32) + b2           # (N, D)

    # ---- residual + LayerNorm 2 ----
    r2 = n1 + f
    mu2 = jnp.mean(r2, axis=-1, keepdims=True)
    var2 = jnp.mean((r2 - mu2) ** 2, axis=-1, keepdims=True)
    h = (r2 - mu2) * jax.lax.rsqrt(var2 + 1e-5) * g2 + be2

  out_ref[...] = h.reshape(TB, S, D).astype(out_ref.dtype)


def standard_transformer_forward(x, params, *, num_heads, num_layers,
                                 batch_tile=None):
  B, S, D = x.shape
  if batch_tile is None:
    batch_tile = B
    # aim for <=~1024 rows of work per grid step once B gets large
    while batch_tile * S > 1024 and batch_tile % 2 == 0:
      batch_tile //= 2
  TB = batch_tile
  assert B % TB == 0, "batch must be divisible by the batch tile"
  assert D % num_heads == 0, "d_model must be divisible by num_heads"

  def full(shape):
    nd = len(shape)
    return pl.BlockSpec(shape, lambda b, _nd=nd: (0,) * _nd)

  kernel = functools.partial(encoder_stack_kernel,
                             num_heads=num_heads, num_layers=num_layers)

  L = num_layers
  F = params["w1"].shape[2]

  return pl.pallas_call(
      kernel,
      out_shape=jax.ShapeDtypeStruct((B, S, D), x.dtype),
      grid=(B // TB,),
      in_specs=[
          pl.BlockSpec((TB, S, D), lambda b: (b, 0, 0)),   # x
          full((L, D, 3 * D)), full((L, 1, 3 * D)),        # Wqkv, bqkv
          full((L, D, D)), full((L, 1, D)),                # Wo, bo
          full((L, 1, D)), full((L, 1, D)),                # ln1 gamma, beta
          full((L, D, F)), full((L, 1, F)),                # FFN W1, b1
          full((L, F, D)), full((L, 1, D)),                # FFN W2, b2
          full((L, 1, D)), full((L, 1, D)),                # ln2 gamma, beta
      ],
      out_specs=pl.BlockSpec((TB, S, D), lambda b: (b, 0, 0)),
      compiler_params=pltpu.CompilerParams(
          dimension_semantics=("parallel",)),   # batch tiles are independent
      # At scale: add vmem_limit_bytes=... here and tile W1/W2 over a
      # reduction grid axis (or pipeline_mode=pl.Buffered(1) on weight specs).
  )(x,
    params["wqkv"], params["bqkv"], params["wo"], params["bo"],
    params["ln1_g"], params["ln1_b"],
    params["w1"], params["b1"], params["w2"], params["b2"],
    params["ln2_g"], params["ln2_b"])


def init_params(key, *, d_model, d_ff, num_layers):
  D, F, L = d_model, d_ff, num_layers
  ks = jax.random.split(key, 8)
  std_d = 1.0 / math.sqrt(D)
  std_f = 1.0 / math.sqrt(F)

  def w(k, shape, std):
    return jax.random.normal(k, (L,) + shape, jnp.float32) * std

  return {
      # matmul weights stored pre-transposed (in, out), bf16 (MXU-native);
      # biases / LN params kept in f32.  (PyTorch uses uniform bias init;
      # small normals are used here — immaterial for the kernel check.)
      "wqkv": w(ks[0], (D, 3 * D), std_d).astype(jnp.bfloat16),
      "bqkv": w(ks[1], (1, 3 * D), std_d),
      "wo":   w(ks[2], (D, D), std_d).astype(jnp.bfloat16),
      "bo":   w(ks[3], (1, D), std_d),
      "ln1_g": jnp.ones((L, 1, D), jnp.float32),
      "ln1_b": jnp.zeros((L, 1, D), jnp.float32),
      "w1":   w(ks[4], (D, F), std_d).astype(jnp.bfloat16),
      "b1":   w(ks[5], (1, F), std_d),
      "w2":   w(ks[6], (F, D), std_f).astype(jnp.bfloat16),
      "b2":   w(ks[7], (1, D), std_f),
      "ln2_g": jnp.ones((L, 1, D), jnp.float32),
      "ln2_b": jnp.zeros((L, 1, D), jnp.float32),
  }


def reference_forward(x, params, *, num_heads, num_layers):
  """Plain-JAX reference with the same mixed-precision policy as the kernel."""
  B, S, D = x.shape
  Dh = D // num_heads
  scale = 1.0 / math.sqrt(Dh)
  bf16 = jnp.bfloat16

  def ln(a, g, b):
    mu = jnp.mean(a, axis=-1, keepdims=True)
    var = jnp.mean((a - mu) ** 2, axis=-1, keepdims=True)
    return (a - mu) * jax.lax.rsqrt(var + 1e-5) * g + b

  h = x.astype(jnp.float32)
  for l in range(num_layers):
    qkv = jnp.einsum("bsd,df->bsf", h.astype(bf16), params["wqkv"][l],
                     preferred_element_type=jnp.float32) + params["bqkv"][l]
    q = (qkv[..., 0:D] * scale).reshape(B, S, num_heads, Dh)
    k = qkv[..., D:2 * D].reshape(B, S, num_heads, Dh)
    v = qkv[..., 2 * D:3 * D].reshape(B, S, num_heads, Dh)
    sc = jnp.einsum("bqhd,bkhd->bhqk", q.astype(bf16), k.astype(bf16),
                    preferred_element_type=jnp.float32)
    p = jax.nn.softmax(sc, axis=-1)
    ctx = jnp.einsum("bhqk,bkhd->bqhd", p.astype(bf16), v.astype(bf16),
                     preferred_element_type=jnp.float32).reshape(B, S, D)
    attn = jnp.einsum("bsd,df->bsf", ctx.astype(bf16), params["wo"][l],
                      preferred_element_type=jnp.float32) + params["bo"][l]
    n1 = ln(h + attn, params["ln1_g"][l], params["ln1_b"][l])
    f = jnp.einsum("bsd,df->bsf", n1.astype(bf16), params["w1"][l],
                   preferred_element_type=jnp.float32) + params["b1"][l]
    f = _gelu_tanh(f)
    f = jnp.einsum("bsf,fd->bsd", f.astype(bf16), params["w2"][l],
                   preferred_element_type=jnp.float32) + params["b2"][l]
    h = ln(n1 + f, params["ln2_g"][l], params["ln2_b"][l])
  return h


if __name__ == "__main__":
  B, S, D, H, F, L = 2, 8, 32, 4, 64, 2

  key = jax.random.PRNGKey(0)
  k_x, k_p = jax.random.split(key)
  x = jax.random.normal(k_x, (B, S, D), jnp.float32)
  params = init_params(k_p, d_model=D, d_ff=F, num_layers=L)

  out = standard_transformer_forward(x, params, num_heads=H, num_layers=L)
  out = jax.block_until_ready(out)

  ref = reference_forward(x, params, num_heads=H, num_layers=L)
  assert out.shape == (B, S, D)
  assert jnp.allclose(out, ref, atol=2e-2, rtol=2e-2), (
      "max abs err", float(jnp.max(jnp.abs(out - ref))))

  print("KERNEL_OK")
</pallas_src>

<mosaic_0001>
module attributes {stable_mosaic.version = 11 : i64} {
  func.func @encoder_stack_kernel(%arg0: i32, %arg1: memref<2x8x32xf32, #tpu.memory_space<vmem>>, %arg2: memref<2x32x96xbf16, #tpu.memory_space<vmem>>, %arg3: memref<2x1x96xf32, #tpu.memory_space<vmem>>, %arg4: memref<2x32x32xbf16, #tpu.memory_space<vmem>>, %arg5: memref<2x1x32xf32, #tpu.memory_space<vmem>>, %arg6: memref<2x1x32xf32, #tpu.memory_space<vmem>>, %arg7: memref<2x1x32xf32, #tpu.memory_space<vmem>>, %arg8: memref<2x32x64xbf16, #tpu.memory_space<vmem>>, %arg9: memref<2x1x64xf32, #tpu.memory_space<vmem>>, %arg10: memref<2x64x32xbf16, #tpu.memory_space<vmem>>, %arg11: memref<2x1x32xf32, #tpu.memory_space<vmem>>, %arg12: memref<2x1x32xf32, #tpu.memory_space<vmem>>, %arg13: memref<2x1x32xf32, #tpu.memory_space<vmem>>, %arg14: memref<2x8x32xf32, #tpu.memory_space<vmem>>) attributes {dimension_semantics = [#tpu.dimension_semantics<parallel>], iteration_bounds = array<i64: 1>, scalar_prefetch = 0 : i64, scratch_operands = 0 : i64, tpu.core_type = #tpu.core_type<tc>, window_params = [{transform_indices = @transform_0, window_bounds = array<i64: 2, 8, 32>}, {pipeline_mode = #tpu.pipeline_mode<synchronous>, transform_indices = @transform_1, window_bounds = array<i64: 2, 32, 96>}, {pipeline_mode = #tpu.pipeline_mode<synchronous>, transform_indices = @transform_2, window_bounds = array<i64: 2, 1, 96>}, {pipeline_mode = #tpu.pipeline_mode<synchronous>, transform_indices = @transform_3, window_bounds = array<i64: 2, 32, 32>}, {pipeline_mode = #tpu.pipeline_mode<synchronous>, transform_indices = @transform_4, window_bounds = array<i64: 2, 1, 32>}, {pipeline_mode = #tpu.pipeline_mode<synchronous>, transform_indices = @transform_5, window_bounds = array<i64: 2, 1, 32>}, {pipeline_mode = #tpu.pipeline_mode<synchronous>, transform_indices = @transform_6, window_bounds = array<i64: 2, 1, 32>}, {pipeline_mode = #tpu.pipeline_mode<synchronous>, transform_indices = @transform_7, window_bounds = array<i64: 2, 32, 64>}, {pipeline_mode = #tpu.pipeline_mode<synchronous>, transform_indices = @transform_8, window_bounds = array<i64: 2, 1, 64>}, {pipeline_mode = #tpu.pipeline_mode<synchronous>, transform_indices = @transform_9, window_bounds = array<i64: 2, 64, 32>}, {pipeline_mode = #tpu.pipeline_mode<synchronous>, transform_indices = @transform_10, window_bounds = array<i64: 2, 1, 32>}, {pipeline_mode = #tpu.pipeline_mode<synchronous>, transform_indices = @transform_11, window_bounds = array<i64: 2, 1, 32>}, {pipeline_mode = #tpu.pipeline_mode<synchronous>, transform_indices = @transform_12, window_bounds = array<i64: 2, 1, 32>}, {transform_indices = @transform_13, window_bounds = array<i64: 2, 8, 32>}]} {
    %c0 = arith.constant 0 : index
    %c0_0 = arith.constant 0 : index
    %c0_1 = arith.constant 0 : index
    %0 = vector.load %arg1[%c0, %c0_0, %c0_1] : memref<2x8x32xf32, #tpu.memory_space<vmem>>, vector<2x8x32xf32>
    %1 = vector.shape_cast %0 : vector<2x8x32xf32> to vector<16x32xf32>
    %c0_2 = arith.constant 0 : index
    %c0_3 = arith.constant 0 : index
    %c0_4 = arith.constant 0 : index
    %2 = vector.load %arg2[%c0_2, %c0_3, %c0_4] : memref<2x32x96xbf16, #tpu.memory_space<vmem>>, vector<1x32x96xbf16>
    %3 = vector.shape_cast %2 : vector<1x32x96xbf16> to vector<32x96xbf16>
    %c0_5 = arith.constant 0 : index
    %c0_6 = arith.constant 0 : index
    %c0_7 = arith.constant 0 : index
    %4 = vector.load %arg3[%c0_5, %c0_6, %c0_7] : memref<2x1x96xf32, #tpu.memory_space<vmem>>, vector<1x1x96xf32>
    %5 = vector.shape_cast %4 : vector<1x1x96xf32> to vector<1x96xf32>
    %c0_8 = arith.constant 0 : index
    %c0_9 = arith.constant 0 : index
    %c0_10 = arith.constant 0 : index
    %6 = vector.load %arg4[%c0_8, %c0_9, %c0_10] : memref<2x32x32xbf16, #tpu.memory_space<vmem>>, vector<1x32x32xbf16>
    %7 = vector.shape_cast %6 : vector<1x32x32xbf16> to vector<32x32xbf16>
    %c0_11 = arith.constant 0 : index
    %c0_12 = arith.constant 0 : index
    %c0_13 = arith.constant 0 : index
    %8 = vector.load %arg5[%c0_11, %c0_12, %c0_13] : memref<2x1x32xf32, #tpu.memory_space<vmem>>, vector<1x1x32xf32>
    %9 = vector.shape_cast %8 : vector<1x1x32xf32> to vector<1x32xf32>
    %c0_14 = arith.constant 0 : index
    %c0_15 = arith.constant 0 : index
    %c0_16 = arith.constant 0 : index
    %10 = vector.load %arg6[%c0_14, %c0_15, %c0_16] : memref<2x1x32xf32, #tpu.memory_space<vmem>>, vector<1x1x32xf32>
    %11 = vector.shape_cast %10 : vector<1x1x32xf32> to vector<1x32xf32>
    %c0_17 = arith.constant 0 : index
    %c0_18 = arith.constant 0 : index
    %c0_19 = arith.constant 0 : index
    %12 = vector.load %arg7[%c0_17, %c0_18, %c0_19] : memref<2x1x32xf32, #tpu.memory_space<vmem>>, vector<1x1x32xf32>
    %13 = vector.shape_cast %12 : vector<1x1x32xf32> to vector<1x32xf32>
    %c0_20 = arith.constant 0 : index
    %c0_21 = arith.constant 0 : index
    %c0_22 = arith.constant 0 : index
    %14 = vector.load %arg8[%c0_20, %c0_21, %c0_22] : memref<2x32x64xbf16, #tpu.memory_space<vmem>>, vector<1x32x64xbf16>
    %15 = vector.shape_cast %14 : vector<1x32x64xbf16> to vector<32x64xbf16>
    %c0_23 = arith.constant 0 : index
    %c0_24 = arith.constant 0 : index
    %c0_25 = arith.constant 0 : index
    %16 = vector.load %arg9[%c0_23, %c0_24, %c0_25] : memref<2x1x64xf32, #tpu.memory_space<vmem>>, vector<1x1x64xf32>
    %17 = vector.shape_cast %16 : vector<1x1x64xf32> to vector<1x64xf32>
    %c0_26 = arith.constant 0 : index
    %c0_27 = arith.constant 0 : index
    %c0_28 = arith.constant 0 : index
    %18 = vector.load %arg10[%c0_26, %c0_27, %c0_28] : memref<2x64x32xbf16, #tpu.memory_space<vmem>>, vector<1x64x32xbf16>
    %19 = vector.shape_cast %18 : vector<1x64x32xbf16> to vector<64x32xbf16>
    %c0_29 = arith.constant 0 : index
    %c0_30 = arith.constant 0 : index
    %c0_31 = arith.constant 0 : index
    %20 = vector.load %arg11[%c0_29, %c0_30, %c0_31] : memref<2x1x32xf32, #tpu.memory_space<vmem>>, vector<1x1x32xf32>
    %21 = vector.shape_cast %20 : vector<1x1x32xf32> to vector<1x32xf32>
    %c0_32 = arith.constant 0 : index
    %c0_33 = arith.constant 0 : index
    %c0_34 = arith.constant 0 : index
    %22 = vector.load %arg12[%c0_32, %c0_33, %c0_34] : memref<2x1x32xf32, #tpu.memory_space<vmem>>, vector<1x1x32xf32>
    %23 = vector.shape_cast %22 : vector<1x1x32xf32> to vector<1x32xf32>
    %c0_35 = arith.constant 0 : index
    %c0_36 = arith.constant 0 : index
    %c0_37 = arith.constant 0 : index
    %24 = vector.load %arg13[%c0_35, %c0_36, %c0_37] : memref<2x1x32xf32, #tpu.memory_space<vmem>>, vector<1x1x32xf32>
    %25 = vector.shape_cast %24 : vector<1x1x32xf32> to vector<1x32xf32>
    %26 = arith.truncf %1 : vector<16x32xf32> to vector<16x32xbf16>
    %cst = arith.constant dense<0.000000e+00> : vector<16x96xf32>
    %27 = tpu.matmul %26, %3, %cst {dimension_numbers = #tpu.dot_dimension_numbers<[1], [0], [0], [1], [0, 0, 1, 1], [], []>} : vector<16x32xbf16>, vector<32x96xbf16>, vector<16x96xf32> -> vector<16x96xf32>
    %28 = vector.broadcast %5 : vector<1x96xf32> to vector<16x96xf32>
    %29 = arith.addf %27, %28 : vector<16x96xf32>
    %30 = vector.extract_strided_slice %29 {offsets = [0, 0], sizes = [16, 32], strides = [1, 1]} : vector<16x96xf32> to vector<16x32xf32>
    %cst_38 = arith.constant 0.353553385 : f32
    %31 = vector.broadcast %cst_38 : f32 to vector<16x32xf32>
    %32 = arith.mulf %30, %31 : vector<16x32xf32>
    %33 = vector.shape_cast %32 : vector<16x32xf32> to vector<2x8x32xf32>
    %34 = vector.extract_strided_slice %29 {offsets = [0, 32], sizes = [16, 32], strides = [1, 1]} : vector<16x96xf32> to vector<16x32xf32>
    %35 = vector.shape_cast %34 : vector<16x32xf32> to vector<2x8x32xf32>
    %36 = vector.extract_strided_slice %29 {offsets = [0, 64], sizes = [16, 32], strides = [1, 1]} : vector<16x96xf32> to vector<16x32xf32>
    %37 = vector.shape_cast %36 : vector<16x32xf32> to vector<2x8x32xf32>
    %38 = vector.extract_strided_slice %33 {offsets = [0, 0, 0], sizes = [2, 8, 8], strides = [1, 1, 1]} : vector<2x8x32xf32> to vector<2x8x8xf32>
    %39 = arith.truncf %38 : vector<2x8x8xf32> to vector<2x8x8xbf16>
    %40 = vector.extract_strided_slice %35 {offsets = [0, 0, 0], sizes = [2, 8, 8], strides = [1, 1, 1]} : vector<2x8x32xf32> to vector<2x8x8xf32>
    %41 = arith.truncf %40 : vector<2x8x8xf32> to vector<2x8x8xbf16>
    %42 = vector.extract_strided_slice %37 {offsets = [0, 0, 0], sizes = [2, 8, 8], strides = [1, 1, 1]} : vector<2x8x32xf32> to vector<2x8x8xf32>
    %43 = arith.truncf %42 : vector<2x8x8xf32> to vector<2x8x8xbf16>
    "tpu.trace_start"() <{level = 10 : i32, message = "bqd,bkd->bqk"}> : () -> ()
    %cst_39 = arith.constant dense<0.000000e+00> : vector<2x8x8xf32>
    %44 = tpu.matmul %39, %41, %cst_39 {dimension_numbers = #tpu.dot_dimension_numbers<[2], [2], [1], [1], [0, 0, 0, 1, 1, 1], [0], [0]>} : vector<2x8x8xbf16>, vector<2x8x8xbf16>, vector<2x8x8xf32> -> vector<2x8x8xf32>
    "tpu.trace_stop"() : () -> ()
    %cst_40 = arith.constant dense<0xFF800000> : vector<2x8xf32>
    %45 = vector.multi_reduction <maximumf>, %44, %cst_40 [2] : vector<2x8x8xf32> to vector<2x8xf32>
    %46 = vector.shape_cast %45 : vector<2x8xf32> to vector<2x8x1xf32>
    %47 = vector.broadcast %46 : vector<2x8x1xf32> to vector<2x8x8xf32>
    %48 = arith.subf %44, %47 : vector<2x8x8xf32>
    %49 = math.exp %48 : vector<2x8x8xf32>
    %cst_41 = arith.constant dense<0.000000e+00> : vector<2x8xf32>
    %50 = vector.multi_reduction <add>, %49, %cst_41 [2] : vector<2x8x8xf32> to vector<2x8xf32>
    %51 = vector.shape_cast %50 : vector<2x8xf32> to vector<2x8x1xf32>
    %52 = tpu.reciprocal %51 {approx = true} : vector<2x8x1xf32> -> vector<2x8x1xf32>
    %53 = vector.broadcast %52 : vector<2x8x1xf32> to vector<2x8x8xf32>
    %54 = arith.mulf %49, %53 : vector<2x8x8xf32>
    %55 = arith.truncf %54 : vector<2x8x8xf32> to vector<2x8x8xbf16>
    "tpu.trace_start"() <{level = 10 : i32, message = "bqk,bkd->bqd"}> : () -> ()
    %cst_42 = arith.constant dense<0.000000e+00> : vector<2x8x8xf32>
    %56 = tpu.matmul %55, %43, %cst_42 {dimension_numbers = #tpu.dot_dimension_numbers<[2], [1], [1], [2], [0, 0, 0, 1, 1, 2], [0], [0]>} : vector<2x8x8xbf16>, vector<2x8x8xbf16>, vector<2x8x8xf32> -> vector<2x8x8xf32>
    "tpu.trace_stop"() : () -> ()
    %57 = vector.extract_strided_slice %33 {offsets = [0, 0, 8], sizes = [2, 8, 8], strides = [1, 1, 1]} : vector<2x8x32xf32> to vector<2x8x8xf32>
    %58 = arith.truncf %57 : vector<2x8x8xf32> to vector<2x8x8xbf16>
    %59 = vector.extract_strided_slice %35 {offsets = [0, 0, 8], sizes = [2, 8, 8], strides = [1, 1, 1]} : vector<2x8x32xf32> to vector<2x8x8xf32>
    %60 = arith.truncf %59 : vector<2x8x8xf32> to vector<2x8x8xbf16>
    %61 = vector.extract_strided_slice %37 {offsets = [0, 0, 8], sizes = [2, 8, 8], strides = [1, 1, 1]} : vector<2x8x32xf32> to vector<2x8x8xf32>
    %62 = arith.truncf %61 : vector<2x8x8xf32> to vector<2x8x8xbf16>
    "tpu.trace_start"() <{level = 10 : i32, message = "bqd,bkd->bqk"}> : () -> ()
    %cst_43 = arith.constant dense<0.000000e+00> : vector<2x8x8xf32>
    %63 = tpu.matmul %58, %60, %cst_43 {dimension_numbers = #tpu.dot_dimension_numbers<[2], [2], [1], [1], [0, 0, 0, 1, 1, 1], [0], [0]>} : vector<2x8x8xbf16>, vector<2x8x8xbf16>, vector<2x8x8xf32> -> vector<2x8x8xf32>
    "tpu.trace_stop"() : () -> ()
    %cst_44 = arith.constant dense<0xFF800000> : vector<2x8xf32>
    %64 = vector.multi_reduction <maximumf>, %63, %cst_44 [2] : vector<2x8x8xf32> to vector<2x8xf32>
    %65 = vector.shape_cast %64 : vector<2x8xf32> to vector<2x8x1xf32>
    %66 = vector.broadcast %65 : vector<2x8x1xf32> to vector<2x8x8xf32>
    %67 = arith.subf %63, %66 : vector<2x8x8xf32>
    %68 = math.exp %67 : vector<2x8x8xf32>
    %cst_45 = arith.constant dense<0.000000e+00> : vector<2x8xf32>
    %69 = vector.multi_reduction <add>, %68, %cst_45 [2] : vector<2x8x8xf32> to vector<2x8xf32>
    %70 = vector.shape_cast %69 : vector<2x8xf32> to vector<2x8x1xf32>
    %71 = tpu.reciprocal %70 {approx = true} : vector<2x8x1xf32> -> vector<2x8x1xf32>
    %72 = vector.broadcast %71 : vector<2x8x1xf32> to vector<2x8x8xf32>
    %73 = arith.mulf %68, %72 : vector<2x8x8xf32>
    %74 = arith.truncf %73 : vector<2x8x8xf32> to vector<2x8x8xbf16>
    "tpu.trace_start"() <{level = 10 : i32, message = "bqk,bkd->bqd"}> : () -> ()
    %cst_46 = arith.constant dense<0.000000e+00> : vector<2x8x8xf32>
    %75 = tpu.matmul %74, %62, %cst_46 {dimension_numbers = #tpu.dot_dimension_numbers<[2], [1], [1], [2], [0, 0, 0, 1, 1, 2], [0], [0]>} : vector<2x8x8xbf16>, vector<2x8x8xbf16>, vector<2x8x8xf32> -> vector<2x8x8xf32>
    "tpu.trace_stop"() : () -> ()
    %76 = vector.extract_strided_slice %33 {offsets = [0, 0, 16], sizes = [2, 8, 8], strides = [1, 1, 1]} : vector<2x8x32xf32> to vector<2x8x8xf32>
    %77 = arith.truncf %76 : vector<2x8x8xf32> to vector<2x8x8xbf16>
    %78 = vector.extract_strided_slice %35 {offsets = [0, 0, 16], sizes = [2, 8, 8], strides = [1, 1, 1]} : vector<2x8x32xf32> to vector<2x8x8xf32>
    %79 = arith.truncf %78 : vector<2x8x8xf32> to vector<2x8x8xbf16>
    %80 = vector.extract_strided_slice %37 {offsets = [0, 0, 16], sizes = [2, 8, 8], strides = [1, 1, 1]} : vector<2x8x32xf32> to vector<2x8x8xf32>
    %81 = arith.truncf %80 : vector<2x8x8xf32> to vector<2x8x8xbf16>
    "tpu.trace_start"() <{level = 10 : i32, message = "bqd,bkd->bqk"}> : () -> ()
    %cst_47 = arith.constant dense<0.000000e+00> : vector<2x8x8xf32>
    %82 = tpu.matmul %77, %79, %cst_47 {dimension_numbers = #tpu.dot_dimension_numbers<[2], [2], [1], [1], [0, 0, 0, 1, 1, 1], [0], [0]>} : vector<2x8x8xbf16>, vector<2x8x8xbf16>, vector<2x8x8xf32> -> vector<2x8x8xf32>
    "tpu.trace_stop"() : () -> ()
    %cst_48 = arith.constant dense<0xFF800000> : vector<2x8xf32>
    %83 = vector.multi_reduction <maximumf>, %82, %cst_48 [2] : vector<2x8x8xf32> to vector<2x8xf32>
    %84 = vector.shape_cast %83 : vector<2x8xf32> to vector<2x8x1xf32>
    %85 = vector.broadcast %84 : vector<2x8x1xf32> to vector<2x8x8xf32>
    %86 = arith.subf %82, %85 : vector<2x8x8xf32>
    %87 = math.exp %86 : vector<2x8x8xf32>
    %cst_49 = arith.constant dense<0.000000e+00> : vector<2x8xf32>
    %88 = vector.multi_reduction <add>, %87, %cst_49 [2] : vector<2x8x8xf32> to vector<2x8xf32>
    %89 = vector.shape_cast %88 : vector<2x8xf32> to vector<2x8x1xf32>
    %90 = tpu.reciprocal %89 {approx = true} : vector<2x8x1xf32> -> vector<2x8x1xf32>
    %91 = vector.broadcast %90 : vector<2x8x1xf32> to vector<2x8x8xf32>
    %92 = arith.mulf %87, %91 : vector<2x8x8xf32>
    %93 = arith.truncf %92 : vector<2x8x8xf32> to vector<2x8x8xbf16>
    "tpu.trace_start"() <{level = 10 : i32, message = "bqk,bkd->bqd"}> : () -> ()
    %cst_50 = arith.constant dense<0.000000e+00> : vector<2x8x8xf32>
    %94 = tpu.matmul %93, %81, %cst_50 {dimension_numbers = #tpu.dot_dimension_numbers<[2], [1], [1], [2], [0, 0, 0, 1, 1, 2], [0], [0]>} : vector<2x8x8xbf16>, vector<2x8x8xbf16>, vector<2x8x8xf32> -> vector<2x8x8xf32>
    "tpu.trace_stop"() : () -> ()
    %95 = vector.extract_strided_slice %33 {offsets = [0, 0, 24], sizes = [2, 8, 8], strides = [1, 1, 1]} : vector<2x8x32xf32> to vector<2x8x8xf32>
    %96 = arith.truncf %95 : vector<2x8x8xf32> to vector<2x8x8xbf16>
    %97 = vector.extract_strided_slice %35 {offsets = [0, 0, 24], sizes = [2, 8, 8], strides = [1, 1, 1]} : vector<2x8x32xf32> to vector<2x8x8xf32>
    %98 = arith.truncf %97 : vector<2x8x8xf32> to vector<2x8x8xbf16>
    %99 = vector.extract_strided_slice %37 {offsets = [0, 0, 24], sizes = [2, 8, 8], strides = [1, 1, 1]} : vector<2x8x32xf32> to vector<2x8x8xf32>
    %100 = arith.truncf %99 : vector<2x8x8xf32> to vector<2x8x8xbf16>
    "tpu.trace_start"() <{level = 10 : i32, message = "bqd,bkd->bqk"}> : () -> ()
    %cst_51 = arith.constant dense<0.000000e+00> : vector<2x8x8xf32>
    %101 = tpu.matmul %96, %98, %cst_51 {dimension_numbers = #tpu.dot_dimension_numbers<[2], [2], [1], [1], [0, 0, 0, 1, 1, 1], [0], [0]>} : vector<2x8x8xbf16>, vector<2x8x8xbf16>, vector<2x8x8xf32> -> vector<2x8x8xf32>
    "tpu.trace_stop"() : () -> ()
    %cst_52 = arith.constant dense<0xFF800000> : vector<2x8xf32>
    %102 = vector.multi_reduction <maximumf>, %101, %cst_52 [2] : vector<2x8x8xf32> to vector<2x8xf32>
    %103 = vector.shape_cast %102 : vector<2x8xf32> to vector<2x8x1xf32>
    %104 = vector.broadcast %103 : vector<2x8x1xf32> to vector<2x8x8xf32>
    %105 = arith.subf %101, %104 : vector<2x8x8xf32>
    %106 = math.exp %105 : vector<2x8x8xf32>
    %cst_53 = arith.constant dense<0.000000e+00> : vector<2x8xf32>
    %107 = vector.multi_reduction <add>, %106, %cst_53 [2] : vector<2x8x8xf32> to vector<2x8xf32>
    %108 = vector.shape_cast %107 : vector<2x8xf32> to vector<2x8x1xf32>
    %109 = tpu.reciprocal %108 {approx = true} : vector<2x8x1xf32> -> vector<2x8x1xf32>
    %110 = vector.broadcast %109 : vector<2x8x1xf32> to vector<2x8x8xf32>
    %111 = arith.mulf %106, %110 : vector<2x8x8xf32>
    %112 = arith.truncf %111 : vector<2x8x8xf32> to vector<2x8x8xbf16>
    "tpu.trace_start"() <{level = 10 : i32, message = "bqk,bkd->bqd"}> : () -> ()
    %cst_54 = arith.constant dense<0.000000e+00> : vector<2x8x8xf32>
    %113 = tpu.matmul %112, %100, %cst_54 {dimension_numbers = #tpu.dot_dimension_numbers<[2], [1], [1], [2], [0, 0, 0, 1, 1, 2], [0], [0]>} : vector<2x8x8xbf16>, vector<2x8x8xbf16>, vector<2x8x8xf32> -> vector<2x8x8xf32>
    "tpu.trace_stop"() : () -> ()
    %114 = tpu.concatenate %56, %75, %94, %113 in 2 : vector<2x8x8xf32>, vector<2x8x8xf32>, vector<2x8x8xf32>, vector<2x8x8xf32> -> vector<2x8x32xf32>
    %115 = vector.shape_cast %114 : vector<2x8x32xf32> to vector<16x32xf32>
    %116 = arith.truncf %115 : vector<16x32xf32> to vector<16x32xbf16>
    %cst_55 = arith.constant dense<0.000000e+00> : vector<16x32xf32>
    %117 = tpu.matmul %116, %7, %cst_55 {dimension_numbers = #tpu.dot_dimension_numbers<[1], [0], [0], [1], [0, 0, 1, 1], [], []>} : vector<16x32xbf16>, vector<32x32xbf16>, vector<16x32xf32> -> vector<16x32xf32>
    %118 = vector.broadcast %9 : vector<1x32xf32> to vector<16x32xf32>
    %119 = arith.addf %117, %118 : vector<16x32xf32>
    %120 = arith.addf %1, %119 : vector<16x32xf32>
    %cst_56 = arith.constant dense<0.000000e+00> : vector<16xf32>
    %121 = vector.multi_reduction <add>, %120, %cst_56 [1] : vector<16x32xf32> to vector<16xf32>
    %122 = vector.shape_cast %121 : vector<16xf32> to vector<16x1xf32>
    %cst_57 = arith.constant 3.200000e+01 : f32
    %123 = vector.broadcast %cst_57 : f32 to vector<16x1xf32>
    %124 = arith.divf %122, %123 : vector<16x1xf32>
    %125 = vector.broadcast %124 : vector<16x1xf32> to vector<16x32xf32>
    %126 = arith.subf %120, %125 : vector<16x32xf32>
    %127 = arith.mulf %126, %126 : vector<16x32xf32>
    %cst_58 = arith.constant dense<0.000000e+00> : vector<16xf32>
    %128 = vector.multi_reduction <add>, %127, %cst_58 [1] : vector<16x32xf32> to vector<16xf32>
    %129 = vector.shape_cast %128 : vector<16xf32> to vector<16x1xf32>
    %cst_59 = arith.constant 3.200000e+01 : f32
    %130 = vector.broadcast %cst_59 : f32 to vector<16x1xf32>
    %131 = arith.divf %129, %130 : vector<16x1xf32>
    %132 = vector.broadcast %124 : vector<16x1xf32> to vector<16x32xf32>
    %133 = arith.subf %120, %132 : vector<16x32xf32>
    %cst_60 = arith.constant 9.99999974E-6 : f32
    %134 = vector.broadcast %cst_60 : f32 to vector<16x1xf32>
    %135 = arith.addf %131, %134 : vector<16x1xf32>
    %136 = math.rsqrt %135 : vector<16x1xf32>
    %137 = vector.broadcast %136 : vector<16x1xf32> to vector<16x32xf32>
    %138 = arith.mulf %133, %137 : vector<16x32xf32>
    %139 = vector.broadcast %11 : vector<1x32xf32> to vector<16x32xf32>
    %140 = arith.mulf %138, %139 : vector<16x32xf32>
    %141 = vector.broadcast %13 : vector<1x32xf32> to vector<16x32xf32>
    %142 = arith.addf %140, %141 : vector<16x32xf32>
    %143 = arith.truncf %142 : vector<16x32xf32> to vector<16x32xbf16>
    %cst_61 = arith.constant dense<0.000000e+00> : vector<16x64xf32>
    %144 = tpu.matmul %143, %15, %cst_61 {dimension_numbers = #tpu.dot_dimension_numbers<[1], [0], [0], [1], [0, 0, 1, 1], [], []>} : vector<16x32xbf16>, vector<32x64xbf16>, vector<16x64xf32> -> vector<16x64xf32>
    %145 = vector.broadcast %17 : vector<1x64xf32> to vector<16x64xf32>
    %146 = arith.addf %144, %145 : vector<16x64xf32>
    %cst_62 = arith.constant 5.000000e-01 : f32
    %147 = vector.broadcast %cst_62 : f32 to vector<16x64xf32>
    %148 = arith.mulf %147, %146 : vector<16x64xf32>
    %cst_63 = arith.constant 4.471500e-02 : f32
    %149 = vector.broadcast %cst_63 : f32 to vector<16x64xf32>
    %150 = arith.mulf %149, %146 : vector<16x64xf32>
    %151 = arith.mulf %150, %146 : vector<16x64xf32>
    %152 = arith.mulf %151, %146 : vector<16x64xf32>
    %153 = arith.addf %146, %152 : vector<16x64xf32>
    %cst_64 = arith.constant 0.797884583 : f32
    %154 = vector.broadcast %cst_64 : f32 to vector<16x64xf32>
    %155 = arith.mulf %154, %153 : vector<16x64xf32>
    %156 = math.tanh %155 : vector<16x64xf32>
    %cst_65 = arith.constant 1.000000e+00 : f32
    %157 = vector.broadcast %cst_65 : f32 to vector<16x64xf32>
    %158 = arith.addf %157, %156 : vector<16x64xf32>
    %159 = arith.mulf %148, %158 : vector<16x64xf32>
    %160 = arith.truncf %159 : vector<16x64xf32> to vector<16x64xbf16>
    %cst_66 = arith.constant dense<0.000000e+00> : vector<16x32xf32>
    %161 = tpu.matmul %160, %19, %cst_66 {dimension_numbers = #tpu.dot_dimension_numbers<[1], [0], [0], [1], [0, 0, 1, 1], [], []>} : vector<16x64xbf16>, vector<64x32xbf16>, vector<16x32xf32> -> vector<16x32xf32>
    %162 = vector.broadcast %21 : vector<1x32xf32> to vector<16x32xf32>
    %163 = arith.addf %161, %162 : vector<16x32xf32>
    %164 = arith.addf %142, %163 : vector<16x32xf32>
    %cst_67 = arith.constant dense<0.000000e+00> : vector<16xf32>
    %165 = vector.multi_reduction <add>, %164, %cst_67 [1] : vector<16x32xf32> to vector<16xf32>
    %166 = vector.shape_cast %165 : vector<16xf32> to vector<16x1xf32>
    %cst_68 = arith.constant 3.200000e+01 : f32
    %167 = vector.broadcast %cst_68 : f32 to vector<16x1xf32>
    %168 = arith.divf %166, %167 : vector<16x1xf32>
    %169 = vector.broadcast %168 : vector<16x1xf32> to vector<16x32xf32>
    %170 = arith.subf %164, %169 : vector<16x32xf32>
    %171 = arith.mulf %170, %170 : vector<16x32xf32>
    %cst_69 = arith.constant dense<0.000000e+00> : vector<16xf32>
    %172 = vector.multi_reduction <add>, %171, %cst_69 [1] : vector<16x32xf32> to vector<16xf32>
    %173 = vector.shape_cast %172 : vector<16xf32> to vector<16x1xf32>
    %cst_70 = arith.constant 3.200000e+01 : f32
    %174 = vector.broadcast %cst_70 : f32 to vector<16x1xf32>
    %175 = arith.divf %173, %174 : vector<16x1xf32>
    %176 = vector.broadcast %168 : vector<16x1xf32> to vector<16x32xf32>
    %177 = arith.subf %164, %176 : vector<16x32xf32>
    %cst_71 = arith.constant 9.99999974E-6 : f32
    %178 = vector.broadcast %cst_71 : f32 to vector<16x1xf32>
    %179 = arith.addf %175, %178 : vector<16x1xf32>
    %180 = math.rsqrt %179 : vector<16x1xf32>
    %181 = vector.broadcast %180 : vector<16x1xf32> to vector<16x32xf32>
    %182 = arith.mulf %177, %181 : vector<16x32xf32>
    %183 = vector.broadcast %23 : vector<1x32xf32> to vector<16x32xf32>
    %184 = arith.mulf %182, %183 : vector<16x32xf32>
    %185 = vector.broadcast %25 : vector<1x32xf32> to vector<16x32xf32>
    %186 = arith.addf %184, %185 : vector<16x32xf32>
    %c1 = arith.constant 1 : index
    %c0_72 = arith.constant 0 : index
    %c0_73 = arith.constant 0 : index
    %187 = vector.load %arg2[%c1, %c0_72, %c0_73] : memref<2x32x96xbf16, #tpu.memory_space<vmem>>, vector<1x32x96xbf16>
    %188 = vector.shape_cast %187 : vector<1x32x96xbf16> to vector<32x96xbf16>
    %c1_74 = arith.constant 1 : index
    %c0_75 = arith.constant 0 : index
    %c0_76 = arith.constant 0 : index
    %189 = vector.load %arg3[%c1_74, %c0_75, %c0_76] : memref<2x1x96xf32, #tpu.memory_space<vmem>>, vector<1x1x96xf32>
    %190 = vector.shape_cast %189 : vector<1x1x96xf32> to vector<1x96xf32>
    %c1_77 = arith.constant 1 : index
    %c0_78 = arith.constant 0 : index
    %c0_79 = arith.constant 0 : index
    %191 = vector.load %arg4[%c1_77, %c0_78, %c0_79] : memref<2x32x32xbf16, #tpu.memory_space<vmem>>, vector<1x32x32xbf16>
    %192 = vector.shape_cast %191 : vector<1x32x32xbf16> to vector<32x32xbf16>
    %c1_80 = arith.constant 1 : index
    %c0_81 = arith.constant 0 : index
    %c0_82 = arith.constant 0 : index
    %193 = vector.load %arg5[%c1_80, %c0_81, %c0_82] : memref<2x1x32xf32, #tpu.memory_space<vmem>>, vector<1x1x32xf32>
    %194 = vector.shape_cast %193 : vector<1x1x32xf32> to vector<1x32xf32>
    %c1_83 = arith.constant 1 : index
    %c0_84 = arith.constant 0 : index
    %c0_85 = arith.constant 0 : index
    %195 = vector.load %arg6[%c1_83, %c0_84, %c0_85] : memref<2x1x32xf32, #tpu.memory_space<vmem>>, vector<1x1x32xf32>
    %196 = vector.shape_cast %195 : vector<1x1x32xf32> to vector<1x32xf32>
    %c1_86 = arith.constant 1 : index
    %c0_87 = arith.constant 0 : index
    %c0_88 = arith.constant 0 : index
    %197 = vector.load %arg7[%c1_86, %c0_87, %c0_88] : memref<2x1x32xf32, #tpu.memory_space<vmem>>, vector<1x1x32xf32>
    %198 = vector.shape_cast %197 : vector<1x1x32xf32> to vector<1x32xf32>
    %c1_89 = arith.constant 1 : index
    %c0_90 = arith.constant 0 : index
    %c0_91 = arith.constant 0 : index
    %199 = vector.load %arg8[%c1_89, %c0_90, %c0_91] : memref<2x32x64xbf16, #tpu.memory_space<vmem>>, vector<1x32x64xbf16>
    %200 = vector.shape_cast %199 : vector<1x32x64xbf16> to vector<32x64xbf16>
    %c1_92 = arith.constant 1 : index
    %c0_93 = arith.constant 0 : index
    %c0_94 = arith.constant 0 : index
    %201 = vector.load %arg9[%c1_92, %c0_93, %c0_94] : memref<2x1x64xf32, #tpu.memory_space<vmem>>, vector<1x1x64xf32>
    %202 = vector.shape_cast %201 : vector<1x1x64xf32> to vector<1x64xf32>
    %c1_95 = arith.constant 1 : index
    %c0_96 = arith.constant 0 : index
    %c0_97 = arith.constant 0 : index
    %203 = vector.load %arg10[%c1_95, %c0_96, %c0_97] : memref<2x64x32xbf16, #tpu.memory_space<vmem>>, vector<1x64x32xbf16>
    %204 = vector.shape_cast %203 : vector<1x64x32xbf16> to vector<64x32xbf16>
    %c1_98 = arith.constant 1 : index
    %c0_99 = arith.constant 0 : index
    %c0_100 = arith.constant 0 : index
    %205 = vector.load %arg11[%c1_98, %c0_99, %c0_100] : memref<2x1x32xf32, #tpu.memory_space<vmem>>, vector<1x1x32xf32>
    %206 = vector.shape_cast %205 : vector<1x1x32xf32> to vector<1x32xf32>
    %c1_101 = arith.constant 1 : index
    %c0_102 = arith.constant 0 : index
    %c0_103 = arith.constant 0 : index
    %207 = vector.load %arg12[%c1_101, %c0_102, %c0_103] : memref<2x1x32xf32, #tpu.memory_space<vmem>>, vector<1x1x32xf32>
    %208 = vector.shape_cast %207 : vector<1x1x32xf32> to vector<1x32xf32>
    %c1_104 = arith.constant 1 : index
    %c0_105 = arith.constant 0 : index
    %c0_106 = arith.constant 0 : index
    %209 = vector.load %arg13[%c1_104, %c0_105, %c0_106] : memref<2x1x32xf32, #tpu.memory_space<vmem>>, vector<1x1x32xf32>
    %210 = vector.shape_cast %209 : vector<1x1x32xf32> to vector<1x32xf32>
    %211 = arith.truncf %186 : vector<16x32xf32> to vector<16x32xbf16>
    %cst_107 = arith.constant dense<0.000000e+00> : vector<16x96xf32>
    %212 = tpu.matmul %211, %188, %cst_107 {dimension_numbers = #tpu.dot_dimension_numbers<[1], [0], [0], [1], [0, 0, 1, 1], [], []>} : vector<16x32xbf16>, vector<32x96xbf16>, vector<16x96xf32> -> vector<16x96xf32>
    %213 = vector.broadcast %190 : vector<1x96xf32> to vector<16x96xf32>
    %214 = arith.addf %212, %213 : vector<16x96xf32>
    %215 = vector.extract_strided_slice %214 {offsets = [0, 0], sizes = [16, 32], strides = [1, 1]} : vector<16x96xf32> to vector<16x32xf32>
    %cst_108 = arith.constant 0.353553385 : f32
    %216 = vector.broadcast %cst_108 : f32 to vector<16x32xf32>
    %217 = arith.mulf %215, %216 : vector<16x32xf32>
    %218 = vector.shape_cast %217 : vector<16x32xf32> to vector<2x8x32xf32>
    %219 = vector.extract_strided_slice %214 {offsets = [0, 32], sizes = [16, 32], strides = [1, 1]} : vector<16x96xf32> to vector<16x32xf32>
    %220 = vector.shape_cast %219 : vector<16x32xf32> to vector<2x8x32xf32>
    %221 = vector.extract_strided_slice %214 {offsets = [0, 64], sizes = [16, 32], strides = [1, 1]} : vector<16x96xf32> to vector<16x32xf32>
    %222 = vector.shape_cast %221 : vector<16x32xf32> to vector<2x8x32xf32>
    %223 = vector.extract_strided_slice %218 {offsets = [0, 0, 0], sizes = [2, 8, 8], strides = [1, 1, 1]} : vector<2x8x32xf32> to vector<2x8x8xf32>
    %224 = arith.truncf %223 : vector<2x8x8xf32> to vector<2x8x8xbf16>
    %225 = vector.extract_strided_slice %220 {offsets = [0, 0, 0], sizes = [2, 8, 8], strides = [1, 1, 1]} : vector<2x8x32xf32> to vector<2x8x8xf32>
    %226 = arith.truncf %225 : vector<2x8x8xf32> to vector<2x8x8xbf16>
    %227 = vector.extract_strided_slice %222 {offsets = [0, 0, 0], sizes = [2, 8, 8], strides = [1, 1, 1]} : vector<2x8x32xf32> to vector<2x8x8xf32>
    %228 = arith.truncf %227 : vector<2x8x8xf32> to vector<2x8x8xbf16>
    "tpu.trace_start"() <{level = 10 : i32, message = "bqd,bkd->bqk"}> : () -> ()
    %cst_109 = arith.constant dense<0.000000e+00> : vector<2x8x8xf32>
    %229 = tpu.matmul %224, %226, %cst_109 {dimension_numbers = #tpu.dot_dimension_numbers<[2], [2], [1], [1], [0, 0, 0, 1, 1, 1], [0], [0]>} : vector<2x8x8xbf16>, vector<2x8x8xbf16>, vector<2x8x8xf32> -> vector<2x8x8xf32>
    "tpu.trace_stop"() : () -> ()
    %cst_110 = arith.constant dense<0xFF800000> : vector<2x8xf32>
    %230 = vector.multi_reduction <maximumf>, %229, %cst_110 [2] : vector<2x8x8xf32> to vector<2x8xf32>
    %231 = vector.shape_cast %230 : vector<2x8xf32> to vector<2x8x1xf32>
    %232 = vector.broadcast %231 : vector<2x8x1xf32> to vector<2x8x8xf32>
    %233 = arith.subf %229, %232 : vector<2x8x8xf32>
    %234 = math.exp %233 : vector<2x8x8xf32>
    %cst_111 = arith.constant dense<0.000000e+00> : vector<2x8xf32>
    %235 = vector.multi_reduction <add>, %234, %cst_111 [2] : vector<2x8x8xf32> to vector<2x8xf32>
    %236 = vector.shape_cast %235 : vector<2x8xf32> to vector<2x8x1xf32>
    %237 = tpu.reciprocal %236 {approx = true} : vector<2x8x1xf32> -> vector<2x8x1xf32>
    %238 = vector.broadcast %237 : vector<2x8x1xf32> to vector<2x8x8xf32>
    %239 = arith.mulf %234, %238 : vector<2x8x8xf32>
    %240 = arith.truncf %239 : vector<2x8x8xf32> to vector<2x8x8xbf16>
    "tpu.trace_start"() <{level = 10 : i32, message = "bqk,bkd->bqd"}> : () -> ()
    %cst_112 = arith.constant dense<0.000000e+00> : vector<2x8x8xf32>
    %241 = tpu.matmul %240, %228, %cst_112 {dimension_numbers = #tpu.dot_dimension_numbers<[2], [1], [1], [2], [0, 0, 0, 1, 1, 2], [0], [0]>} : vector<2x8x8xbf16>, vector<2x8x8xbf16>, vector<2x8x8xf32> -> vector<2x8x8xf32>
    "tpu.trace_stop"() : () -> ()
    %242 = vector.extract_strided_slice %218 {offsets = [0, 0, 8], sizes = [2, 8, 8], strides = [1, 1, 1]} : vector<2x8x32xf32> to vector<2x8x8xf32>
    %243 = arith.truncf %242 : vector<2x8x8xf32> to vector<2x8x8xbf16>
    %244 = vector.extract_strided_slice %220 {offsets = [0, 0, 8], sizes = [2, 8, 8], strides = [1, 1, 1]} : vector<2x8x32xf32> to vector<2x8x8xf32>
    %245 = arith.truncf %244 : vector<2x8x8xf32> to vector<2x8x8xbf16>
    %246 = vector.extract_strided_slice %222 {offsets = [0, 0, 8], sizes = [2, 8, 8], strides = [1, 1, 1]} : vector<2x8x32xf32> to vector<2x8x8xf32>
    %247 = arith.truncf %246 : vector<2x8x8xf32> to vector<2x8x8xbf16>
    "tpu.trace_start"() <{level = 10 : i32, message = "bqd,bkd->bqk"}> : () -> ()
    %cst_113 = arith.constant dense<0.000000e+00> : vector<2x8x8xf32>
    %248 = tpu.matmul %243, %245, %cst_113 {dimension_numbers = #tpu.dot_dimension_numbers<[2], [2], [1], [1], [0, 0, 0, 1, 1, 1], [0], [0]>} : vector<2x8x8xbf16>, vector<2x8x8xbf16>, vector<2x8x8xf32> -> vector<2x8x8xf32>
    "tpu.trace_stop"() : () -> ()
    %cst_114 = arith.constant dense<0xFF800000> : vector<2x8xf32>
    %249 = vector.multi_reduction <maximumf>, %248, %cst_114 [2] : vector<2x8x8xf32> to vector<2x8xf32>
    %250 = vector.shape_cast %249 : vector<2x8xf32> to vector<2x8x1xf32>
    %251 = vector.broadcast %250 : vector<2x8x1xf32> to vector<2x8x8xf32>
    %252 = arith.subf %248, %251 : vector<2x8x8xf32>
    %253 = math.exp %252 : vector<2x8x8xf32>
    %cst_115 = arith.constant dense<0.000000e+00> : vector<2x8xf32>
    %254 = vector.multi_reduction <add>, %253, %cst_115 [2] : vector<2x8x8xf32> to vector<2x8xf32>
    %255 = vector.shape_cast %254 : vector<2x8xf32> to vector<2x8x1xf32>
    %256 = tpu.reciprocal %255 {approx = true} : vector<2x8x1xf32> -> vector<2x8x1xf32>
    %257 = vector.broadcast %256 : vector<2x8x1xf32> to vector<2x8x8xf32>
    %258 = arith.mulf %253, %257 : vector<2x8x8xf32>
    %259 = arith.truncf %258 : vector<2x8x8xf32> to vector<2x8x8xbf16>
    "tpu.trace_start"() <{level = 10 : i32, message = "bqk,bkd->bqd"}> : () -> ()
    %cst_116 = arith.constant dense<0.000000e+00> : vector<2x8x8xf32>
    %260 = tpu.matmul %259, %247, %cst_116 {dimension_numbers = #tpu.dot_dimension_numbers<[2], [1], [1], [2], [0, 0, 0, 1, 1, 2], [0], [0]>} : vector<2x8x8xbf16>, vector<2x8x8xbf16>, vector<2x8x8xf32> -> vector<2x8x8xf32>
    "tpu.trace_stop"() : () -> ()
    %261 = vector.extract_strided_slice %218 {offsets = [0, 0, 16], sizes = [2, 8, 8], strides = [1, 1, 1]} : vector<2x8x32xf32> to vector<2x8x8xf32>
    %262 = arith.truncf %261 : vector<2x8x8xf32> to vector<2x8x8xbf16>
    %263 = vector.extract_strided_slice %220 {offsets = [0, 0, 16], sizes = [2, 8, 8], strides = [1, 1, 1]} : vector<2x8x32xf32> to vector<2x8x8xf32>
    %264 = arith.truncf %263 : vector<2x8x8xf32> to vector<2x8x8xbf16>
    %265 = vector.extract_strided_slice %222 {offsets = [0, 0, 16], sizes = [2, 8, 8], strides = [1, 1, 1]} : vector<2x8x32xf32> to vector<2x8x8xf32>
    %266 = arith.truncf %265 : vector<2x8x8xf32> to vector<2x8x8xbf16>
    "tpu.trace_start"() <{level = 10 : i32, message = "bqd,bkd->bqk"}> : () -> ()
    %cst_117 = arith.constant dense<0.000000e+00> : vector<2x8x8xf32>
    %267 = tpu.matmul %262, %264, %cst_117 {dimension_numbers = #tpu.dot_dimension_numbers<[2], [2], [1], [1], [0, 0, 0, 1, 1, 1], [0], [0]>} : vector<2x8x8xbf16>, vector<2x8x8xbf16>, vector<2x8x8xf32> -> vector<2x8x8xf32>
    "tpu.trace_stop"() : () -> ()
    %cst_118 = arith.constant dense<0xFF800000> : vector<2x8xf32>
    %268 = vector.multi_reduction <maximumf>, %267, %cst_118 [2] : vector<2x8x8xf32> to vector<2x8xf32>
    %269 = vector.shape_cast %268 : vector<2x8xf32> to vector<2x8x1xf32>
    %270 = vector.broadcast %269 : vector<2x8x1xf32> to vector<2x8x8xf32>
    %271 = arith.subf %267, %270 : vector<2x8x8xf32>
    %272 = math.exp %271 : vector<2x8x8xf32>
    %cst_119 = arith.constant dense<0.000000e+00> : vector<2x8xf32>
    %273 = vector.multi_reduction <add>, %272, %cst_119 [2] : vector<2x8x8xf32> to vector<2x8xf32>
    %274 = vector.shape_cast %273 : vector<2x8xf32> to vector<2x8x1xf32>
    %275 = tpu.reciprocal %274 {approx = true} : vector<2x8x1xf32> -> vector<2x8x1xf32>
    %276 = vector.broadcast %275 : vector<2x8x1xf32> to vector<2x8x8xf32>
    %277 = arith.mulf %272, %276 : vector<2x8x8xf32>
    %278 = arith.truncf %277 : vector<2x8x8xf32> to vector<2x8x8xbf16>
    "tpu.trace_start"() <{level = 10 : i32, message = "bqk,bkd->bqd"}> : () -> ()
    %cst_120 = arith.constant dense<0.000000e+00> : vector<2x8x8xf32>
    %279 = tpu.matmul %278, %266, %cst_120 {dimension_numbers = #tpu.dot_dimension_numbers<[2], [1], [1], [2], [0, 0, 0, 1, 1, 2], [0], [0]>} : vector<2x8x8xbf16>, vector<2x8x8xbf16>, vector<2x8x8xf32> -> vector<2x8x8xf32>
    "tpu.trace_stop"() : () -> ()
    %280 = vector.extract_strided_slice %218 {offsets = [0, 0, 24], sizes = [2, 8, 8], strides = [1, 1, 1]} : vector<2x8x32xf32> to vector<2x8x8xf32>
    %281 = arith.truncf %280 : vector<2x8x8xf32> to vector<2x8x8xbf16>
    %282 = vector.extract_strided_slice %220 {offsets = [0, 0, 24], sizes = [2, 8, 8], strides = [1, 1, 1]} : vector<2x8x32xf32> to vector<2x8x8xf32>
    %283 = arith.truncf %282 : vector<2x8x8xf32> to vector<2x8x8xbf16>
    %284 = vector.extract_strided_slice %222 {offsets = [0, 0, 24], sizes = [2, 8, 8], strides = [1, 1, 1]} : vector<2x8x32xf32> to vector<2x8x8xf32>
    %285 = arith.truncf %284 : vector<2x8x8xf32> to vector<2x8x8xbf16>
    "tpu.trace_start"() <{level = 10 : i32, message = "bqd,bkd->bqk"}> : () -> ()
    %cst_121 = arith.constant dense<0.000000e+00> : vector<2x8x8xf32>
    %286 = tpu.matmul %281, %283, %cst_121 {dimension_numbers = #tpu.dot_dimension_numbers<[2], [2], [1], [1], [0, 0, 0, 1, 1, 1], [0], [0]>} : vector<2x8x8xbf16>, vector<2x8x8xbf16>, vector<2x8x8xf32> -> vector<2x8x8xf32>
    "tpu.trace_stop"() : () -> ()
    %cst_122 = arith.constant dense<0xFF800000> : vector<2x8xf32>
    %287 = vector.multi_reduction <maximumf>, %286, %cst_122 [2] : vector<2x8x8xf32> to vector<2x8xf32>
    %288 = vector.shape_cast %287 : vector<2x8xf32> to vector<2x8x1xf32>
    %289 = vector.broadcast %288 : vector<2x8x1xf32> to vector<2x8x8xf32>
    %290 = arith.subf %286, %289 : vector<2x8x8xf32>
    %291 = math.exp %290 : vector<2x8x8xf32>
    %cst_123 = arith.constant dense<0.000000e+00> : vector<2x8xf32>
    %292 = vector.multi_reduction <add>, %291, %cst_123 [2] : vector<2x8x8xf32> to vector<2x8xf32>
    %293 = vector.shape_cast %292 : vector<2x8xf32> to vector<2x8x1xf32>
    %294 = tpu.reciprocal %293 {approx = true} : vector<2x8x1xf32> -> vector<2x8x1xf32>
    %295 = vector.broadcast %294 : vector<2x8x1xf32> to vector<2x8x8xf32>
    %296 = arith.mulf %291, %295 : vector<2x8x8xf32>
    %297 = arith.truncf %296 : vector<2x8x8xf32> to vector<2x8x8xbf16>
    "tpu.trace_start"() <{level = 10 : i32, message = "bqk,bkd->bqd"}> : () -> ()
    %cst_124 = arith.constant dense<0.000000e+00> : vector<2x8x8xf32>
    %298 = tpu.matmul %297, %285, %cst_124 {dimension_numbers = #tpu.dot_dimension_numbers<[2], [1], [1], [2], [0, 0, 0, 1, 1, 2], [0], [0]>} : vector<2x8x8xbf16>, vector<2x8x8xbf16>, vector<2x8x8xf32> -> vector<2x8x8xf32>
    "tpu.trace_stop"() : () -> ()
    %299 = tpu.concatenate %241, %260, %279, %298 in 2 : vector<2x8x8xf32>, vector<2x8x8xf32>, vector<2x8x8xf32>, vector<2x8x8xf32> -> vector<2x8x32xf32>
    %300 = vector.shape_cast %299 : vector<2x8x32xf32> to vector<16x32xf32>
    %301 = arith.truncf %300 : vector<16x32xf32> to vector<16x32xbf16>
    %cst_125 = arith.constant dense<0.000000e+00> : vector<16x32xf32>
    %302 = tpu.matmul %301, %192, %cst_125 {dimension_numbers = #tpu.dot_dimension_numbers<[1], [0], [0], [1], [0, 0, 1, 1], [], []>} : vector<16x32xbf16>, vector<32x32xbf16>, vector<16x32xf32> -> vector<16x32xf32>
    %303 = vector.broadcast %194 : vector<1x32xf32> to vector<16x32xf32>
    %304 = arith.addf %302, %303 : vector<16x32xf32>
    %305 = arith.addf %186, %304 : vector<16x32xf32>
    %cst_126 = arith.constant dense<0.000000e+00> : vector<16xf32>
    %306 = vector.multi_reduction <add>, %305, %cst_126 [1] : vector<16x32xf32> to vector<16xf32>
    %307 = vector.shape_cast %306 : vector<16xf32> to vector<16x1xf32>
    %cst_127 = arith.constant 3.200000e+01 : f32
    %308 = vector.broadcast %cst_127 : f32 to vector<16x1xf32>
    %309 = arith.divf %307, %308 : vector<16x1xf32>
    %310 = vector.broadcast %309 : vector<16x1xf32> to vector<16x32xf32>
    %311 = arith.subf %305, %310 : vector<16x32xf32>
    %312 = arith.mulf %311, %311 : vector<16x32xf32>
    %cst_128 = arith.constant dense<0.000000e+00> : vector<16xf32>
    %313 = vector.multi_reduction <add>, %312, %cst_128 [1] : vector<16x32xf32> to vector<16xf32>
    %314 = vector.shape_cast %313 : vector<16xf32> to vector<16x1xf32>
    %cst_129 = arith.constant 3.200000e+01 : f32
    %315 = vector.broadcast %cst_129 : f32 to vector<16x1xf32>
    %316 = arith.divf %314, %315 : vector<16x1xf32>
    %317 = vector.broadcast %309 : vector<16x1xf32> to vector<16x32xf32>
    %318 = arith.subf %305, %317 : vector<16x32xf32>
    %cst_130 = arith.constant 9.99999974E-6 : f32
    %319 = vector.broadcast %cst_130 : f32 to vector<16x1xf32>
    %320 = arith.addf %316, %319 : vector<16x1xf32>
    %321 = math.rsqrt %320 : vector<16x1xf32>
    %322 = vector.broadcast %321 : vector<16x1xf32> to vector<16x32xf32>
    %323 = arith.mulf %318, %322 : vector<16x32xf32>
    %324 = vector.broadcast %196 : vector<1x32xf32> to vector<16x32xf32>
    %325 = arith.mulf %323, %324 : vector<16x32xf32>
    %326 = vector.broadcast %198 : vector<1x32xf32> to vector<16x32xf32>
    %327 = arith.addf %325, %326 : vector<16x32xf32>
    %328 = arith.truncf %327 : vector<16x32xf32> to vector<16x32xbf16>
    %cst_131 = arith.constant dense<0.000000e+00> : vector<16x64xf32>
    %329 = tpu.matmul %328, %200, %cst_131 {dimension_numbers = #tpu.dot_dimension_numbers<[1], [0], [0], [1], [0, 0, 1, 1], [], []>} : vector<16x32xbf16>, vector<32x64xbf16>, vector<16x64xf32> -> vector<16x64xf32>
    %330 = vector.broadcast %202 : vector<1x64xf32> to vector<16x64xf32>
    %331 = arith.addf %329, %330 : vector<16x64xf32>
    %cst_132 = arith.constant 5.000000e-01 : f32
    %332 = vector.broadcast %cst_132 : f32 to vector<16x64xf32>
    %333 = arith.mulf %332, %331 : vector<16x64xf32>
    %cst_133 = arith.constant 4.471500e-02 : f32
    %334 = vector.broadcast %cst_133 : f32 to vector<16x64xf32>
    %335 = arith.mulf %334, %331 : vector<16x64xf32>
    %336 = arith.mulf %335, %331 : vector<16x64xf32>
    %337 = arith.mulf %336, %331 : vector<16x64xf32>
    %338 = arith.addf %331, %337 : vector<16x64xf32>
    %cst_134 = arith.constant 0.797884583 : f32
    %339 = vector.broadcast %cst_134 : f32 to vector<16x64xf32>
    %340 = arith.mulf %339, %338 : vector<16x64xf32>
    %341 = math.tanh %340 : vector<16x64xf32>
    %cst_135 = arith.constant 1.000000e+00 : f32
    %342 = vector.broadcast %cst_135 : f32 to vector<16x64xf32>
    %343 = arith.addf %342, %341 : vector<16x64xf32>
    %344 = arith.mulf %333, %343 : vector<16x64xf32>
    %345 = arith.truncf %344 : vector<16x64xf32> to vector<16x64xbf16>
    %cst_136 = arith.constant dense<0.000000e+00> : vector<16x32xf32>
    %346 = tpu.matmul %345, %204, %cst_136 {dimension_numbers = #tpu.dot_dimension_numbers<[1], [0], [0], [1], [0, 0, 1, 1], [], []>} : vector<16x64xbf16>, vector<64x32xbf16>, vector<16x32xf32> -> vector<16x32xf32>
    %347 = vector.broadcast %206 : vector<1x32xf32> to vector<16x32xf32>
    %348 = arith.addf %346, %347 : vector<16x32xf32>
    %349 = arith.addf %327, %348 : vector<16x32xf32>
    %cst_137 = arith.constant dense<0.000000e+00> : vector<16xf32>
    %350 = vector.multi_reduction <add>, %349, %cst_137 [1] : vector<16x32xf32> to vector<16xf32>
    %351 = vector.shape_cast %350 : vector<16xf32> to vector<16x1xf32>
    %cst_138 = arith.constant 3.200000e+01 : f32
    %352 = vector.broadcast %cst_138 : f32 to vector<16x1xf32>
    %353 = arith.divf %351, %352 : vector<16x1xf32>
    %354 = vector.broadcast %353 : vector<16x1xf32> to vector<16x32xf32>
    %355 = arith.subf %349, %354 : vector<16x32xf32>
    %356 = arith.mulf %355, %355 : vector<16x32xf32>
    %cst_139 = arith.constant dense<0.000000e+00> : vector<16xf32>
    %357 = vector.multi_reduction <add>, %356, %cst_139 [1] : vector<16x32xf32> to vector<16xf32>
    %358 = vector.shape_cast %357 : vector<16xf32> to vector<16x1xf32>
    %cst_140 = arith.constant 3.200000e+01 : f32
    %359 = vector.broadcast %cst_140 : f32 to vector<16x1xf32>
    %360 = arith.divf %358, %359 : vector<16x1xf32>
    %361 = vector.broadcast %353 : vector<16x1xf32> to vector<16x32xf32>
    %362 = arith.subf %349, %361 : vector<16x32xf32>
    %cst_141 = arith.constant 9.99999974E-6 : f32
    %363 = vector.broadcast %cst_141 : f32 to vector<16x1xf32>
    %364 = arith.addf %360, %363 : vector<16x1xf32>
    %365 = math.rsqrt %364 : vector<16x1xf32>
    %366 = vector.broadcast %365 : vector<16x1xf32> to vector<16x32xf32>
    %367 = arith.mulf %362, %366 : vector<16x32xf32>
    %368 = vector.broadcast %208 : vector<1x32xf32> to vector<16x32xf32>
    %369 = arith.mulf %367, %368 : vector<16x32xf32>
    %370 = vector.broadcast %210 : vector<1x32xf32> to vector<16x32xf32>
    %371 = arith.addf %369, %370 : vector<16x32xf32>
    %372 = vector.shape_cast %371 : vector<16x32xf32> to vector<2x8x32xf32>
    %c0_142 = arith.constant 0 : index
    %c0_143 = arith.constant 0 : index
    %c0_144 = arith.constant 0 : index
    %373 = vector.load %arg14[%c0_142, %c0_143, %c0_144] : memref<2x8x32xf32, #tpu.memory_space<vmem>>, vector<2x8x32xf32>
    tpu.vector_store %arg14[%c0_142, %c0_143, %c0_144], %372 {strides = array<i32>} : memref<2x8x32xf32, #tpu.memory_space<vmem>>, vector<2x8x32xf32>,
    return
  }
  func.func @transform_0(%arg0: i32) -> (i32, i32, i32) {
    %c0_i32 = arith.constant 0 : i32
    %c0_i32_0 = arith.constant 0 : i32
    %c0_i32_1 = arith.constant 0 : i32
    return %arg0, %c0_i32, %c0_i32_0 : i32, i32, i32
  }
  func.func @transform_1(%arg0: i32) -> (i32, i32, i32) {
    %c0_i32 = arith.constant 0 : i32
    %c0_i32_0 = arith.constant 0 : i32
    %c0_i32_1 = arith.constant 0 : i32
    %c0_i32_2 = arith.constant 0 : i32
    return %c0_i32, %c0_i32_0, %c0_i32_1 : i32, i32, i32
  }
  func.func @transform_2(%arg0: i32) -> (i32, i32, i32) {
    %c0_i32 = arith.constant 0 : i32
    %c0_i32_0 = arith.constant 0 : i32
    %c0_i32_1 = arith.constant 0 : i32
    %c0_i32_2 = arith.constant 0 : i32
    return %c0_i32, %c0_i32_0, %c0_i32_1 : i32, i32, i32
  }
  func.func @transform_3(%arg0: i32) -> (i32, i32, i32) {
    %c0_i32 = arith.constant 0 : i32
    %c0_i32_0 = arith.constant 0 : i32
    %c0_i32_1 = arith.constant 0 : i32
    %c0_i32_2 = arith.constant 0 : i32
    return %c0_i32, %c0_i32_0, %c0_i32_1 : i32, i32, i32
  }
  func.func @transform_4(%arg0: i32) -> (i32, i32, i32) {
    %c0_i32 = arith.constant 0 : i32
    %c0_i32_0 = arith.constant 0 : i32
    %c0_i32_1 = arith.constant 0 : i32
    %c0_i32_2 = arith.constant 0 : i32
    return %c0_i32, %c0_i32_0, %c0_i32_1 : i32, i32, i32
  }
  func.func @transform_5(%arg0: i32) -> (i32, i32, i32) {
    %c0_i32 = arith.constant 0 : i32
    %c0_i32_0 = arith.constant 0 : i32
    %c0_i32_1 = arith.constant 0 : i32
    %c0_i32_2 = arith.constant 0 : i32
    return %c0_i32, %c0_i32_0, %c0_i32_1 : i32, i32, i32
  }
  func.func @transform_6(%arg0: i32) -> (i32, i32, i32) {
    %c0_i32 = arith.constant 0 : i32
    %c0_i32_0 = arith.constant 0 : i32
    %c0_i32_1 = arith.constant 0 : i32
    %c0_i32_2 = arith.constant 0 : i32
    return %c0_i32, %c0_i32_0, %c0_i32_1 : i32, i32, i32
  }
  func.func @transform_7(%arg0: i32) -> (i32, i32, i32) {
    %c0_i32 = arith.constant 0 : i32
    %c0_i32_0 = arith.constant 0 : i32
    %c0_i32_1 = arith.constant 0 : i32
    %c0_i32_2 = arith.constant 0 : i32
    return %c0_i32, %c0_i32_0, %c0_i32_1 : i32, i32, i32
  }
  func.func @transform_8(%arg0: i32) -> (i32, i32, i32) {
    %c0_i32 = arith.constant 0 : i32
    %c0_i32_0 = arith.constant 0 : i32
    %c0_i32_1 = arith.constant 0 : i32
    %c0_i32_2 = arith.constant 0 : i32
    return %c0_i32, %c0_i32_0, %c0_i32_1 : i32, i32, i32
  }
  func.func @transform_9(%arg0: i32) -> (i32, i32, i32) {
    %c0_i32 = arith.constant 0 : i32
    %c0_i32_0 = arith.constant 0 : i32
    %c0_i32_1 = arith.constant 0 : i32
    %c0_i32_2 = arith.constant 0 : i32
    return %c0_i32, %c0_i32_0, %c0_i32_1 : i32, i32, i32
  }
  func.func @transform_10(%arg0: i32) -> (i32, i32, i32) {
    %c0_i32 = arith.constant 0 : i32
    %c0_i32_0 = arith.constant 0 : i32
    %c0_i32_1 = arith.constant 0 : i32
    %c0_i32_2 = arith.constant 0 : i32
    return %c0_i32, %c0_i32_0, %c0_i32_1 : i32, i32, i32
  }
  func.func @transform_11(%arg0: i32) -> (i32, i32, i32) {
    %c0_i32 = arith.constant 0 : i32
    %c0_i32_0 = arith.constant 0 : i32
    %c0_i32_1 = arith.constant 0 : i32
    %c0_i32_2 = arith.constant 0 : i32
    return %c0_i32, %c0_i32_0, %c0_i32_1 : i32, i32, i32
  }
  func.func @transform_12(%arg0: i32) -> (i32, i32, i32) {
    %c0_i32 = arith.constant 0 : i32
    %c0_i32_0 = arith.constant 0 : i32
    %c0_i32_1 = arith.constant 0 : i32
    %c0_i32_2 = arith.constant 0 : i32
    return %c0_i32, %c0_i32_0, %c0_i32_1 : i32, i32, i32
  }
  func.func @transform_13(%arg0: i32) -> (i32, i32, i32) {
    %c0_i32 = arith.constant 0 : i32
    %c0_i32_0 = arith.constant 0 : i32
    %c0_i32_1 = arith.constant 0 : i32
    return %arg0, %c0_i32, %c0_i32_0 : i32, i32, i32
  }
}

</mosaic_0001>

<llo_original>
// kernel: tpu_custom_call.1
$region0: #{tpu_custom_call.1}
  #allocation0 [shape = 'u32[]', space=smem, size = 0x4, offset = 0x4, fixed_abs, tag = 'smem constant byte address 0x4 - core index']
  #allocation1 [shape = 'u32[144,128]{1,0:T(1,128)}', space=vmem, size = 0x12000, scoped, tag = 'internal scratch']
  %s0 = inlined_call_operand.hbm [shape: f32[2,8,32], index: 0, kind: input, shape index: {}]
  %s1 = inlined_call_operand.vmem [shape: bf16[2,32,96], index: 1, kind: input, shape index: {}]
  %s2 = inlined_call_operand.vmem [shape: f32[2,1,96], index: 2, kind: input, shape index: {}]
  %s3 = inlined_call_operand.vmem [shape: bf16[2,32,32], index: 3, kind: input, shape index: {}]
  %s4 = inlined_call_operand.hbm [shape: f32[2,1,32], index: 4, kind: input, shape index: {}]
  %s5 = inlined_call_operand.hbm [shape: f32[2,1,32], index: 5, kind: input, shape index: {}]
  %s6 = inlined_call_operand.hbm [shape: f32[2,1,32], index: 6, kind: input, shape index: {}]
  %s7 = inlined_call_operand.vmem [shape: bf16[2,32,64], index: 7, kind: input, shape index: {}]
  %s8 = inlined_call_operand.hbm [shape: f32[2,1,64], index: 8, kind: input, shape index: {}]
  %s9 = inlined_call_operand.vmem [shape: bf16[2,64,32], index: 9, kind: input, shape index: {}]
  %s10 = inlined_call_operand.vmem [shape: f32[2,1,32], index: 10, kind: input, shape index: {}]
  %s11 = inlined_call_operand.vmem [shape: f32[2,1,32], index: 11, kind: input, shape index: {}]
  %s12 = inlined_call_operand.vmem [shape: f32[2,1,32], index: 12, kind: input, shape index: {}]
  %s13 = inlined_call_operand.hbm [shape: f32[2,8,32], index: 13, kind: output, shape index: {}]
  %s14 = sld [smem:[#allocation0]]
  $region82: #{tpu_custom_call.1} parent=0
    _
  %s16 = ssub.s32 1, %s14
  %s17 = scalar_select 0, %s16, %s14
  $region1: #{tpu_custom_call.1} parent=0
    #allocation2 [shape = 'u8[8192]{0}', space=vmem, size = 0x2000, scoped, tag = 'input window, operand 0, single buffered']
    #allocation3 [shape = 's32[1]{0}', space=sflag, size = 0x4, scoped, tag = 'scoped memory for tpu_custom_call.1']
    #allocation4 [shape = 's32[1]{0}', space=sflag, size = 0x4, scoped, tag = 'scoped memory for tpu_custom_call.1']
    #allocation5 [shape = 'u8[1024]{0}', space=vmem, size = 0x400, scoped, tag = 'input window, operand 4, single buffered']
    #allocation6 [shape = 's32[1]{0}', space=sflag, size = 0x4, scoped, tag = 'scoped memory for tpu_custom_call.1']
    #allocation7 [shape = 'u8[1024]{0}', space=vmem, size = 0x400, scoped, tag = 'input window, operand 5, single buffered']
    #allocation8 [shape = 'u8[1024]{0}', space=vmem, size = 0x400, scoped, tag = 'input window, operand 6, single buffered']
    #allocation9 [shape = 's32[1]{0}', space=sflag, size = 0x4, scoped, tag = 'scoped memory for tpu_custom_call.1']
    #allocation10 [shape = 'u8[1024]{0}', space=vmem, size = 0x400, scoped, tag = 'input window, operand 8, single buffered']
    #allocation11 [shape = 'u8[8192]{0}', space=vmem, size = 0x2000, scoped, tag = 'output window, operand 0, single buffered']
    %18 = vsyncpa [#allocation3], 0
    %19 = vsyncpa [#allocation6], 0
    %20 = vsyncpa [#allocation9], 0
    %21 = vsyncpa [#allocation4], 0
    // Predicated region
    $region2: #{tpu_custom_call.1} parent=1 // pred_check
      _
    $region3: #{tpu_custom_call.1} parent=1 // pred_check_branch
      %23 = sbr.rel (0) target = $region5
    $region4: #{tpu_custom_call.1} parent=1 // pred_region
      %s25 = ssub.s32 256, 256
      %26 = vsyncadd [#allocation3], %s25
      %s27 = sshll.u32 [#allocation2], 4
      %s28 = int_to_ptr.vmem [resolvable:$true] %s27
      %33 = dma.hbm_to_vmem [thread:$0]  %s0, 256, %s28, [#allocation3], 128, 128, 8
    $region5: #{tpu_custom_call.1} parent=1 // pred_fallthru
      _
    // Predicated region
    $region6: #{tpu_custom_call.1} parent=1 // pred_check
      _
    $region7: #{tpu_custom_call.1} parent=1 // pred_check_branch
      %35 = sbr.rel (0) target = $region9
    $region8: #{tpu_custom_call.1} parent=1 // pred_region
      _
    $region9: #{tpu_custom_call.1} parent=1 // pred_fallthru
      _
    // Predicated region
    $region10: #{tpu_custom_call.1} parent=1 // pred_check
      _
    $region11: #{tpu_custom_call.1} parent=1 // pred_check_branch
      %37 = sbr.rel (0) target = $region13
    $region12: #{tpu_custom_call.1} parent=1 // pred_region
      _
    $region13: #{tpu_custom_call.1} parent=1 // pred_fallthru
      _
    // Predicated region
    $region14: #{tpu_custom_call.1} parent=1 // pred_check
      _
    $region15: #{tpu_custom_call.1} parent=1 // pred_check_branch
      %39 = sbr.rel (0) target = $region17
    $region16: #{tpu_custom_call.1} parent=1 // pred_region
      _
    $region17: #{tpu_custom_call.1} parent=1 // pred_fallthru
      _
    // Predicated region
    $region18: #{tpu_custom_call.1} parent=1 // pred_check
      _
    $region19: #{tpu_custom_call.1} parent=1 // pred_check_branch
      %41 = sbr.rel (0) target = $region21
    $region20: #{tpu_custom_call.1} parent=1 // pred_region
      %s43 = ssub.s32 32, 32
      %44 = vsyncadd [#allocation6], %s43
      %s45 = sshll.u32 [#allocation5], 4
      %s46 = int_to_ptr.vmem [resolvable:$true] %s45
      %51 = dma.hbm_to_vmem [thread:$0]  %s4, 32, %s46, [#allocation6], 16, 16, 1
    $region21: #{tpu_custom_call.1} parent=1 // pred_fallthru
      _
    // Predicated region
    $region22: #{tpu_custom_call.1} parent=1 // pred_check
      _
    $region23: #{tpu_custom_call.1} parent=1 // pred_check_branch
      %53 = sbr.rel (0) target = $region25
    $region24: #{tpu_custom_call.1} parent=1 // pred_region
      %s55 = ssub.s32 32, 32
      %56 = vsyncadd [#allocation6], %s55
      %s57 = sshll.u32 [#allocation7], 4
      %s58 = int_to_ptr.vmem [resolvable:$true] %s57
      %63 = dma.hbm_to_vmem [thread:$0]  %s5, 32, %s58, [#allocation6], 16, 16, 1
    $region25: #{tpu_custom_call.1} parent=1 // pred_fallthru
      _
    // Predicated region
    $region26: #{tpu_custom_call.1} parent=1 // pred_check
      _
    $region27: #{tpu_custom_call.1} parent=1 // pred_check_branch
      %65 = sbr.rel (0) target = $region29
    $region28: #{tpu_custom_call.1} parent=1 // pred_region
      %s67 = ssub.s32 32, 32
      %68 = vsyncadd [#allocation9], %s67
      %s69 = sshll.u32 [#allocation8], 4
      %s70 = int_to_ptr.vmem [resolvable:$true] %s69
      %75 = dma.hbm_to_vmem [thread:$0]  %s6, 32, %s70, [#allocation9], 16, 16, 1
    $region29: #{tpu_custom_call.1} parent=1 // pred_fallthru
      _
    // Predicated region
    $region30: #{tpu_custom_call.1} parent=1 // pred_check
      _
    $region31: #{tpu_custom_call.1} parent=1 // pred_check_branch
      %77 = sbr.rel (0) target = $region33
    $region32: #{tpu_custom_call.1} parent=1 // pred_region
      _
    $region33: #{tpu_custom_call.1} parent=1 // pred_fallthru
      _
    // Predicated region
    $region34: #{tpu_custom_call.1} parent=1 // pred_check
      _
    $region35: #{tpu_custom_call.1} parent=1 // pred_check_branch
      %79 = sbr.rel (0) target = $region37
    $region36: #{tpu_custom_call.1} parent=1 // pred_region
      %s81 = ssub.s32 32, 32
      %82 = vsyncadd [#allocation9], %s81
      %s83 = sshll.u32 [#allocation10], 4
      %s84 = int_to_ptr.vmem [resolvable:$true] %s83
      %89 = dma.hbm_to_vmem [thread:$0]  %s8, 32, %s84, [#allocation9], 16, 16, 1
    $region37: #{tpu_custom_call.1} parent=1 // pred_fallthru
      _
    // Predicated region
    $region38: #{tpu_custom_call.1} parent=1 // pred_check
      _
    $region39: #{tpu_custom_call.1} parent=1 // pred_check_branch
      %91 = sbr.rel (0) target = $region41
    $region40: #{tpu_custom_call.1} parent=1 // pred_region
      _
    $region41: #{tpu_custom_call.1} parent=1 // pred_fallthru
      _
    // Predicated region
    $region42: #{tpu_custom_call.1} parent=1 // pred_check
      _
    $region43: #{tpu_custom_call.1} parent=1 // pred_check_branch
      %93 = sbr.rel (0) target = $region45
    $region44: #{tpu_custom_call.1} parent=1 // pred_region
      _
    $region45: #{tpu_custom_call.1} parent=1 // pred_fallthru
      _
    // Predicated region
    $region46: #{tpu_custom_call.1} parent=1 // pred_check
      _
    $region47: #{tpu_custom_call.1} parent=1 // pred_check_branch
      %95 = sbr.rel (0) target = $region49
    $region48: #{tpu_custom_call.1} parent=1 // pred_region
      _
    $region49: #{tpu_custom_call.1} parent=1 // pred_fallthru
      _
    // Predicated region
    $region50: #{tpu_custom_call.1} parent=1 // pred_check
      _
    $region51: #{tpu_custom_call.1} parent=1 // pred_check_branch
      %97 = sbr.rel (0) target = $region53
    $region52: #{tpu_custom_call.1} parent=1 // pred_region
      _
    $region53: #{tpu_custom_call.1} parent=1 // pred_fallthru
      _
    // Predicated region
    $region54: #{tpu_custom_call.1} parent=1 // pred_check
      _
    $region55: #{tpu_custom_call.1} parent=1 // pred_check_branch
      %99 = sbr.rel (0) target = $region57
    $region56: #{tpu_custom_call.1} parent=1 // pred_region
      %100 = dma.done [#allocation3], 256
    $region57: #{tpu_custom_call.1} parent=1 // pred_fallthru
      _
    // Predicated region
    $region58: #{tpu_custom_call.1} parent=1 // pred_check
      _
    $region59: #{tpu_custom_call.1} parent=1 // pred_check_branch
      %102 = sbr.rel (0) target = $region61
    $region60: #{tpu_custom_call.1} parent=1 // pred_region
      %103 = dma.done [#allocation6], 32
    $region61: #{tpu_custom_call.1} parent=1 // pred_fallthru
      _
    // Predicated region
    $region62: #{tpu_custom_call.1} parent=1 // pred_check
      _
    $region63: #{tpu_custom_call.1} parent=1 // pred_check_branch
      %105 = sbr.rel (0) target = $region65
    $region64: #{tpu_custom_call.1} parent=1 // pred_region
      %106 = dma.done [#allocation6], 32
    $region65: #{tpu_custom_call.1} parent=1 // pred_fallthru
      _
    // Predicated region
    $region66: #{tpu_custom_call.1} parent=1 // pred_check
      _
    $region67: #{tpu_custom_call.1} parent=1 // pred_check_branch
      %108 = sbr.rel (0) target = $region69
    $region68: #{tpu_custom_call.1} parent=1 // pred_region
      %109 = dma.done [#allocation9], 32
    $region69: #{tpu_custom_call.1} parent=1 // pred_fallthru
      _
    // Predicated region
    $region70: #{tpu_custom_call.1} parent=1 // pred_check
      _
    $region71: #{tpu_custom_call.1} parent=1 // pred_check_branch
      %111 = sbr.rel (0) target = $region73
    $region72: #{tpu_custom_call.1} parent=1 // pred_region
      %112 = dma.done [#allocation9], 32
    $region73: #{tpu_custom_call.1} parent=1 // pred_fallthru
      _
    %v114 = vld [vmem:[#allocation2] sm:$0xff]
    %v115 = vld [vmem:[#allocation2 + $0x8] sm:$0xff]
    %v116 = vld [vmem:[%s1] sm:$0xf]
    %v117 = vld [vmem:[%s1 + $0x4] sm:$0xf]
    %v118 = vld [vmem:[%s1 + $0x8] sm:$0xf]
    %v119 = vld [vmem:[%s1 + $0xc] sm:$0xf]
    %v120 = vld [vmem:[%s2] sm:$0x1]
    %v121 = vld [vmem:[%s3] sm:$0xf]
    %v122 = vld [vmem:[%s3 + $0x4] sm:$0xf]
    %v123 = vld [vmem:[%s3 + $0x8] sm:$0xf]
    %v124 = vld [vmem:[%s3 + $0xc] sm:$0xf]
    %v125 = vld [vmem:[#allocation5] sm:$0x1]
    %v126 = vld [vmem:[#allocation7] sm:$0x1]
    %v127 = vld [vmem:[#allocation8] sm:$0x1]
    %v128 = vld [vmem:[%s7] sm:$0xf]
    %v129 = vld [vmem:[%s7 + $0x4] sm:$0xf]
    %v130 = vld [vmem:[%s7 + $0x8] sm:$0xf]
    %v131 = vld [vmem:[%s7 + $0xc] sm:$0xf]
    %v132 = vld [vmem:[#allocation10] sm:$0x1]
    %v133 = vld [vmem:[%s9] sm:$0xf]
    %v134 = vld [vmem:[%s9 + $0x4] sm:$0xf]
    %v135 = vld [vmem:[%s9 + $0x8] sm:$0xf]
    %v136 = vld [vmem:[%s9 + $0xc] sm:$0xf]
    %v137 = vld [vmem:[%s9 + $0x10] sm:$0xf]
    %v138 = vld [vmem:[%s9 + $0x14] sm:$0xf]
    %v139 = vld [vmem:[%s9 + $0x18] sm:$0xf]
    %v140 = vld [vmem:[%s9 + $0x1c] sm:$0xf]
    %v141 = vld [vmem:[%s10] sm:$0x1]
    %v142 = vld [vmem:[%s11] sm:$0x1]
    %v143 = vld [vmem:[%s12] sm:$0x1]
    %v144 = vpack.c.bf16 %v115, %v114
    %v146 = vlaneseq
    %v147 = vshrl.u32 %v146, 7
    %v148 = vsub.s32 0, %v147
    %v149 = vrot.slane %v120, %v148
    %v155 = vunpack.c.l.b16 %v116
    %v156 = vunpack.c.l.b16 %v117
    %v157 = vunpack.c.l.b16 %v118
    %v158 = vunpack.c.l.b16 %v119
    %v159 = vpack.c.b16 %v156, %v155
    %v160 = vpack.c.b16 %v158, %v157
    %vm163 = vcmask 261120
    %v165 = vsel %vm163, %v144, 0
    %167 = vmatprep.subr.bf16.mxu0 0
    %168 = vmatpush1.bf16.msra.mxu0 %v159
    %169 = vmatprep.subr.bf16.mxu0 0
    %170 = vmatpush1.bf16.msra.mxu0 %v160
    %171 = vmatprep.subr.bf16.mxu0 0
    %172 = vmatpush1.bf16.msra.mxu0 0
    %173 = vmatprep.subr.bf16.mxu0 0
    %174 = vmatpush1.bf16.msra.mxu0 0
    %175 = vmatprep.subr.bf16.mxu0 0
    %176 = vmatpush1.bf16.msra.mxu0 0
    %177 = vmatprep.subr.bf16.mxu0 0
    %178 = vmatpush1.bf16.msra.mxu0 0
    %179 = vmatprep.subr.bf16.mxu0 0
    %180 = vmatpush1.bf16.msra.mxu0 0
    %181 = vmatprep.subr.bf16.mxu0 0
    %182 = vmatpush1.bf16.msra.mxu0 0
    %183 = vmatprep.subr.bf16.mxu0 0
    %184 = vmatpush1.bf16.msra.mxu0 0
    %185 = vmatprep.subr.bf16.mxu0 0
    %186 = vmatpush1.bf16.msra.mxu0 0
    %187 = vmatprep.subr.bf16.mxu0 0
    %188 = vmatpush1.bf16.msra.mxu0 0
    %189 = vmatprep.subr.bf16.mxu0 0
    %190 = vmatpush1.bf16.msra.mxu0 0
    %191 = vmatprep.subr.bf16.mxu0 0
    %192 = vmatpush1.bf16.msra.mxu0 0
    %193 = vmatprep.subr.bf16.mxu0 0
    %194 = vmatpush1.bf16.msra.mxu0 0
    %195 = vmatprep.subr.bf16.mxu0 0
    %196 = vmatpush1.bf16.msra.mxu0 0
    %197 = vmatprep.subr.bf16.mxu0 0
    %198 = vmatpush1.bf16.msra.mxu0 0
    %199 = vmatprep.mubr.bf16.mxu0 0
    %200 = vmatmul.mubr.bf16.gmra.mrb[0].mxu0 %v165
    %v201 = vpop.f32.mrb[0].mxu0
    %v202 = vadd.f32 %v149, %v201
    %v203 = vpop.f32.mrb[0].mxu0
    %v204 = vpop.f32.mrb[0].mxu0
    %v205 = vadd.f32 %v149, %v204
    %v206 = vpop.f32.mrb[0].mxu0
    %207 = vdwg.mxu0
    %v208 = vmul.f32 %v202, 0.35355338
    %v209 = vmul.f32 %v205, 0.35355338
    %v210 = vpack.c.bf16 %v208, %v208
    %v211 = vpack.c.bf16 %v209, %v209
    %v212 = vpack.c.bf16 %v202, %v202
    %v213 = vpack.c.bf16 %v205, %v205
    %215 = vrot.lane.b32.xlu0 %v212, 96
    %v216 = vpop.permute.xlu0 %215
    %vm217 = vcmask 64512
    %v219 = vsel %vm217, %v210, 0
    %v222 = vsel %vm217, %v216, 0
    %224 = vmatprep.subr.bf16.mxu0 0
    %225 = vmatpush1.bf16.xpose.msra.mxu0 %v222
    %226 = vmatprep.subr.bf16.mxu0 0
    %227 = vmatpush1.bf16.xpose.msra.mxu0 0
    %228 = vmatprep.subr.bf16.mxu0 0
    %229 = vmatpush1.bf16.xpose.msra.mxu0 0
    %230 = vmatprep.subr.bf16.mxu0 0
    %231 = vmatpush1.bf16.xpose.msra.mxu0 0
    %232 = vmatprep.subr.bf16.mxu0 0
    %233 = vmatpush1.bf16.xpose.msra.mxu0 0
    %234 = vmatprep.subr.bf16.mxu0 0
    %235 = vmatpush1.bf16.xpose.msra.mxu0 0
    %236 = vmatprep.subr.bf16.mxu0 0
    %237 = vmatpush1.bf16.xpose.msra.mxu0 0
    %238 = vmatprep.subr.bf16.mxu0 0
    %239 = vmatpush1.bf16.xpose.msra.mxu0 0
    %240 = vmatprep.subr.bf16.mxu0 0
    %241 = vmatpush1.bf16.xpose.msra.mxu0 0
    %242 = vmatprep.subr.bf16.mxu0 0
    %243 = vmatpush1.bf16.xpose.msra.mxu0 0
    %244 = vmatprep.subr.bf16.mxu0 0
    %245 = vmatpush1.bf16.xpose.msra.mxu0 0
    %246 = vmatprep.subr.bf16.mxu0 0
    %247 = vmatpush1.bf16.xpose.msra.mxu0 0
    %248 = vmatprep.subr.bf16.mxu0 0
    %249 = vmatpush1.bf16.xpose.msra.mxu0 0
    %250 = vmatprep.subr.bf16.mxu0 0
    %251 = vmatpush1.bf16.xpose.msra.mxu0 0
    %252 = vmatprep.subr.bf16.mxu0 0
    %253 = vmatpush1.bf16.xpose.msra.mxu0 0
    %254 = vmatprep.subr.bf16.mxu0 0
    %255 = vmatpush1.bf16.xpose.msra.mxu0 0
    %256 = vmatprep.mubr.bf16.mxu0 0
    %257 = vmatmul.mubr.bf16.gmra.mrb[0].mxu0 %v219
    %v258 = vpop.f32.mrb[0].mxu0
    %v259 = vadd.f32 0.0, %v258
    %v260 = vpop.f32.mrb[0].mxu0
    %v261 = vpop.f32.mrb[0].mxu0
    %v262 = vpop.f32.mrb[0].mxu0
    %263 = vdwg.mxu0
    %265 = vrot.lane.b32.xlu0 %v213, 96
    %v266 = vpop.permute.xlu0 %265
    %v268 = vsel %vm217, %v211, 0
    %v271 = vsel %vm217, %v266, 0
    %273 = vmatprep.subr.bf16.mxu0 0
    %274 = vmatpush1.bf16.xpose.msra.mxu0 %v271
    %275 = vmatprep.subr.bf16.mxu0 0
    %276 = vmatpush1.bf16.xpose.msra.mxu0 0
    %277 = vmatprep.subr.bf16.mxu0 0
    %278 = vmatpush1.bf16.xpose.msra.mxu0 0
    %279 = vmatprep.subr.bf16.mxu0 0
    %280 = vmatpush1.bf16.xpose.msra.mxu0 0
    %281 = vmatprep.subr.bf16.mxu0 0
    %282 = vmatpush1.bf16.xpose.msra.mxu0 0
    %283 = vmatprep.subr.bf16.mxu0 0
    %284 = vmatpush1.bf16.xpose.msra.mxu0 0
    %285 = vmatprep.subr.bf16.mxu0 0
    %286 = vmatpush1.bf16.xpose.msra.mxu0 0
    %287 = vmatprep.subr.bf16.mxu0 0
    %288 = vmatpush1.bf16.xpose.msra.mxu0 0
    %289 = vmatprep.subr.bf16.mxu0 0
    %290 = vmatpush1.bf16.xpose.msra.mxu0 0
    %291 = vmatprep.subr.bf16.mxu0 0
    %292 = vmatpush1.bf16.xpose.msra.mxu0 0
    %293 = vmatprep.subr.bf16.mxu0 0
    %294 = vmatpush1.bf16.xpose.msra.mxu0 0
    %295 = vmatprep.subr.bf16.mxu0 0
    %296 = vmatpush1.bf16.xpose.msra.mxu0 0
    %297 = vmatprep.subr.bf16.mxu0 0
    %298 = vmatpush1.bf16.xpose.msra.mxu0 0
    %299 = vmatprep.subr.bf16.mxu0 0
    %300 = vmatpush1.bf16.xpose.msra.mxu0 0
    %301 = vmatprep.subr.bf16.mxu0 0
    %302 = vmatpush1.bf16.xpose.msra.mxu0 0
    %303 = vmatprep.subr.bf16.mxu0 0
    %304 = vmatpush1.bf16.xpose.msra.mxu0 0
    %305 = vmatprep.mubr.bf16.mxu0 0
    %306 = vmatmul.mubr.bf16.gmra.mrb[0].mxu0 %v268
    %v307 = vpop.f32.mrb[0].mxu0
    %v308 = vadd.f32 0.0, %v307
    %v309 = vpop.f32.mrb[0].mxu0
    %v310 = vpop.f32.mrb[0].mxu0
    %v311 = vpop.f32.mrb[0].mxu0
    %312 = vdwg.mxu0
    %v313 = vsel %vm217, %v259, -inf
    %314 = vmax.xlane.f32.xlu0 %v313
    %v315 = vpop.xlane.xlu0 %314
    %v316 = vsel %vm217, %v308, -inf
    %317 = vmax.xlane.f32.xlu0 %v316
    %v318 = vpop.xlane.xlu0 %317
    %v319 = vsub.f32 %v259, %v315
    %v320 = vsub.f32 %v308, %v318
    %v321 = vmul.f32 %v319, 1.442695
    %v322 = vpow.pop %v321
    %v323 = vmul.f32 %v320, 1.442695
    %v324 = vpow.pop %v323
    %v325 = vsel %vm217, %v322, 0.0
    %326 = vadd.xlane.f32.xlu0 %v325
    %v327 = vpop.xlane.xlu0 %326
    %v328 = vsel %vm217, %v324, 0.0
    %329 = vadd.xlane.f32.xlu0 %v328
    %v330 = vpop.xlane.xlu0 %329
    %v331 = vrcp.pop %v327
    %v332 = vrcp.pop %v330
    %v333 = vmul.f32 %v322, %v331
    %v334 = vmul.f32 %v324, %v332
    %v335 = vpack.c.bf16 %v333, %v333
    %v336 = vpack.c.bf16 %v334, %v334
    %337 = vrot.lane.b32.xlu0 %v212, 64
    %v338 = vpop.permute.xlu0 %337
    %v340 = vsel %vm217, %v335, 0
    %vm342 = vcmask 1043456
    %v344 = vsel %vm342, %v338, 0
    %346 = vmatprep.subr.bf16.mxu0 0
    %347 = vmatpush1.bf16.msra.mxu0 %v344
    %348 = vmatprep.subr.bf16.mxu0 0
    %349 = vmatpush1.bf16.msra.mxu0 0
    %350 = vmatprep.subr.bf16.mxu0 0
    %351 = vmatpush1.bf16.msra.mxu0 0
    %352 = vmatprep.subr.bf16.mxu0 0
    %353 = vmatpush1.bf16.msra.mxu0 0
    %354 = vmatprep.subr.bf16.mxu0 0
    %355 = vmatpush1.bf16.msra.mxu0 0
    %356 = vmatprep.subr.bf16.mxu0 0
    %357 = vmatpush1.bf16.msra.mxu0 0
    %358 = vmatprep.subr.bf16.mxu0 0
    %359 = vmatpush1.bf16.msra.mxu0 0
    %360 = vmatprep.subr.bf16.mxu0 0
    %361 = vmatpush1.bf16.msra.mxu0 0
    %362 = vmatprep.subr.bf16.mxu0 0
    %363 = vmatpush1.bf16.msra.mxu0 0
    %364 = vmatprep.subr.bf16.mxu0 0
    %365 = vmatpush1.bf16.msra.mxu0 0
    %366 = vmatprep.subr.bf16.mxu0 0
    %367 = vmatpush1.bf16.msra.mxu0 0
    %368 = vmatprep.subr.bf16.mxu0 0
    %369 = vmatpush1.bf16.msra.mxu0 0
    %370 = vmatprep.subr.bf16.mxu0 0
    %371 = vmatpush1.bf16.msra.mxu0 0
    %372 = vmatprep.subr.bf16.mxu0 0
    %373 = vmatpush1.bf16.msra.mxu0 0
    %374 = vmatprep.subr.bf16.mxu0 0
    %375 = vmatpush1.bf16.msra.mxu0 0
    %376 = vmatprep.subr.bf16.mxu0 0
    %377 = vmatpush1.bf16.msra.mxu0 0
    %378 = vmatprep.mubr.bf16.mxu0 0
    %379 = vmatmul.mubr.bf16.gmra.mrb[0].mxu0 %v340
    %v380 = vpop.f32.mrb[0].mxu0
    %v381 = vadd.f32 0.0, %v380
    %v382 = vpop.f32.mrb[0].mxu0
    %v383 = vpop.f32.mrb[0].mxu0
    %v384 = vpop.f32.mrb[0].mxu0
    %385 = vdwg.mxu0
    %386 = vrot.lane.b32.xlu0 %v213, 64
    %v387 = vpop.permute.xlu0 %386
    %v389 = vsel %vm217, %v336, 0
    %v392 = vsel %vm342, %v387, 0
    %394 = vmatprep.subr.bf16.mxu0 0
    %395 = vmatpush1.bf16.msra.mxu0 %v392
    %396 = vmatprep.subr.bf16.mxu0 0
    %397 = vmatpush1.bf16.msra.mxu0 0
    %398 = vmatprep.subr.bf16.mxu0 0
    %399 = vmatpush1.bf16.msra.mxu0 0
    %400 = vmatprep.subr.bf16.mxu0 0
    %401 = vmatpush1.bf16.msra.mxu0 0
    %402 = vmatprep.subr.bf16.mxu0 0
    %403 = vmatpush1.bf16.msra.mxu0 0
    %404 = vmatprep.subr.bf16.mxu0 0
    %405 = vmatpush1.bf16.msra.mxu0 0
    %406 = vmatprep.subr.bf16.mxu0 0
    %407 = vmatpush1.bf16.msra.mxu0 0
    %408 = vmatprep.subr.bf16.mxu0 0
    %409 = vmatpush1.bf16.msra.mxu0 0
    %410 = vmatprep.subr.bf16.mxu0 0
    %411 = vmatpush1.bf16.msra.mxu0 0
    %412 = vmatprep.subr.bf16.mxu0 0
    %413 = vmatpush1.bf16.msra.mxu0 0
    %414 = vmatprep.subr.bf16.mxu0 0
    %415 = vmatpush1.bf16.msra.mxu0 0
    %416 = vmatprep.subr.bf16.mxu0 0
    %417 = vmatpush1.bf16.msra.mxu0 0
    %418 = vmatprep.subr.bf16.mxu0 0
    %419 = vmatpush1.bf16.msra.mxu0 0
    %420 = vmatprep.subr.bf16.mxu0 0
    %421 = vmatpush1.bf16.msra.mxu0 0
    %422 = vmatprep.subr.bf16.mxu0 0
    %423 = vmatpush1.bf16.msra.mxu0 0
    %424 = vmatprep.subr.bf16.mxu0 0
    %425 = vmatpush1.bf16.msra.mxu0 0
    %426 = vmatprep.mubr.bf16.mxu0 0
    %427 = vmatmul.mubr.bf16.gmra.mrb[0].mxu0 %v389
    %v428 = vpop.f32.mrb[0].mxu0
    %v429 = vadd.f32 0.0, %v428
    %v430 = vpop.f32.mrb[0].mxu0
    %v431 = vpop.f32.mrb[0].mxu0
    %v432 = vpop.f32.mrb[0].mxu0
    %433 = vdwg.mxu0
    %435 = vrot.lane.b32.xlu0 %v210, 120
    %v436 = vpop.permute.xlu0 %435
    %437 = vrot.lane.b32.xlu0 %v212, 88
    %v438 = vpop.permute.xlu0 %437
    %v440 = vsel %vm217, %v436, 0
    %v443 = vsel %vm217, %v438, 0
    %445 = vmatprep.subr.bf16.mxu0 0
    %446 = vmatpush1.bf16.xpose.msra.mxu0 %v443
    %447 = vmatprep.subr.bf16.mxu0 0
    %448 = vmatpush1.bf16.xpose.msra.mxu0 0
    %449 = vmatprep.subr.bf16.mxu0 0
    %450 = vmatpush1.bf16.xpose.msra.mxu0 0
    %451 = vmatprep.subr.bf16.mxu0 0
    %452 = vmatpush1.bf16.xpose.msra.mxu0 0
    %453 = vmatprep.subr.bf16.mxu0 0
    %454 = vmatpush1.bf16.xpose.msra.mxu0 0
    %455 = vmatprep.subr.bf16.mxu0 0
    %456 = vmatpush1.bf16.xpose.msra.mxu0 0
    %457 = vmatprep.subr.bf16.mxu0 0
    %458 = vmatpush1.bf16.xpose.msra.mxu0 0
    %459 = vmatprep.subr.bf16.mxu0 0
    %460 = vmatpush1.bf16.xpose.msra.mxu0 0
    %461 = vmatprep.subr.bf16.mxu0 0
    %462 = vmatpush1.bf16.xpose.msra.mxu0 0
    %463 = vmatprep.subr.bf16.mxu0 0
    %464 = vmatpush1.bf16.xpose.msra.mxu0 0
    %465 = vmatprep.subr.bf16.mxu0 0
    %466 = vmatpush1.bf16.xpose.msra.mxu0 0
    %467 = vmatprep.subr.bf16.mxu0 0
    %468 = vmatpush1.bf16.xpose.msra.mxu0 0
    %469 = vmatprep.subr.bf16.mxu0 0
    %470 = vmatpush1.bf16.xpose.msra.mxu0 0
    %471 = vmatprep.subr.bf16.mxu0 0
    %472 = vmatpush1.bf16.xpose.msra.mxu0 0
    %473 = vmatprep.subr.bf16.mxu0 0
    %474 = vmatpush1.bf16.xpose.msra.mxu0 0
    %475 = vmatprep.subr.bf16.mxu0 0
    %476 = vmatpush1.bf16.xpose.msra.mxu0 0
    %477 = vmatprep.mubr.bf16.mxu0 0
    %478 = vmatmul.mubr.bf16.gmra.mrb[0].mxu0 %v440
    %v479 = vpop.f32.mrb[0].mxu0
    %v480 = vadd.f32 0.0, %v479
    %v481 = vpop.f32.mrb[0].mxu0
    %v482 = vpop.f32.mrb[0].mxu0
    %v483 = vpop.f32.mrb[0].mxu0
    %484 = vdwg.mxu0
    %486 = vrot.lane.b32.xlu0 %v211, 120
    %v487 = vpop.permute.xlu0 %486
    %488 = vrot.lane.b32.xlu0 %v213, 88
    %v489 = vpop.permute.xlu0 %488
    %v491 = vsel %vm217, %v487, 0
    %v494 = vsel %vm217, %v489, 0
    %496 = vmatprep.subr.bf16.mxu0 0
    %497 = vmatpush1.bf16.xpose.msra.mxu0 %v494
    %498 = vmatprep.subr.bf16.mxu0 0
    %499 = vmatpush1.bf16.xpose.msra.mxu0 0
    %500 = vmatprep.subr.bf16.mxu0 0
    %501 = vmatpush1.bf16.xpose.msra.mxu0 0
    %502 = vmatprep.subr.bf16.mxu0 0
    %503 = vmatpush1.bf16.xpose.msra.mxu0 0
    %504 = vmatprep.subr.bf16.mxu0 0
    %505 = vmatpush1.bf16.xpose.msra.mxu0 0
    %506 = vmatprep.subr.bf16.mxu0 0
    %507 = vmatpush1.bf16.xpose.msra.mxu0 0
    %508 = vmatprep.subr.bf16.mxu0 0
    %509 = vmatpush1.bf16.xpose.msra.mxu0 0
    %510 = vmatprep.subr.bf16.mxu0 0
    %511 = vmatpush1.bf16.xpose.msra.mxu0 0
    %512 = vmatprep.subr.bf16.mxu0 0
    %513 = vmatpush1.bf16.xpose.msra.mxu0 0
    %514 = vmatprep.subr.bf16.mxu0 0
    %515 = vmatpush1.bf16.xpose.msra.mxu0 0
    %516 = vmatprep.subr.bf16.mxu0 0
    %517 = vmatpush1.bf16.xpose.msra.mxu0 0
    %518 = vmatprep.subr.bf16.mxu0 0
    %519 = vmatpush1.bf16.xpose.msra.mxu0 0
    %520 = vmatprep.subr.bf16.mxu0 0
    %521 = vmatpush1.bf16.xpose.msra.mxu0 0
    %522 = vmatprep.subr.bf16.mxu0 0
    %523 = vmatpush1.bf16.xpose.msra.mxu0 0
    %524 = vmatprep.subr.bf16.mxu0 0
    %525 = vmatpush1.bf16.xpose.msra.mxu0 0
    %526 = vmatprep.subr.bf16.mxu0 0
    %527 = vmatpush1.bf16.xpose.msra.mxu0 0
    %528 = vmatprep.mubr.bf16.mxu0 0
    %529 = vmatmul.mubr.bf16.gmra.mrb[0].mxu0 %v491
    %v530 = vpop.f32.mrb[0].mxu0
    %v531 = vadd.f32 0.0, %v530
    %v532 = vpop.f32.mrb[0].mxu0
    %v533 = vpop.f32.mrb[0].mxu0
    %v534 = vpop.f32.mrb[0].mxu0
    %535 = vdwg.mxu0
    %v536 = vsel %vm217, %v480, -inf
    %537 = vmax.xlane.f32.xlu0 %v536
    %v538 = vpop.xlane.xlu0 %537
    %v539 = vsel %vm217, %v531, -inf
    %540 = vmax.xlane.f32.xlu0 %v539
    %v541 = vpop.xlane.xlu0 %540
    %v542 = vsub.f32 %v480, %v538
    %v543 = vsub.f32 %v531, %v541
    %v544 = vmul.f32 %v542, 1.442695
    %v545 = vpow.pop %v544
    %v546 = vmul.f32 %v543, 1.442695
    %v547 = vpow.pop %v546
    %v548 = vsel %vm217, %v545, 0.0
    %549 = vadd.xlane.f32.xlu0 %v548
    %v550 = vpop.xlane.xlu0 %549
    %v551 = vsel %vm217, %v547, 0.0
    %552 = vadd.xlane.f32.xlu0 %v551
    %v553 = vpop.xlane.xlu0 %552
    %v554 = vrcp.pop %v550
    %v555 = vrcp.pop %v553
    %v556 = vmul.f32 %v545, %v554
    %v557 = vmul.f32 %v547, %v555
    %v558 = vpack.c.bf16 %v556, %v556
    %v559 = vpack.c.bf16 %v557, %v557
    %560 = vrot.lane.b32.xlu0 %v212, 56
    %v561 = vpop.permute.xlu0 %560
    %v563 = vsel %vm217, %v558, 0
    %v566 = vsel %vm342, %v561, 0
    %568 = vmatprep.subr.bf16.mxu0 0
    %569 = vmatpush1.bf16.msra.mxu0 %v566
    %570 = vmatprep.subr.bf16.mxu0 0
    %571 = vmatpush1.bf16.msra.mxu0 0
    %572 = vmatprep.subr.bf16.mxu0 0
    %573 = vmatpush1.bf16.msra.mxu0 0
    %574 = vmatprep.subr.bf16.mxu0 0
    %575 = vmatpush1.bf16.msra.mxu0 0
    %576 = vmatprep.subr.bf16.mxu0 0
    %577 = vmatpush1.bf16.msra.mxu0 0
    %578 = vmatprep.subr.bf16.mxu0 0
    %579 = vmatpush1.bf16.msra.mxu0 0
    %580 = vmatprep.subr.bf16.mxu0 0
    %581 = vmatpush1.bf16.msra.mxu0 0
    %582 = vmatprep.subr.bf16.mxu0 0
    %583 = vmatpush1.bf16.msra.mxu0 0
    %584 = vmatprep.subr.bf16.mxu0 0
    %585 = vmatpush1.bf16.msra.mxu0 0
    %586 = vmatprep.subr.bf16.mxu0 0
    %587 = vmatpush1.bf16.msra.mxu0 0
    %588 = vmatprep.subr.bf16.mxu0 0
    %589 = vmatpush1.bf16.msra.mxu0 0
    %590 = vmatprep.subr.bf16.mxu0 0
    %591 = vmatpush1.bf16.msra.mxu0 0
    %592 = vmatprep.subr.bf16.mxu0 0
    %593 = vmatpush1.bf16.msra.mxu0 0
    %594 = vmatprep.subr.bf16.mxu0 0
    %595 = vmatpush1.bf16.msra.mxu0 0
    %596 = vmatprep.subr.bf16.mxu0 0
    %597 = vmatpush1.bf16.msra.mxu0 0
    %598 = vmatprep.subr.bf16.mxu0 0
    %599 = vmatpush1.bf16.msra.mxu0 0
    %600 = vmatprep.mubr.bf16.mxu0 0
    %601 = vmatmul.mubr.bf16.gmra.mrb[0].mxu0 %v563
    %v602 = vpop.f32.mrb[0].mxu0
    %v603 = vadd.f32 0.0, %v602
    %v604 = vpop.f32.mrb[0].mxu0
    %v605 = vpop.f32.mrb[0].mxu0
    %v606 = vpop.f32.mrb[0].mxu0
    %607 = vdwg.mxu0
    %608 = vrot.lane.b32.xlu0 %v213, 56
    %v609 = vpop.permute.xlu0 %608
    %v611 = vsel %vm217, %v559, 0
    %v614 = vsel %vm342, %v609, 0
    %616 = vmatprep.subr.bf16.mxu0 0
    %617 = vmatpush1.bf16.msra.mxu0 %v614
    %618 = vmatprep.subr.bf16.mxu0 0
    %619 = vmatpush1.bf16.msra.mxu0 0
    %620 = vmatprep.subr.bf16.mxu0 0
    %621 = vmatpush1.bf16.msra.mxu0 0
    %622 = vmatprep.subr.bf16.mxu0 0
    %623 = vmatpush1.bf16.msra.mxu0 0
    %624 = vmatprep.subr.bf16.mxu0 0
    %625 = vmatpush1.bf16.msra.mxu0 0
    %626 = vmatprep.subr.bf16.mxu0 0
    %627 = vmatpush1.bf16.msra.mxu0 0
    %628 = vmatprep.subr.bf16.mxu0 0
    %629 = vmatpush1.bf16.msra.mxu0 0
    %630 = vmatprep.subr.bf16.mxu0 0
    %631 = vmatpush1.bf16.msra.mxu0 0
    %632 = vmatprep.subr.bf16.mxu0 0
    %633 = vmatpush1.bf16.msra.mxu0 0
    %634 = vmatprep.subr.bf16.mxu0 0
    %635 = vmatpush1.bf16.msra.mxu0 0
    %636 = vmatprep.subr.bf16.mxu0 0
    %637 = vmatpush1.bf16.msra.mxu0 0
    %638 = vmatprep.subr.bf16.mxu0 0
    %639 = vmatpush1.bf16.msra.mxu0 0
    %640 = vmatprep.subr.bf16.mxu0 0
    %641 = vmatpush1.bf16.msra.mxu0 0
    %642 = vmatprep.subr.bf16.mxu0 0
    %643 = vmatpush1.bf16.msra.mxu0 0
    %644 = vmatprep.subr.bf16.mxu0 0
    %645 = vmatpush1.bf16.msra.mxu0 0
    %646 = vmatprep.subr.bf16.mxu0 0
    %647 = vmatpush1.bf16.msra.mxu0 0
    %648 = vmatprep.mubr.bf16.mxu0 0
    %649 = vmatmul.mubr.bf16.gmra.mrb[0].mxu0 %v611
    %v650 = vpop.f32.mrb[0].mxu0
    %v651 = vadd.f32 0.0, %v650
    %v652 = vpop.f32.mrb[0].mxu0
    %v653 = vpop.f32.mrb[0].mxu0
    %v654 = vpop.f32.mrb[0].mxu0
    %655 = vdwg.mxu0
    %656 = vrot.lane.b32.xlu0 %v210, 112
    %v657 = vpop.permute.xlu0 %656
    %658 = vrot.lane.b32.xlu0 %v212, 80
    %v659 = vpop.permute.xlu0 %658
    %v661 = vsel %vm217, %v657, 0
    %v664 = vsel %vm217, %v659, 0
    %666 = vmatprep.subr.bf16.mxu0 0
    %667 = vmatpush1.bf16.xpose.msra.mxu0 %v664
    %668 = vmatprep.subr.bf16.mxu0 0
    %669 = vmatpush1.bf16.xpose.msra.mxu0 0
    %670 = vmatprep.subr.bf16.mxu0 0
    %671 = vmatpush1.bf16.xpose.msra.mxu0 0
    %672 = vmatprep.subr.bf16.mxu0 0
    %673 = vmatpush1.bf16.xpose.msra.mxu0 0
    %674 = vmatprep.subr.bf16.mxu0 0
    %675 = vmatpush1.bf16.xpose.msra.mxu0 0
    %676 = vmatprep.subr.bf16.mxu0 0
    %677 = vmatpush1.bf16.xpose.msra.mxu0 0
    %678 = vmatprep.subr.bf16.mxu0 0
    %679 = vmatpush1.bf16.xpose.msra.mxu0 0
    %680 = vmatprep.subr.bf16.mxu0 0
    %681 = vmatpush1.bf16.xpose.msra.mxu0 0
    %682 = vmatprep.subr.bf16.mxu0 0
    %683 = vmatpush1.bf16.xpose.msra.mxu0 0
    %684 = vmatprep.subr.bf16.mxu0 0
    %685 = vmatpush1.bf16.xpose.msra.mxu0 0
    %686 = vmatprep.subr.bf16.mxu0 0
    %687 = vmatpush1.bf16.xpose.msra.mxu0 0
    %688 = vmatprep.subr.bf16.mxu0 0
    %689 = vmatpush1.bf16.xpose.msra.mxu0 0
    %690 = vmatprep.subr.bf16.mxu0 0
    %691 = vmatpush1.bf16.xpose.msra.mxu0 0
    %692 = vmatprep.subr.bf16.mxu0 0
    %693 = vmatpush1.bf16.xpose.msra.mxu0 0
    %694 = vmatprep.subr.bf16.mxu0 0
    %695 = vmatpush1.bf16.xpose.msra.mxu0 0
    %696 = vmatprep.subr.bf16.mxu0 0
    %697 = vmatpush1.bf16.xpose.msra.mxu0 0
    %698 = vmatprep.mubr.bf16.mxu0 0
    %699 = vmatmul.mubr.bf16.gmra.mrb[0].mxu0 %v661
    %v700 = vpop.f32.mrb[0].mxu0
    %v701 = vadd.f32 0.0, %v700
    %v702 = vpop.f32.mrb[0].mxu0
    %v703 = vpop.f32.mrb[0].mxu0
    %v704 = vpop.f32.mrb[0].mxu0
    %705 = vdwg.mxu0
    %706 = vrot.lane.b32.xlu0 %v211, 112
    %v707 = vpop.permute.xlu0 %706
    %708 = vrot.lane.b32.xlu0 %v213, 80
    %v709 = vpop.permute.xlu0 %708
    %v711 = vsel %vm217, %v707, 0
    %v714 = vsel %vm217, %v709, 0
    %716 = vmatprep.subr.bf16.mxu0 0
    %717 = vmatpush1.bf16.xpose.msra.mxu0 %v714
    %718 = vmatprep.subr.bf16.mxu0 0
    %719 = vmatpush1.bf16.xpose.msra.mxu0 0
    %720 = vmatprep.subr.bf16.mxu0 0
    %721 = vmatpush1.bf16.xpose.msra.mxu0 0
    %722 = vmatprep.subr.bf16.mxu0 0
    %723 = vmatpush1.bf16.xpose.msra.mxu0 0
    %724 = vmatprep.subr.bf16.mxu0 0
    %725 = vmatpush1.bf16.xpose.msra.mxu0 0
    %726 = vmatprep.subr.bf16.mxu0 0
    %727 = vmatpush1.bf16.xpose.msra.mxu0 0
    %728 = vmatprep.subr.bf16.mxu0 0
    %729 = vmatpush1.bf16.xpose.msra.mxu0 0
    %730 = vmatprep.subr.bf16.mxu0 0
    %731 = vmatpush1.bf16.xpose.msra.mxu0 0
    %732 = vmatprep.subr.bf16.mxu0 0
    %733 = vmatpush1.bf16.xpose.msra.mxu0 0
    %734 = vmatprep.subr.bf16.mxu0 0
    %735 = vmatpush1.bf16.xpose.msra.mxu0 0
    %736 = vmatprep.subr.bf16.mxu0 0
    %737 = vmatpush1.bf16.xpose.msra.mxu0 0
    %738 = vmatprep.subr.bf16.mxu0 0
    %739 = vmatpush1.bf16.xpose.msra.mxu0 0
    %740 = vmatprep.subr.bf16.mxu0 0
    %741 = vmatpush1.bf16.xpose.msra.mxu0 0
    %742 = vmatprep.subr.bf16.mxu0 0
    %743 = vmatpush1.bf16.xpose.msra.mxu0 0
    %744 = vmatprep.subr.bf16.mxu0 0
    %745 = vmatpush1.bf16.xpose.msra.mxu0 0
    %746 = vmatprep.subr.bf16.mxu0 0
    %747 = vmatpush1.bf16.xpose.msra.mxu0 0
    %748 = vmatprep.mubr.bf16.mxu0 0
    %749 = vmatmul.mubr.bf16.gmra.mrb[0].mxu0 %v711
    %v750 = vpop.f32.mrb[0].mxu0
    %v751 = vadd.f32 0.0, %v750
    %v752 = vpop.f32.mrb[0].mxu0
    %v753 = vpop.f32.mrb[0].mxu0
    %v754 = vpop.f32.mrb[0].mxu0
    %755 = vdwg.mxu0
    %v756 = vsel %vm217, %v701, -inf
    %757 = vmax.xlane.f32.xlu0 %v756
    %v758 = vpop.xlane.xlu0 %757
    %v759 = vsel %vm217, %v751, -inf
    %760 = vmax.xlane.f32.xlu0 %v759
    %v761 = vpop.xlane.xlu0 %760
    %v762 = vsub.f32 %v701, %v758
    %v763 = vsub.f32 %v751, %v761
    %v764 = vmul.f32 %v762, 1.442695
    %v765 = vpow.pop %v764
    %v766 = vmul.f32 %v763, 1.442695
    %v767 = vpow.pop %v766
    %v768 = vsel %vm217, %v765, 0.0
    %769 = vadd.xlane.f32.xlu0 %v768
    %v770 = vpop.xlane.xlu0 %769
    %v771 = vsel %vm217, %v767, 0.0
    %772 = vadd.xlane.f32.xlu0 %v771
    %v773 = vpop.xlane.xlu0 %772
    %v774 = vrcp.pop %v770
    %v775 = vrcp.pop %v773
    %v776 = vmul.f32 %v765, %v774
    %v777 = vmul.f32 %v767, %v775
    %v778 = vpack.c.bf16 %v776, %v776
    %v779 = vpack.c.bf16 %v777, %v777
    %780 = vrot.lane.b32.xlu0 %v212, 48
    %v781 = vpop.permute.xlu0 %780
    %v783 = vsel %vm217, %v778, 0
    %v786 = vsel %vm342, %v781, 0
    %788 = vmatprep.subr.bf16.mxu0 0
    %789 = vmatpush1.bf16.msra.mxu0 %v786
    %790 = vmatprep.subr.bf16.mxu0 0
    %791 = vmatpush1.bf16.msra.mxu0 0
    %792 = vmatprep.subr.bf16.mxu0 0
    %793 = vmatpush1.bf16.msra.mxu0 0
    %794 = vmatprep.subr.bf16.mxu0 0
    %795 = vmatpush1.bf16.msra.mxu0 0
    %796 = vmatprep.subr.bf16.mxu0 0
    %797 = vmatpush1.bf16.msra.mxu0 0
    %798 = vmatprep.subr.bf16.mxu0 0
    %799 = vmatpush1.bf16.msra.mxu0 0
    %800 = vmatprep.subr.bf16.mxu0 0
    %801 = vmatpush1.bf16.msra.mxu0 0
    %802 = vmatprep.subr.bf16.mxu0 0
    %803 = vmatpush1.bf16.msra.mxu0 0
    %804 = vmatprep.subr.bf16.mxu0 0
    %805 = vmatpush1.bf16.msra.mxu0 0
    %806 = vmatprep.subr.bf16.mxu0 0
    %807 = vmatpush1.bf16.msra.mxu0 0
    %808 = vmatprep.subr.bf16.mxu0 0
    %809 = vmatpush1.bf16.msra.mxu0 0
    %810 = vmatprep.subr.bf16.mxu0 0
    %811 = vmatpush1.bf16.msra.mxu0 0
    %812 = vmatprep.subr.bf16.mxu0 0
    %813 = vmatpush1.bf16.msra.mxu0 0
    %814 = vmatprep.subr.bf16.mxu0 0
    %815 = vmatpush1.bf16.msra.mxu0 0
    %816 = vmatprep.subr.bf16.mxu0 0
    %817 = vmatpush1.bf16.msra.mxu0 0
    %818 = vmatprep.subr.bf16.mxu0 0
    %819 = vmatpush1.bf16.msra.mxu0 0
    %820 = vmatprep.mubr.bf16.mxu0 0
    %821 = vmatmul.mubr.bf16.gmra.mrb[0].mxu0 %v783
    %v822 = vpop.f32.mrb[0].mxu0
    %v823 = vadd.f32 0.0, %v822
    %v824 = vpop.f32.mrb[0].mxu0
    %v825 = vpop.f32.mrb[0].mxu0
    %v826 = vpop.f32.mrb[0].mxu0
    %827 = vdwg.mxu0
    %828 = vrot.lane.b32.xlu0 %v213, 48
    %v829 = vpop.permute.xlu0 %828
    %v831 = vsel %vm217, %v779, 0
    %v834 = vsel %vm342, %v829, 0
    %836 = vmatprep.subr.bf16.mxu0 0
    %837 = vmatpush1.bf16.msra.mxu0 %v834
    %838 = vmatprep.subr.bf16.mxu0 0
    %839 = vmatpush1.bf16.msra.mxu0 0
    %840 = vmatprep.subr.bf16.mxu0 0
    %841 = vmatpush1.bf16.msra.mxu0 0
    %842 = vmatprep.subr.bf16.mxu0 0
    %843 = vmatpush1.bf16.msra.mxu0 0
    %844 = vmatprep.subr.bf16.mxu0 0
    %845 = vmatpush1.bf16.msra.mxu0 0
    %846 = vmatprep.subr.bf16.mxu0 0
    %847 = vmatpush1.bf16.msra.mxu0 0
    %848 = vmatprep.subr.bf16.mxu0 0
    %849 = vmatpush1.bf16.msra.mxu0 0
    %850 = vmatprep.subr.bf16.mxu0 0
    %851 = vmatpush1.bf16.msra.mxu0 0
    %852 = vmatprep.subr.bf16.mxu0 0
    %853 = vmatpush1.bf16.msra.mxu0 0
    %854 = vmatprep.subr.bf16.mxu0 0
    %855 = vmatpush1.bf16.msra.mxu0 0
    %856 = vmatprep.subr.bf16.mxu0 0
    %857 = vmatpush1.bf16.msra.mxu0 0
    %858 = vmatprep.subr.bf16.mxu0 0
    %859 = vmatpush1.bf16.msra.mxu0 0
    %860 = vmatprep.subr.bf16.mxu0 0
    %861 = vmatpush1.bf16.msra.mxu0 0
    %862 = vmatprep.subr.bf16.mxu0 0
    %863 = vmatpush1.bf16.msra.mxu0 0
    %864 = vmatprep.subr.bf16.mxu0 0
    %865 = vmatpush1.bf16.msra.mxu0 0
    %866 = vmatprep.subr.bf16.mxu0 0
    %867 = vmatpush1.bf16.msra.mxu0 0
    %868 = vmatprep.mubr.bf16.mxu0 0
    %869 = vmatmul.mubr.bf16.gmra.mrb[0].mxu0 %v831
    %v870 = vpop.f32.mrb[0].mxu0
    %v871 = vadd.f32 0.0, %v870
    %v872 = vpop.f32.mrb[0].mxu0
    %v873 = vpop.f32.mrb[0].mxu0
    %v874 = vpop.f32.mrb[0].mxu0
    %875 = vdwg.mxu0
    %876 = vrot.lane.b32.xlu0 %v210, 104
    %v877 = vpop.permute.xlu0 %876
    %878 = vrot.lane.b32.xlu0 %v212, 72
    %v879 = vpop.permute.xlu0 %878
    %v881 = vsel %vm217, %v877, 0
    %v884 = vsel %vm217, %v879, 0
    %886 = vmatprep.subr.bf16.mxu0 0
    %887 = vmatpush1.bf16.xpose.msra.mxu0 %v884
    %888 = vmatprep.subr.bf16.mxu0 0
    %889 = vmatpush1.bf16.xpose.msra.mxu0 0
    %890 = vmatprep.subr.bf16.mxu0 0
    %891 = vmatpush1.bf16.xpose.msra.mxu0 0
    %892 = vmatprep.subr.bf16.mxu0 0
    %893 = vmatpush1.bf16.xpose.msra.mxu0 0
    %894 = vmatprep.subr.bf16.mxu0 0
    %895 = vmatpush1.bf16.xpose.msra.mxu0 0
    %896 = vmatprep.subr.bf16.mxu0 0
    %897 = vmatpush1.bf16.xpose.msra.mxu0 0
    %898 = vmatprep.subr.bf16.mxu0 0
    %899 = vmatpush1.bf16.xpose.msra.mxu0 0
    %900 = vmatprep.subr.bf16.mxu0 0
    %901 = vmatpush1.bf16.xpose.msra.mxu0 0
    %902 = vmatprep.subr.bf16.mxu0 0
    %903 = vmatpush1.bf16.xpose.msra.mxu0 0
    %904 = vmatprep.subr.bf16.mxu0 0
    %905 = vmatpush1.bf16.xpose.msra.mxu0 0
    %906 = vmatprep.subr.bf16.mxu0 0
    %907 = vmatpush1.bf16.xpose.msra.mxu0 0
    %908 = vmatprep.subr.bf16.mxu0 0
    %909 = vmatpush1.bf16.xpose.msra.mxu0 0
    %910 = vmatprep.subr.bf16.mxu0 0
    %911 = vmatpush1.bf16.xpose.msra.mxu0 0
    %912 = vmatprep.subr.bf16.mxu0 0
    %913 = vmatpush1.bf16.xpose.msra.mxu0 0
    %914 = vmatprep.subr.bf16.mxu0 0
    %915 = vmatpush1.bf16.xpose.msra.mxu0 0
    %916 = vmatprep.subr.bf16.mxu0 0
    %917 = vmatpush1.bf16.xpose.msra.mxu0 0
    %918 = vmatprep.mubr.bf16.mxu0 0
    %919 = vmatmul.mubr.bf16.gmra.mrb[0].mxu0 %v881
    %v920 = vpop.f32.mrb[0].mxu0
    %v921 = vadd.f32 0.0, %v920
    %v922 = vpop.f32.mrb[0].mxu0
    %v923 = vpop.f32.mrb[0].mxu0
    %v924 = vpop.f32.mrb[0].mxu0
    %925 = vdwg.mxu0
    %926 = vrot.lane.b32.xlu0 %v211, 104
    %v927 = vpop.permute.xlu0 %926
    %928 = vrot.lane.b32.xlu0 %v213, 72
    %v929 = vpop.permute.xlu0 %928
    %v931 = vsel %vm217, %v927, 0
    %v934 = vsel %vm217, %v929, 0
    %936 = vmatprep.subr.bf16.mxu0 0
    %937 = vmatpush1.bf16.xpose.msra.mxu0 %v934
    %938 = vmatprep.subr.bf16.mxu0 0
    %939 = vmatpush1.bf16.xpose.msra.mxu0 0
    %940 = vmatprep.subr.bf16.mxu0 0
    %941 = vmatpush1.bf16.xpose.msra.mxu0 0
    %942 = vmatprep.subr.bf16.mxu0 0
    %943 = vmatpush1.bf16.xpose.msra.mxu0 0
    %944 = vmatprep.subr.bf16.mxu0 0
    %945 = vmatpush1.bf16.xpose.msra.mxu0 0
    %946 = vmatprep.subr.bf16.mxu0 0
    %947 = vmatpush1.bf16.xpose.msra.mxu0 0
    %948 = vmatprep.subr.bf16.mxu0 0
    %949 = vmatpush1.bf16.xpose.msra.mxu0 0
    %950 = vmatprep.subr.bf16.mxu0 0
    %951 = vmatpush1.bf16.xpose.msra.mxu0 0
    %952 = vmatprep.subr.bf16.mxu0 0
    %953 = vmatpush1.bf16.xpose.msra.mxu0 0
    %954 = vmatprep.subr.bf16.mxu0 0
    %955 = vmatpush1.bf16.xpose.msra.mxu0 0
    %956 = vmatprep.subr.bf16.mxu0 0
    %957 = vmatpush1.bf16.xpose.msra.mxu0 0
    %958 = vmatprep.subr.bf16.mxu0 0
    %959 = vmatpush1.bf16.xpose.msra.mxu0 0
    %960 = vmatprep.subr.bf16.mxu0 0
    %961 = vmatpush1.bf16.xpose.msra.mxu0 0
    %962 = vmatprep.subr.bf16.mxu0 0
    %963 = vmatpush1.bf16.xpose.msra.mxu0 0
    %964 = vmatprep.subr.bf16.mxu0 0
    %965 = vmatpush1.bf16.xpose.msra.mxu0 0
    %966 = vmatprep.subr.bf16.mxu0 0
    %967 = vmatpush1.bf16.xpose.msra.mxu0 0
    %968 = vmatprep.mubr.bf16.mxu0 0
    %969 = vmatmul.mubr.bf16.gmra.mrb[0].mxu0 %v931
    %v970 = vpop.f32.mrb[0].mxu0
    %v971 = vadd.f32 0.0, %v970
    %v972 = vpop.f32.mrb[0].mxu0
    %v973 = vpop.f32.mrb[0].mxu0
    %v974 = vpop.f32.mrb[0].mxu0
    %975 = vdwg.mxu0
    %v976 = vsel %vm217, %v921, -inf
    %977 = vmax.xlane.f32.xlu0 %v976
    %v978 = vpop.xlane.xlu0 %977
    %v979 = vsel %vm217, %v971, -inf
    %980 = vmax.xlane.f32.xlu0 %v979
    %v981 = vpop.xlane.xlu0 %980
    %v982 = vsub.f32 %v921, %v978
    %v983 = vsub.f32 %v971, %v981
    %v984 = vmul.f32 %v982, 1.442695
    %v985 = vpow.pop %v984
    %v986 = vmul.f32 %v983, 1.442695
    %v987 = vpow.pop %v986
    %v988 = vsel %vm217, %v985, 0.0
    %989 = vadd.xlane.f32.xlu0 %v988
    %v990 = vpop.xlane.xlu0 %989
    %v991 = vsel %vm217, %v987, 0.0
    %992 = vadd.xlane.f32.xlu0 %v991
    %v993 = vpop.xlane.xlu0 %992
    %v994 = vrcp.pop %v990
    %v995 = vrcp.pop %v993
    %v996 = vmul.f32 %v985, %v994
    %v997 = vmul.f32 %v987, %v995
    %v998 = vpack.c.bf16 %v996, %v996
    %v999 = vpack.c.bf16 %v997, %v997
    %1000 = vrot.lane.b32.xlu0 %v212, 40
    %v1001 = vpop.permute.xlu0 %1000
    %v1003 = vsel %vm217, %v998, 0
    %v1006 = vsel %vm342, %v1001, 0
    %1008 = vmatprep.subr.bf16.mxu0 0
    %1009 = vmatpush1.bf16.msra.mxu0 %v1006
    %1010 = vmatprep.subr.bf16.mxu0 0
    %1011 = vmatpush1.bf16.msra.mxu0 0
    %1012 = vmatprep.subr.bf16.mxu0 0
    %1013 = vmatpush1.bf16.msra.mxu0 0
    %1014 = vmatprep.subr.bf16.mxu0 0
    %1015 = vmatpush1.bf16.msra.mxu0 0
    %1016 = vmatprep.subr.bf16.mxu0 0
    %1017 = vmatpush1.bf16.msra.mxu0 0
    %1018 = vmatprep.subr.bf16.mxu0 0
    %1019 = vmatpush1.bf16.msra.mxu0 0
    %1020 = vmatprep.subr.bf16.mxu0 0
    %1021 = vmatpush1.bf16.msra.mxu0 0
    %1022 = vmatprep.subr.bf16.mxu0 0
    %1023 = vmatpush1.bf16.msra.mxu0 0
    %1024 = vmatprep.subr.bf16.mxu0 0
    %1025 = vmatpush1.bf16.msra.mxu0 0
    %1026 = vmatprep.subr.bf16.mxu0 0
    %1027 = vmatpush1.bf16.msra.mxu0 0
    %1028 = vmatprep.subr.bf16.mxu0 0
    %1029 = vmatpush1.bf16.msra.mxu0 0
    %1030 = vmatprep.subr.bf16.mxu0 0
    %1031 = vmatpush1.bf16.msra.mxu0 0
    %1032 = vmatprep.subr.bf16.mxu0 0
    %1033 = vmatpush1.bf16.msra.mxu0 0
    %1034 = vmatprep.subr.bf16.mxu0 0
    %1035 = vmatpush1.bf16.msra.mxu0 0
    %1036 = vmatprep.subr.bf16.mxu0 0
    %1037 = vmatpush1.bf16.msra.mxu0 0
    %1038 = vmatprep.subr.bf16.mxu0 0
    %1039 = vmatpush1.bf16.msra.mxu0 0
    %1040 = vmatprep.mubr.bf16.mxu0 0
    %1041 = vmatmul.mubr.bf16.gmra.mrb[0].mxu0 %v1003
    %v1042 = vpop.f32.mrb[0].mxu0
    %v1043 = vadd.f32 0.0, %v1042
    %v1044 = vpop.f32.mrb[0].mxu0
    %v1045 = vpop.f32.mrb[0].mxu0
    %v1046 = vpop.f32.mrb[0].mxu0
    %1047 = vdwg.mxu0
    %1048 = vrot.lane.b32.xlu0 %v213, 40
    %v1049 = vpop.permute.xlu0 %1048
    %v1051 = vsel %vm217, %v999, 0
    %v1054 = vsel %vm342, %v1049, 0
    %1056 = vmatprep.subr.bf16.mxu0 0
    %1057 = vmatpush1.bf16.msra.mxu0 %v1054
    %1058 = vmatprep.subr.bf16.mxu0 0
    %1059 = vmatpush1.bf16.msra.mxu0 0
    %1060 = vmatprep.subr.bf16.mxu0 0
    %1061 = vmatpush1.bf16.msra.mxu0 0
    %1062 = vmatprep.subr.bf16.mxu0 0
    %1063 = vmatpush1.bf16.msra.mxu0 0
    %1064 = vmatprep.subr.bf16.mxu0 0
    %1065 = vmatpush1.bf16.msra.mxu0 0
    %1066 = vmatprep.subr.bf16.mxu0 0
    %1067 = vmatpush1.bf16.msra.mxu0 0
    %1068 = vmatprep.subr.bf16.mxu0 0
    %1069 = vmatpush1.bf16.msra.mxu0 0
    %1070 = vmatprep.subr.bf16.mxu0 0
    %1071 = vmatpush1.bf16.msra.mxu0 0
    %1072 = vmatprep.subr.bf16.mxu0 0
    %1073 = vmatpush1.bf16.msra.mxu0 0
    %1074 = vmatprep.subr.bf16.mxu0 0
    %1075 = vmatpush1.bf16.msra.mxu0 0
    %1076 = vmatprep.subr.bf16.mxu0 0
    %1077 = vmatpush1.bf16.msra.mxu0 0
    %1078 = vmatprep.subr.bf16.mxu0 0
    %1079 = vmatpush1.bf16.msra.mxu0 0
    %1080 = vmatprep.subr.bf16.mxu0 0
    %1081 = vmatpush1.bf16.msra.mxu0 0
    %1082 = vmatprep.subr.bf16.mxu0 0
    %1083 = vmatpush1.bf16.msra.mxu0 0
    %1084 = vmatprep.subr.bf16.mxu0 0
    %1085 = vmatpush1.bf16.msra.mxu0 0
    %1086 = vmatprep.subr.bf16.mxu0 0
    %1087 = vmatpush1.bf16.msra.mxu0 0
    %1088 = vmatprep.mubr.bf16.mxu0 0
    %1089 = vmatmul.mubr.bf16.gmra.mrb[0].mxu0 %v1051
    %v1090 = vpop.f32.mrb[0].mxu0
    %v1091 = vadd.f32 0.0, %v1090
    %v1092 = vpop.f32.mrb[0].mxu0
    %v1093 = vpop.f32.mrb[0].mxu0
    %v1094 = vpop.f32.mrb[0].mxu0
    %1095 = vdwg.mxu0
    %1098 = vrot.lane.b32.xlu0 %v603, 8
    %v1099 = vpop.permute.xlu0 %1098
    %1100 = vrot.lane.b32.xlu0 %v651, 8
    %v1101 = vpop.permute.xlu0 %1100
    %1106 = vrot.lane.b32.xlu0 %v823, 16
    %v1107 = vpop.permute.xlu0 %1106
    %1108 = vrot.lane.b32.xlu0 %v871, 16
    %v1109 = vpop.permute.xlu0 %1108
    %1114 = vrot.lane.b32.xlu0 %v1043, 24
    %v1115 = vpop.permute.xlu0 %1114
    %1116 = vrot.lane.b32.xlu0 %v1091, 24
    %v1117 = vpop.permute.xlu0 %1116
    %v1120 = vsel %vm217, %v381, %v1099
    %v1121 = vsel %vm217, %v429, %v1101
    %vm1122 = vcmask 130048
    %v1123 = vsel %vm1122, %v1120, %v1107
    %v1124 = vsel %vm1122, %v1121, %v1109
    %vm1125 = vcmask 195584
    %v1126 = vsel %vm1125, %v1123, %v1115
    %v1127 = vsel %vm1125, %v1124, %v1117
    %v1128 = vpack.c.bf16 %v1127, %v1126
    %v1130 = vlaneseq
    %v1131 = vshrl.u32 %v1130, 7
    %v1132 = vsub.s32 0, %v1131
    %v1133 = vrot.slane %v125, %v1132
    %v1139 = vunpack.c.l.b16 %v121
    %v1140 = vunpack.c.l.b16 %v122
    %v1141 = vunpack.c.l.b16 %v123
    %v1142 = vunpack.c.l.b16 %v124
    %v1143 = vpack.c.b16 %v1140, %v1139
    %v1144 = vpack.c.b16 %v1142, %v1141
    %v1148 = vsel %vm163, %v1128, 0
    %1150 = vmatprep.subr.bf16.mxu0 0
    %1151 = vmatpush1.bf16.msra.mxu0 %v1143
    %1152 = vmatprep.subr.bf16.mxu0 0
    %1153 = vmatpush1.bf16.msra.mxu0 %v1144
    %1154 = vmatprep.subr.bf16.mxu0 0
    %1155 = vmatpush1.bf16.msra.mxu0 0
    %1156 = vmatprep.subr.bf16.mxu0 0
    %1157 = vmatpush1.bf16.msra.mxu0 0
    %1158 = vmatprep.subr.bf16.mxu0 0
    %1159 = vmatpush1.bf16.msra.mxu0 0
    %1160 = vmatprep.subr.bf16.mxu0 0
    %1161 = vmatpush1.bf16.msra.mxu0 0
    %1162 = vmatprep.subr.bf16.mxu0 0
    %1163 = vmatpush1.bf16.msra.mxu0 0
    %1164 = vmatprep.subr.bf16.mxu0 0
    %1165 = vmatpush1.bf16.msra.mxu0 0
    %1166 = vmatprep.subr.bf16.mxu0 0
    %1167 = vmatpush1.bf16.msra.mxu0 0
    %1168 = vmatprep.subr.bf16.mxu0 0
    %1169 = vmatpush1.bf16.msra.mxu0 0
    %1170 = vmatprep.subr.bf16.mxu0 0
    %1171 = vmatpush1.bf16.msra.mxu0 0
    %1172 = vmatprep.subr.bf16.mxu0 0
    %1173 = vmatpush1.bf16.msra.mxu0 0
    %1174 = vmatprep.subr.bf16.mxu0 0
    %1175 = vmatpush1.bf16.msra.mxu0 0
    %1176 = vmatprep.subr.bf16.mxu0 0
    %1177 = vmatpush1.bf16.msra.mxu0 0
    %1178 = vmatprep.subr.bf16.mxu0 0
    %1179 = vmatpush1.bf16.msra.mxu0 0
    %1180 = vmatprep.subr.bf16.mxu0 0
    %1181 = vmatpush1.bf16.msra.mxu0 0
    %1182 = vmatprep.mubr.bf16.mxu0 0
    %1183 = vmatmul.mubr.bf16.gmra.mrb[0].mxu0 %v1148
    %v1184 = vpop.f32.mrb[0].mxu0
    %v1185 = vadd.f32 %v1133, %v1184
    %v1186 = vpop.f32.mrb[0].mxu0
    %v1187 = vpop.f32.mrb[0].mxu0
    %v1188 = vadd.f32 %v1133, %v1187
    %v1189 = vpop.f32.mrb[0].mxu0
    %1190 = vdwg.mxu0
    %v1191 = vadd.f32 %v114, %v1185
    %v1192 = vadd.f32 %v115, %v1188
    %v1193 = vsel %vm163, %v1191, 0.0
    %1194 = vadd.xlane.f32.xlu0 %v1193
    %v1195 = vpop.xlane.xlu0 %1194
    %v1196 = vsel %vm163, %v1192, 0.0
    %1197 = vadd.xlane.f32.xlu0 %v1196
    %v1198 = vpop.xlane.xlu0 %1197
    %v1199 = vrcp.pop 32.0
    %v1200 = vmul.f32 %v1195, %v1199
    %v1201 = vmul.f32 %v1198, %v1199
    %v1202 = vsub.f32 %v1191, %v1200
    %v1203 = vsub.f32 %v1192, %v1201
    %v1204 = vmul.f32 %v1202, %v1202
    %v1205 = vmul.f32 %v1203, %v1203
    %v1206 = vsel %vm163, %v1204, 0.0
    %1207 = vadd.xlane.f32.xlu0 %v1206
    %v1208 = vpop.xlane.xlu0 %1207
    %v1209 = vsel %vm163, %v1205, 0.0
    %1210 = vadd.xlane.f32.xlu0 %v1209
    %v1211 = vpop.xlane.xlu0 %1210
    %v1212 = vmul.f32 %v1208, %v1199
    %v1213 = vmul.f32 %v1211, %v1199
    %v1214 = vadd.f32 %v1212, 1e-05
    %v1215 = vadd.f32 %v1213, 1e-05
    %v1216 = vrsqrt.pop %v1214
    %v1217 = vrsqrt.pop %v1215
    %v1218 = vmul.f32 %v1202, %v1216
    %v1219 = vmul.f32 %v1203, %v1217
    %v1221 = vlaneseq
    %v1222 = vshrl.u32 %v1221, 7
    %v1223 = vsub.s32 0, %v1222
    %v1224 = vrot.slane %v126, %v1223
    %v1226 = vmul.f32 %v1218, %v1224
    %v1227 = vmul.f32 %v1219, %v1224
    %v1229 = vlaneseq
    %v1230 = vshrl.u32 %v1229, 7
    %v1231 = vsub.s32 0, %v1230
    %v1232 = vrot.slane %v127, %v1231
    %v1234 = vadd.f32 %v1226, %v1232
    %v1235 = vadd.f32 %v1227, %v1232
    %v1236 = vpack.c.bf16 %v1235, %v1234
    %v1238 = vlaneseq
    %v1239 = vshrl.u32 %v1238, 7
    %v1240 = vsub.s32 0, %v1239
    %v1241 = vrot.slane %v132, %v1240
    %v1247 = vunpack.c.l.b16 %v128
    %v1248 = vunpack.c.l.b16 %v129
    %v1249 = vunpack.c.l.b16 %v130
    %v1250 = vunpack.c.l.b16 %v131
    %v1251 = vpack.c.b16 %v1248, %v1247
    %v1252 = vpack.c.b16 %v1250, %v1249
    %v1256 = vsel %vm163, %v1236, 0
    %1258 = vmatprep.subr.bf16.mxu0 0
    %1259 = vmatpush1.bf16.msra.mxu0 %v1251
    %1260 = vmatprep.subr.bf16.mxu0 0
    %1261 = vmatpush1.bf16.msra.mxu0 %v1252
    %1262 = vmatprep.subr.bf16.mxu0 0
    %1263 = vmatpush1.bf16.msra.mxu0 0
    %1264 = vmatprep.subr.bf16.mxu0 0
    %1265 = vmatpush1.bf16.msra.mxu0 0
    %1266 = vmatprep.subr.bf16.mxu0 0
    %1267 = vmatpush1.bf16.msra.mxu0 0
    %1268 = vmatprep.subr.bf16.mxu0 0
    %1269 = vmatpush1.bf16.msra.mxu0 0
    %1270 = vmatprep.subr.bf16.mxu0 0
    %1271 = vmatpush1.bf16.msra.mxu0 0
    %1272 = vmatprep.subr.bf16.mxu0 0
    %1273 = vmatpush1.bf16.msra.mxu0 0
    %1274 = vmatprep.subr.bf16.mxu0 0
    %1275 = vmatpush1.bf16.msra.mxu0 0
    %1276 = vmatprep.subr.bf16.mxu0 0
    %1277 = vmatpush1.bf16.msra.mxu0 0
    %1278 = vmatprep.subr.bf16.mxu0 0
    %1279 = vmatpush1.bf16.msra.mxu0 0
    %1280 = vmatprep.subr.bf16.mxu0 0
    %1281 = vmatpush1.bf16.msra.mxu0 0
    %1282 = vmatprep.subr.bf16.mxu0 0
    %1283 = vmatpush1.bf16.msra.mxu0 0
    %1284 = vmatprep.subr.bf16.mxu0 0
    %1285 = vmatpush1.bf16.msra.mxu0 0
    %1286 = vmatprep.subr.bf16.mxu0 0
    %1287 = vmatpush1.bf16.msra.mxu0 0
    %1288 = vmatprep.subr.bf16.mxu0 0
    %1289 = vmatpush1.bf16.msra.mxu0 0
    %1290 = vmatprep.mubr.bf16.mxu0 0
    %1291 = vmatmul.mubr.bf16.gmra.mrb[0].mxu0 %v1256
    %v1292 = vpop.f32.mrb[0].mxu0
    %v1293 = vadd.f32 %v1241, %v1292
    %v1294 = vpop.f32.mrb[0].mxu0
    %v1295 = vpop.f32.mrb[0].mxu0
    %v1296 = vadd.f32 %v1241, %v1295
    %v1297 = vpop.f32.mrb[0].mxu0
    %1298 = vdwg.mxu0
    %v1299 = vmul.f32 %v1293, 0.5
    %v1300 = vmul.f32 %v1296, 0.5
    %v1301 = vmul.f32 %v1293, 0.044715
    %v1302 = vmul.f32 %v1296, 0.044715
    %v1303 = vmul.f32 %v1301, %v1293
    %v1304 = vmul.f32 %v1302, %v1296
    %v1305 = vmul.f32 %v1303, %v1293
    %v1306 = vmul.f32 %v1304, %v1296
    %v1307 = vadd.f32 %v1293, %v1305
    %v1308 = vadd.f32 %v1296, %v1306
    %v1309 = vmul.f32 %v1307, 0.7978846
    %v1310 = vmul.f32 %v1308, 0.7978846
    %v1311 = vtanh.pop %v1309
    %v1312 = vtanh.pop %v1310
    %v1313 = vadd.f32 %v1311, 1.0
    %v1314 = vadd.f32 %v1312, 1.0
    %v1315 = vmul.f32 %v1299, %v1313
    %v1316 = vmul.f32 %v1300, %v1314
    %v1317 = vpack.c.bf16 %v1316, %v1315
    %v1319 = vlaneseq
    %v1320 = vshrl.u32 %v1319, 7
    %v1321 = vsub.s32 0, %v1320
    %v1322 = vrot.slane %v141, %v1321
    %v1332 = vunpack.c.l.b16 %v133
    %v1333 = vunpack.c.l.b16 %v134
    %v1334 = vunpack.c.l.b16 %v135
    %v1335 = vunpack.c.l.b16 %v136
    %v1336 = vunpack.c.l.b16 %v137
    %v1337 = vunpack.c.l.b16 %v138
    %v1338 = vunpack.c.l.b16 %v139
    %v1339 = vunpack.c.l.b16 %v140
    %v1340 = vpack.c.b16 %v1333, %v1332
    %v1341 = vpack.c.b16 %v1335, %v1334
    %v1342 = vpack.c.b16 %v1337, %v1336
    %v1343 = vpack.c.b16 %v1339, %v1338
    %vm1348 = vcmask 523264
    %v1350 = vsel %vm1348, %v1317, 0
    %1352 = vmatprep.subr.bf16.mxu0 0
    %1353 = vmatpush1.bf16.msra.mxu0 %v1340
    %1354 = vmatprep.subr.bf16.mxu0 0
    %1355 = vmatpush1.bf16.msra.mxu0 %v1341
    %1356 = vmatprep.subr.bf16.mxu0 0
    %1357 = vmatpush1.bf16.msra.mxu0 %v1342
    %1358 = vmatprep.subr.bf16.mxu0 0
    %1359 = vmatpush1.bf16.msra.mxu0 %v1343
    %1360 = vmatprep.subr.bf16.mxu0 0
    %1361 = vmatpush1.bf16.msra.mxu0 0
    %1362 = vmatprep.subr.bf16.mxu0 0
    %1363 = vmatpush1.bf16.msra.mxu0 0
    %1364 = vmatprep.subr.bf16.mxu0 0
    %1365 = vmatpush1.bf16.msra.mxu0 0
    %1366 = vmatprep.subr.bf16.mxu0 0
    %1367 = vmatpush1.bf16.msra.mxu0 0
    %1368 = vmatprep.subr.bf16.mxu0 0
    %1369 = vmatpush1.bf16.msra.mxu0 0
    %1370 = vmatprep.subr.bf16.mxu0 0
    %1371 = vmatpush1.bf16.msra.mxu0 0
    %1372 = vmatprep.subr.bf16.mxu0 0
    %1373 = vmatpush1.bf16.msra.mxu0 0
    %1374 = vmatprep.subr.bf16.mxu0 0
    %1375 = vmatpush1.bf16.msra.mxu0 0
    %1376 = vmatprep.subr.bf16.mxu0 0
    %1377 = vmatpush1.bf16.msra.mxu0 0
    %1378 = vmatprep.subr.bf16.mxu0 0
    %1379 = vmatpush1.bf16.msra.mxu0 0
    %1380 = vmatprep.subr.bf16.mxu0 0
    %1381 = vmatpush1.bf16.msra.mxu0 0
    %1382 = vmatprep.subr.bf16.mxu0 0
    %1383 = vmatpush1.bf16.msra.mxu0 0
    %1384 = vmatprep.mubr.bf16.mxu0 0
    %1385 = vmatmul.mubr.bf16.gmra.mrb[0].mxu0 %v1350
    %v1386 = vpop.f32.mrb[0].mxu0
    %v1387 = vadd.f32 %v1322, %v1386
    %v1388 = vpop.f32.mrb[0].mxu0
    %v1389 = vpop.f32.mrb[0].mxu0
    %v1390 = vadd.f32 %v1322, %v1389
    %v1391 = vpop.f32.mrb[0].mxu0
    %1392 = vdwg.mxu0
    %v1393 = vadd.f32 %v1234, %v1387
    %v1394 = vadd.f32 %v1235, %v1390
    %v1395 = vsel %vm163, %v1393, 0.0
    %1396 = vadd.xlane.f32.xlu0 %v1395
    %v1397 = vpop.xlane.xlu0 %1396
    %v1398 = vsel %vm163, %v1394, 0.0
    %1399 = vadd.xlane.f32.xlu0 %v1398
    %v1400 = vpop.xlane.xlu0 %1399
    %v1401 = vmul.f32 %v1397, %v1199
    %v1402 = vmul.f32 %v1400, %v1199
    %v1403 = vsub.f32 %v1393, %v1401
    %v1404 = vsub.f32 %v1394, %v1402
    %v1405 = vmul.f32 %v1403, %v1403
    %v1406 = vmul.f32 %v1404, %v1404
    %v1407 = vsel %vm163, %v1405, 0.0
    %1408 = vadd.xlane.f32.xlu0 %v1407
    %v1409 = vpop.xlane.xlu0 %1408
    %v1410 = vsel %vm163, %v1406, 0.0
    %1411 = vadd.xlane.f32.xlu0 %v1410
    %v1412 = vpop.xlane.xlu0 %1411
    %v1413 = vmul.f32 %v1409, %v1199
    %v1414 = vmul.f32 %v1412, %v1199
    %v1415 = vadd.f32 %v1413, 1e-05
    %v1416 = vadd.f32 %v1414, 1e-05
    %v1417 = vrsqrt.pop %v1415
    %v1418 = vrsqrt.pop %v1416
    %v1419 = vmul.f32 %v1403, %v1417
    %v1420 = vmul.f32 %v1404, %v1418
    %v1422 = vlaneseq
    %v1423 = vshrl.u32 %v1422, 7
    %v1424 = vsub.s32 0, %v1423
    %v1425 = vrot.slane %v142, %v1424
    %v1427 = vmul.f32 %v1419, %v1425
    %v1428 = vmul.f32 %v1420, %v1425
    %v1430 = vlaneseq
    %v1431 = vshrl.u32 %v1430, 7
    %v1432 = vsub.s32 0, %v1431
    %v1433 = vrot.slane %v143, %v1432
    %v1435 = vadd.f32 %v1427, %v1433
    %v1436 = vadd.f32 %v1428, %v1433
    %s1437 = scalar_lea.vmem %s1, 16
    %v1438 = vld [vmem:[%s1437] sm:$0xf]
    %v1439 = vld [vmem:[%s1437 + $0x4] sm:$0xf]
    %v1440 = vld [vmem:[%s1437 + $0x8] sm:$0xf]
    %v1441 = vld [vmem:[%s1437 + $0xc] sm:$0xf]
    %s1442 = scalar_lea.vmem %s2, 1
    %v1443 = vld [vmem:[%s1442] sm:$0x1]
    %s1444 = scalar_lea.vmem %s3, 16
    %v1445 = vld [vmem:[%s1444] sm:$0xf]
    %v1446 = vld [vmem:[%s1444 + $0x4] sm:$0xf]
    %v1447 = vld [vmem:[%s1444 + $0x8] sm:$0xf]
    %v1448 = vld [vmem:[%s1444 + $0xc] sm:$0xf]
    %s1449 = scalar_lea.vmem [#allocation5], 1
    %v1450 = vld [vmem:[%s1449] sm:$0x1]
    %s1451 = scalar_lea.vmem [#allocation7], 1
    %v1452 = vld [vmem:[%s1451] sm:$0x1]
    %s1453 = scalar_lea.vmem [#allocation8], 1
    %v1454 = vld [vmem:[%s1453] sm:$0x1]
    %s1455 = scalar_lea.vmem %s7, 16
    %v1456 = vld [vmem:[%s1455] sm:$0xf]
    %v1457 = vld [vmem:[%s1455 + $0x4] sm:$0xf]
    %v1458 = vld [vmem:[%s1455 + $0x8] sm:$0xf]
    %v1459 = vld [vmem:[%s1455 + $0xc] sm:$0xf]
    %s1460 = scalar_lea.vmem [#allocation10], 1
    %v1461 = vld [vmem:[%s1460] sm:$0x1]
    %s1462 = scalar_lea.vmem %s9, 32
    %v1463 = vld [vmem:[%s1462] sm:$0xf]
    %v1464 = vld [vmem:[%s1462 + $0x4] sm:$0xf]
    %v1465 = vld [vmem:[%s1462 + $0x8] sm:$0xf]
    %v1466 = vld [vmem:[%s1462 + $0xc] sm:$0xf]
    %v1467 = vld [vmem:[%s1462 + $0x10] sm:$0xf]
    %v1468 = vld [vmem:[%s1462 + $0x14] sm:$0xf]
    %v1469 = vld [vmem:[%s1462 + $0x18] sm:$0xf]
    %v1470 = vld [vmem:[%s1462 + $0x1c] sm:$0xf]
    %s1471 = scalar_lea.vmem %s10, 1
    %v1472 = vld [vmem:[%s1471] sm:$0x1]
    %s1473 = scalar_lea.vmem %s11, 1
    %v1474 = vld [vmem:[%s1473] sm:$0x1]
    %s1475 = scalar_lea.vmem %s12, 1
    %v1476 = vld [vmem:[%s1475] sm:$0x1]
    %v1477 = vpack.c.bf16 %v1436, %v1435
    %v1479 = vlaneseq
    %v1480 = vshrl.u32 %v1479, 7
    %v1481 = vsub.s32 0, %v1480
    %v1482 = vrot.slane %v1443, %v1481
    %v1488 = vunpack.c.l.b16 %v1438
    %v1489 = vunpack.c.l.b16 %v1439
    %v1490 = vunpack.c.l.b16 %v1440
    %v1491 = vunpack.c.l.b16 %v1441
    %v1492 = vpack.c.b16 %v1489, %v1488
    %v1493 = vpack.c.b16 %v1491, %v1490
    %v1497 = vsel %vm163, %v1477, 0
    %1499 = vmatprep.subr.bf16.mxu0 0
    %1500 = vmatpush1.bf16.msra.mxu0 %v1492
    %1501 = vmatprep.subr.bf16.mxu0 0
    %1502 = vmatpush1.bf16.msra.mxu0 %v1493
    %1503 = vmatprep.subr.bf16.mxu0 0
    %1504 = vmatpush1.bf16.msra.mxu0 0
    %1505 = vmatprep.subr.bf16.mxu0 0
    %1506 = vmatpush1.bf16.msra.mxu0 0
    %1507 = vmatprep.subr.bf16.mxu0 0
    %1508 = vmatpush1.bf16.msra.mxu0 0
    %1509 = vmatprep.subr.bf16.mxu0 0
    %1510 = vmatpush1.bf16.msra.mxu0 0
    %1511 = vmatprep.subr.bf16.mxu0 0
    %1512 = vmatpush1.bf16.msra.mxu0 0
    %1513 = vmatprep.subr.bf16.mxu0 0
    %1514 = vmatpush1.bf16.msra.mxu0 0
    %1515 = vmatprep.subr.bf16.mxu0 0
    %1516 = vmatpush1.bf16.msra.mxu0 0
    %1517 = vmatprep.subr.bf16.mxu0 0
    %1518 = vmatpush1.bf16.msra.mxu0 0
    %1519 = vmatprep.subr.bf16.mxu0 0
    %1520 = vmatpush1.bf16.msra.mxu0 0
    %1521 = vmatprep.subr.bf16.mxu0 0
    %1522 = vmatpush1.bf16.msra.mxu0 0
    %1523 = vmatprep.subr.bf16.mxu0 0
    %1524 = vmatpush1.bf16.msra.mxu0 0
    %1525 = vmatprep.subr.bf16.mxu0 0
    %1526 = vmatpush1.bf16.msra.mxu0 0
    %1527 = vmatprep.subr.bf16.mxu0 0
    %1528 = vmatpush1.bf16.msra.mxu0 0
    %1529 = vmatprep.subr.bf16.mxu0 0
    %1530 = vmatpush1.bf16.msra.mxu0 0
    %1531 = vmatprep.mubr.bf16.mxu0 0
    %1532 = vmatmul.mubr.bf16.gmra.mrb[0].mxu0 %v1497
    %v1533 = vpop.f32.mrb[0].mxu0
    %v1534 = vadd.f32 %v1482, %v1533
    %v1535 = vpop.f32.mrb[0].mxu0
    %v1536 = vpop.f32.mrb[0].mxu0
    %v1537 = vadd.f32 %v1482, %v1536
    %v1538 = vpop.f32.mrb[0].mxu0
    %1539 = vdwg.mxu0
    %v1540 = vmul.f32 %v1534, 0.35355338
    %v1541 = vmul.f32 %v1537, 0.35355338
    %v1542 = vpack.c.bf16 %v1540, %v1540
    %v1543 = vpack.c.bf16 %v1541, %v1541
    %v1544 = vpack.c.bf16 %v1534, %v1534
    %v1545 = vpack.c.bf16 %v1537, %v1537
    %1547 = vrot.lane.b32.xlu0 %v1544, 96
    %v1548 = vpop.permute.xlu0 %1547
    %v1550 = vsel %vm217, %v1542, 0
    %v1553 = vsel %vm217, %v1548, 0
    %1555 = vmatprep.subr.bf16.mxu0 0
    %1556 = vmatpush1.bf16.xpose.msra.mxu0 %v1553
    %1557 = vmatprep.subr.bf16.mxu0 0
    %1558 = vmatpush1.bf16.xpose.msra.mxu0 0
    %1559 = vmatprep.subr.bf16.mxu0 0
    %1560 = vmatpush1.bf16.xpose.msra.mxu0 0
    %1561 = vmatprep.subr.bf16.mxu0 0
    %1562 = vmatpush1.bf16.xpose.msra.mxu0 0
    %1563 = vmatprep.subr.bf16.mxu0 0
    %1564 = vmatpush1.bf16.xpose.msra.mxu0 0
    %1565 = vmatprep.subr.bf16.mxu0 0
    %1566 = vmatpush1.bf16.xpose.msra.mxu0 0
    %1567 = vmatprep.subr.bf16.mxu0 0
    %1568 = vmatpush1.bf16.xpose.msra.mxu0 0
    %1569 = vmatprep.subr.bf16.mxu0 0
    %1570 = vmatpush1.bf16.xpose.msra.mxu0 0
    %1571 = vmatprep.subr.bf16.mxu0 0
    %1572 = vmatpush1.bf16.xpose.msra.mxu0 0
    %1573 = vmatprep.subr.bf16.mxu0 0
    %1574 = vmatpush1.bf16.xpose.msra.mxu0 0
    %1575 = vmatprep.subr.bf16.mxu0 0
    %1576 = vmatpush1.bf16.xpose.msra.mxu0 0
    %1577 = vmatprep.subr.bf16.mxu0 0
    %1578 = vmatpush1.bf16.xpose.msra.mxu0 0
    %1579 = vmatprep.subr.bf16.mxu0 0
    %1580 = vmatpush1.bf16.xpose.msra.mxu0 0
    %1581 = vmatprep.subr.bf16.mxu0 0
    %1582 = vmatpush1.bf16.xpose.msra.mxu0 0
    %1583 = vmatprep.subr.bf16.mxu0 0
    %1584 = vmatpush1.bf16.xpose.msra.mxu0 0
    %1585 = vmatprep.subr.bf16.mxu0 0
    %1586 = vmatpush1.bf16.xpose.msra.mxu0 0
    %1587 = vmatprep.mubr.bf16.mxu0 0
    %1588 = vmatmul.mubr.bf16.gmra.mrb[0].mxu0 %v1550
    %v1589 = vpop.f32.mrb[0].mxu0
    %v1590 = vadd.f32 0.0, %v1589
    %v1591 = vpop.f32.mrb[0].mxu0
    %v1592 = vpop.f32.mrb[0].mxu0
    %v1593 = vpop.f32.mrb[0].mxu0
    %1594 = vdwg.mxu0
    %1596 = vrot.lane.b32.xlu0 %v1545, 96
    %v1597 = vpop.permute.xlu0 %1596
    %v1599 = vsel %vm217, %v1543, 0
    %v1602 = vsel %vm217, %v1597, 0
    %1604 = vmatprep.subr.bf16.mxu0 0
    %1605 = vmatpush1.bf16.xpose.msra.mxu0 %v1602
    %1606 = vmatprep.subr.bf16.mxu0 0
    %1607 = vmatpush1.bf16.xpose.msra.mxu0 0
    %1608 = vmatprep.subr.bf16.mxu0 0
    %1609 = vmatpush1.bf16.xpose.msra.mxu0 0
    %1610 = vmatprep.subr.bf16.mxu0 0
    %1611 = vmatpush1.bf16.xpose.msra.mxu0 0
    %1612 = vmatprep.subr.bf16.mxu0 0
    %1613 = vmatpush1.bf16.xpose.msra.mxu0 0
    %1614 = vmatprep.subr.bf16.mxu0 0
    %1615 = vmatpush1.bf16.xpose.msra.mxu0 0
    %1616 = vmatprep.subr.bf16.mxu0 0
    %1617 = vmatpush1.bf16.xpose.msra.mxu0 0
    %1618 = vmatprep.subr.bf16.mxu0 0
    %1619 = vmatpush1.bf16.xpose.msra.mxu0 0
    %1620 = vmatprep.subr.bf16.mxu0 0
    %1621 = vmatpush1.bf16.xpose.msra.mxu0 0
    %1622 = vmatprep.subr.bf16.mxu0 0
    %1623 = vmatpush1.bf16.xpose.msra.mxu0 0
    %1624 = vmatprep.subr.bf16.mxu0 0
    %1625 = vmatpush1.bf16.xpose.msra.mxu0 0
    %1626 = vmatprep.subr.bf16.mxu0 0
    %1627 = vmatpush1.bf16.xpose.msra.mxu0 0
    %1628 = vmatprep.subr.bf16.mxu0 0
    %1629 = vmatpush1.bf16.xpose.msra.mxu0 0
    %1630 = vmatprep.subr.bf16.mxu0 0
    %1631 = vmatpush1.bf16.xpose.msra.mxu0 0
    %1632 = vmatprep.subr.bf16.mxu0 0
    %1633 = vmatpush1.bf16.xpose.msra.mxu0 0
    %1634 = vmatprep.subr.bf16.mxu0 0
    %1635 = vmatpush1.bf16.xpose.msra.mxu0 0
    %1636 = vmatprep.mubr.bf16.mxu0 0
    %1637 = vmatmul.mubr.bf16.gmra.mrb[0].mxu0 %v1599
    %v1638 = vpop.f32.mrb[0].mxu0
    %v1639 = vadd.f32 0.0, %v1638
    %v1640 = vpop.f32.mrb[0].mxu0
    %v1641 = vpop.f32.mrb[0].mxu0
    %v1642 = vpop.f32.mrb[0].mxu0
    %1643 = vdwg.mxu0
    %v1644 = vsel %vm217, %v1590, -inf
    %1645 = vmax.xlane.f32.xlu0 %v1644
    %v1646 = vpop.xlane.xlu0 %1645
    %v1647 = vsel %vm217, %v1639, -inf
    %1648 = vmax.xlane.f32.xlu0 %v1647
    %v1649 = vpop.xlane.xlu0 %1648
    %v1650 = vsub.f32 %v1590, %v1646
    %v1651 = vsub.f32 %v1639, %v1649
    %v1652 = vmul.f32 %v1650, 1.442695
    %v1653 = vpow.pop %v1652
    %v1654 = vmul.f32 %v1651, 1.442695
    %v1655 = vpow.pop %v1654
    %v1656 = vsel %vm217, %v1653, 0.0
    %1657 = vadd.xlane.f32.xlu0 %v1656
    %v1658 = vpop.xlane.xlu0 %1657
    %v1659 = vsel %vm217, %v1655, 0.0
    %1660 = vadd.xlane.f32.xlu0 %v1659
    %v1661 = vpop.xlane.xlu0 %1660
    %v1662 = vrcp.pop %v1658
    %v1663 = vrcp.pop %v1661
    %v1664 = vmul.f32 %v1653, %v1662
    %v1665 = vmul.f32 %v1655, %v1663
    %v1666 = vpack.c.bf16 %v1664, %v1664
    %v1667 = vpack.c.bf16 %v1665, %v1665
    %1668 = vrot.lane.b32.xlu0 %v1544, 64
    %v1669 = vpop.permute.xlu0 %1668
    %v1671 = vsel %vm217, %v1666, 0
    %v1674 = vsel %vm342, %v1669, 0
    %1676 = vmatprep.subr.bf16.mxu0 0
    %1677 = vmatpush1.bf16.msra.mxu0 %v1674
    %1678 = vmatprep.subr.bf16.mxu0 0
    %1679 = vmatpush1.bf16.msra.mxu0 0
    %1680 = vmatprep.subr.bf16.mxu0 0
    %1681 = vmatpush1.bf16.msra.mxu0 0
    %1682 = vmatprep.subr.bf16.mxu0 0
    %1683 = vmatpush1.bf16.msra.mxu0 0
    %1684 = vmatprep.subr.bf16.mxu0 0
    %1685 = vmatpush1.bf16.msra.mxu0 0
    %1686 = vmatprep.subr.bf16.mxu0 0
    %1687 = vmatpush1.bf16.msra.mxu0 0
    %1688 = vmatprep.subr.bf16.mxu0 0
    %1689 = vmatpush1.bf16.msra.mxu0 0
    %1690 = vmatprep.subr.bf16.mxu0 0
    %1691 = vmatpush1.bf16.msra.mxu0 0
    %1692 = vmatprep.subr.bf16.mxu0 0
    %1693 = vmatpush1.bf16.msra.mxu0 0
    %1694 = vmatprep.subr.bf16.mxu0 0
    %1695 = vmatpush1.bf16.msra.mxu0 0
    %1696 = vmatprep.subr.bf16.mxu0 0
    %1697 = vmatpush1.bf16.msra.mxu0 0
    %1698 = vmatprep.subr.bf16.mxu0 0
    %1699 = vmatpush1.bf16.msra.mxu0 0
    %1700 = vmatprep.subr.bf16.mxu0 0
    %1701 = vmatpush1.bf16.msra.mxu0 0
    %1702 = vmatprep.subr.bf16.mxu0 0
    %1703 = vmatpush1.bf16.msra.mxu0 0
    %1704 = vmatprep.subr.bf16.mxu0 0
    %1705 = vmatpush1.bf16.msra.mxu0 0
    %1706 = vmatprep.subr.bf16.mxu0 0
    %1707 = vmatpush1.bf16.msra.mxu0 0
    %1708 = vmatprep.mubr.bf16.mxu0 0
    %1709 = vmatmul.mubr.bf16.gmra.mrb[0].mxu0 %v1671
    %v1710 = vpop.f32.mrb[0].mxu0
    %v1711 = vadd.f32 0.0, %v1710
    %v1712 = vpop.f32.mrb[0].mxu0
    %v1713 = vpop.f32.mrb[0].mxu0
    %v1714 = vpop.f32.mrb[0].mxu0
    %1715 = vdwg.mxu0
    %1716 = vrot.lane.b32.xlu0 %v1545, 64
    %v1717 = vpop.permute.xlu0 %1716
    %v1719 = vsel %vm217, %v1667, 0
    %v1722 = vsel %vm342, %v1717, 0
    %1724 = vmatprep.subr.bf16.mxu0 0
    %1725 = vmatpush1.bf16.msra.mxu0 %v1722
    %1726 = vmatprep.subr.bf16.mxu0 0
    %1727 = vmatpush1.bf16.msra.mxu0 0
    %1728 = vmatprep.subr.bf16.mxu0 0
    %1729 = vmatpush1.bf16.msra.mxu0 0
    %1730 = vmatprep.subr.bf16.mxu0 0
    %1731 = vmatpush1.bf16.msra.mxu0 0
    %1732 = vmatprep.subr.bf16.mxu0 0
    %1733 = vmatpush1.bf16.msra.mxu0 0
    %1734 = vmatprep.subr.bf16.mxu0 0
    %1735 = vmatpush1.bf16.msra.mxu0 0
    %1736 = vmatprep.subr.bf16.mxu0 0
    %1737 = vmatpush1.bf16.msra.mxu0 0
    %1738 = vmatprep.subr.bf16.mxu0 0
    %1739 = vmatpush1.bf16.msra.mxu0 0
    %1740 = vmatprep.subr.bf16.mxu0 0
    %1741 = vmatpush1.bf16.msra.mxu0 0
    %1742 = vmatprep.subr.bf16.mxu0 0
    %1743 = vmatpush1.bf16.msra.mxu0 0
    %1744 = vmatprep.subr.bf16.mxu0 0
    %1745 = vmatpush1.bf16.msra.mxu0 0
    %1746 = vmatprep.subr.bf16.mxu0 0
    %1747 = vmatpush1.bf16.msra.mxu0 0
    %1748 = vmatprep.subr.bf16.mxu0 0
    %1749 = vmatpush1.bf16.msra.mxu0 0
    %1750 = vmatprep.subr.bf16.mxu0 0
    %1751 = vmatpush1.bf16.msra.mxu0 0
    %1752 = vmatprep.subr.bf16.mxu0 0
    %1753 = vmatpush1.bf16.msra.mxu0 0
    %1754 = vmatprep.subr.bf16.mxu0 0
    %1755 = vmatpush1.bf16.msra.mxu0 0
    %1756 = vmatprep.mubr.bf16.mxu0 0
    %1757 = vmatmul.mubr.bf16.gmra.mrb[0].mxu0 %v1719
    %v1758 = vpop.f32.mrb[0].mxu0
    %v1759 = vadd.f32 0.0, %v1758
    %v1760 = vpop.f32.mrb[0].mxu0
    %v1761 = vpop.f32.mrb[0].mxu0
    %v1762 = vpop.f32.mrb[0].mxu0
    %1763 = vdwg.mxu0
    %1765 = vrot.lane.b32.xlu0 %v1542, 120
    %v1766 = vpop.permute.xlu0 %1765
    %1767 = vrot.lane.b32.xlu0 %v1544, 88
    %v1768 = vpop.permute.xlu0 %1767
    %v1770 = vsel %vm217, %v1766, 0
    %v1773 = vsel %vm217, %v1768, 0
    %1775 = vmatprep.subr.bf16.mxu0 0
    %1776 = vmatpush1.bf16.xpose.msra.mxu0 %v1773
    %1777 = vmatprep.subr.bf16.mxu0 0
    %1778 = vmatpush1.bf16.xpose.msra.mxu0 0
    %1779 = vmatprep.subr.bf16.mxu0 0
    %1780 = vmatpush1.bf16.xpose.msra.mxu0 0
    %1781 = vmatprep.subr.bf16.mxu0 0
    %1782 = vmatpush1.bf16.xpose.msra.mxu0 0
    %1783 = vmatprep.subr.bf16.mxu0 0
    %1784 = vmatpush1.bf16.xpose.msra.mxu0 0
    %1785 = vmatprep.subr.bf16.mxu0 0
    %1786 = vmatpush1.bf16.xpose.msra.mxu0 0
    %1787 = vmatprep.subr.bf16.mxu0 0
    %1788 = vmatpush1.bf16.xpose.msra.mxu0 0
    %1789 = vmatprep.subr.bf16.mxu0 0
    %1790 = vmatpush1.bf16.xpose.msra.mxu0 0
    %1791 = vmatprep.subr.bf16.mxu0 0
    %1792 = vmatpush1.bf16.xpose.msra.mxu0 0
    %1793 = vmatprep.subr.bf16.mxu0 0
    %1794 = vmatpush1.bf16.xpose.msra.mxu0 0
    %1795 = vmatprep.subr.bf16.mxu0 0
    %1796 = vmatpush1.bf16.xpose.msra.mxu0 0
    %1797 = vmatprep.subr.bf16.mxu0 0
    %1798 = vmatpush1.bf16.xpose.msra.mxu0 0
    %1799 = vmatprep.subr.bf16.mxu0 0
    %1800 = vmatpush1.bf16.xpose.msra.mxu0 0
    %1801 = vmatprep.subr.bf16.mxu0 0
    %1802 = vmatpush1.bf16.xpose.msra.mxu0 0
    %1803 = vmatprep.subr.bf16.mxu0 0
    %1804 = vmatpush1.bf16.xpose.msra.mxu0 0
    %1805 = vmatprep.subr.bf16.mxu0 0
    %1806 = vmatpush1.bf16.xpose.msra.mxu0 0
    %1807 = vmatprep.mubr.bf16.mxu0 0
    %1808 = vmatmul.mubr.bf16.gmra.mrb[0].mxu0 %v1770
    %v1809 = vpop.f32.mrb[0].mxu0
    %v1810 = vadd.f32 0.0, %v1809
    %v1811 = vpop.f32.mrb[0].mxu0
    %v1812 = vpop.f32.mrb[0].mxu0
    %v1813 = vpop.f32.mrb[0].mxu0
    %1814 = vdwg.mxu0
    %1816 = vrot.lane.b32.xlu0 %v1543, 120
    %v1817 = vpop.permute.xlu0 %1816
    %1818 = vrot.lane.b32.xlu0 %v1545, 88
    %v1819 = vpop.permute.xlu0 %1818
    %v1821 = vsel %vm217, %v1817, 0
    %v1824 = vsel %vm217, %v1819, 0
    %1826 = vmatprep.subr.bf16.mxu0 0
    %1827 = vmatpush1.bf16.xpose.msra.mxu0 %v1824
    %1828 = vmatprep.subr.bf16.mxu0 0
    %1829 = vmatpush1.bf16.xpose.msra.mxu0 0
    %1830 = vmatprep.subr.bf16.mxu0 0
    %1831 = vmatpush1.bf16.xpose.msra.mxu0 0
    %1832 = vmatprep.subr.bf16.mxu0 0
    %1833 = vmatpush1.bf16.xpose.msra.mxu0 0
    %1834 = vmatprep.subr.bf16.mxu0 0
    %1835 = vmatpush1.bf16.xpose.msra.mxu0 0
    %1836 = vmatprep.subr.bf16.mxu0 0
    %1837 = vmatpush1.bf16.xpose.msra.mxu0 0
    %1838 = vmatprep.subr.bf16.mxu0 0
    %1839 = vmatpush1.bf16.xpose.msra.mxu0 0
    %1840 = vmatprep.subr.bf16.mxu0 0
    %1841 = vmatpush1.bf16.xpose.msra.mxu0 0
    %1842 = vmatprep.subr.bf16.mxu0 0
    %1843 = vmatpush1.bf16.xpose.msra.mxu0 0
    %1844 = vmatprep.subr.bf16.mxu0 0
    %1845 = vmatpush1.bf16.xpose.msra.mxu0 0
    %1846 = vmatprep.subr.bf16.mxu0 0
    %1847 = vmatpush1.bf16.xpose.msra.mxu0 0
    %1848 = vmatprep.subr.bf16.mxu0 0
    %1849 = vmatpush1.bf16.xpose.msra.mxu0 0
    %1850 = vmatprep.subr.bf16.mxu0 0
    %1851 = vmatpush1.bf16.xpose.msra.mxu0 0
    %1852 = vmatprep.subr.bf16.mxu0 0
    %1853 = vmatpush1.bf16.xpose.msra.mxu0 0
    %1854 = vmatprep.subr.bf16.mxu0 0
    %1855 = vmatpush1.bf16.xpose.msra.mxu0 0
    %1856 = vmatprep.subr.bf16.mxu0 0
    %1857 = vmatpush1.bf16.xpose.msra.mxu0 0
    %1858 = vmatprep.mubr.bf16.mxu0 0
    %1859 = vmatmul.mubr.bf16.gmra.mrb[0].mxu0 %v1821
    %v1860 = vpop.f32.mrb[0].mxu0
    %v1861 = vadd.f32 0.0, %v1860
    %v1862 = vpop.f32.mrb[0].mxu0
    %v1863 = vpop.f32.mrb[0].mxu0
    %v1864 = vpop.f32.mrb[0].mxu0
    %1865 = vdwg.mxu0
    %v1866 = vsel %vm217, %v1810, -inf
    %1867 = vmax.xlane.f32.xlu0 %v1866
    %v1868 = vpop.xlane.xlu0 %1867
    %v1869 = vsel %vm217, %v1861, -inf
    %1870 = vmax.xlane.f32.xlu0 %v1869
    %v1871 = vpop.xlane.xlu0 %1870
    %v1872 = vsub.f32 %v1810, %v1868
    %v1873 = vsub.f32 %v1861, %v1871
    %v1874 = vmul.f32 %v1872, 1.442695
    %v1875 = vpow.pop %v1874
    %v1876 = vmul.f32 %v1873, 1.442695
    %v1877 = vpow.pop %v1876
    %v1878 = vsel %vm217, %v1875, 0.0
    %1879 = vadd.xlane.f32.xlu0 %v1878
    %v1880 = vpop.xlane.xlu0 %1879
    %v1881 = vsel %vm217, %v1877, 0.0
    %1882 = vadd.xlane.f32.xlu0 %v1881
    %v1883 = vpop.xlane.xlu0 %1882
    %v1884 = vrcp.pop %v1880
    %v1885 = vrcp.pop %v1883
    %v1886 = vmul.f32 %v1875, %v1884
    %v1887 = vmul.f32 %v1877, %v1885
    %v1888 = vpack.c.bf16 %v1886, %v1886
    %v1889 = vpack.c.bf16 %v1887, %v1887
    %1890 = vrot.lane.b32.xlu0 %v1544, 56
    %v1891 = vpop.permute.xlu0 %1890
    %v1893 = vsel %vm217, %v1888, 0
    %v1896 = vsel %vm342, %v1891, 0
    %1898 = vmatprep.subr.bf16.mxu0 0
    %1899 = vmatpush1.bf16.msra.mxu0 %v1896
    %1900 = vmatprep.subr.bf16.mxu0 0
    %1901 = vmatpush1.bf16.msra.mxu0 0
    %1902 = vmatprep.subr.bf16.mxu0 0
    %1903 = vmatpush1.bf16.msra.mxu0 0
    %1904 = vmatprep.subr.bf16.mxu0 0
    %1905 = vmatpush1.bf16.msra.mxu0 0
    %1906 = vmatprep.subr.bf16.mxu0 0
    %1907 = vmatpush1.bf16.msra.mxu0 0
    %1908 = vmatprep.subr.bf16.mxu0 0
    %1909 = vmatpush1.bf16.msra.mxu0 0
    %1910 = vmatprep.subr.bf16.mxu0 0
    %1911 = vmatpush1.bf16.msra.mxu0 0
    %1912 = vmatprep.subr.bf16.mxu0 0
    %1913 = vmatpush1.bf16.msra.mxu0 0
    %1914 = vmatprep.subr.bf16.mxu0 0
    %1915 = vmatpush1.bf16.msra.mxu0 0
    %1916 = vmatprep.subr.bf16.mxu0 0
    %1917 = vmatpush1.bf16.msra.mxu0 0
    %1918 = vmatprep.subr.bf16.mxu0 0
    %1919 = vmatpush1.bf16.msra.mxu0 0
    %1920 = vmatprep.subr.bf16.mxu0 0
    %1921 = vmatpush1.bf16.msra.mxu0 0
    %1922 = vmatprep.subr.bf16.mxu0 0
    %1923 = vmatpush1.bf16.msra.mxu0 0
    %1924 = vmatprep.subr.bf16.mxu0 0
    %1925 = vmatpush1.bf16.msra.mxu0 0
    %1926 = vmatprep.subr.bf16.mxu0 0
    %1927 = vmatpush1.bf16.msra.mxu0 0
    %1928 = vmatprep.subr.bf16.mxu0 0
    %1929 = vmatpush1.bf16.msra.mxu0 0
    %1930 = vmatprep.mubr.bf16.mxu0 0
    %1931 = vmatmul.mubr.bf16.gmra.mrb[0].mxu0 %v1893
    %v1932 = vpop.f32.mrb[0].mxu0
    %v1933 = vadd.f32 0.0, %v1932
    %v1934 = vpop.f32.mrb[0].mxu0
    %v1935 = vpop.f32.mrb[0].mxu0
    %v1936 = vpop.f32.mrb[0].mxu0
    %1937 = vdwg.mxu0
    %1938 = vrot.lane.b32.xlu0 %v1545, 56
    %v1939 = vpop.permute.xlu0 %1938
    %v1941 = vsel %vm217, %v1889, 0
    %v1944 = vsel %vm342, %v1939, 0
    %1946 = vmatprep.subr.bf16.mxu0 0
    %1947 = vmatpush1.bf16.msra.mxu0 %v1944
    %1948 = vmatprep.subr.bf16.mxu0 0
    %1949 = vmatpush1.bf16.msra.mxu0 0
    %1950 = vmatprep.subr.bf16.mxu0 0
    %1951 = vmatpush1.bf16.msra.mxu0 0
    %1952 = vmatprep.subr.bf16.mxu0 0
    %1953 = vmatpush1.bf16.msra.mxu0 0
    %1954 = vmatprep.subr.bf16.mxu0 0
    %1955 = vmatpush1.bf16.msra.mxu0 0
    %1956 = vmatprep.subr.bf16.mxu0 0
    %1957 = vmatpush1.bf16.msra.mxu0 0
    %1958 = vmatprep.subr.bf16.mxu0 0
    %1959 = vmatpush1.bf16.msra.mxu0 0
    %1960 = vmatprep.subr.bf16.mxu0 0
    %1961 = vmatpush1.bf16.msra.mxu0 0
    %1962 = vmatprep.subr.bf16.mxu0 0
    %1963 = vmatpush1.bf16.msra.mxu0 0
    %1964 = vmatprep.subr.bf16.mxu0 0
    %1965 = vmatpush1.bf16.msra.mxu0 0
    %1966 = vmatprep.subr.bf16.mxu0 0
    %1967 = vmatpush1.bf16.msra.mxu0 0
    %1968 = vmatprep.subr.bf16.mxu0 0
    %1969 = vmatpush1.bf16.msra.mxu0 0
    %1970 = vmatprep.subr.bf16.mxu0 0
    %1971 = vmatpush1.bf16.msra.mxu0 0
    %1972 = vmatprep.subr.bf16.mxu0 0
    %1973 = vmatpush1.bf16.msra.mxu0 0
    %1974 = vmatprep.subr.bf16.mxu0 0
    %1975 = vmatpush1.bf16.msra.mxu0 0
    %1976 = vmatprep.subr.bf16.mxu0 0
    %1977 = vmatpush1.bf16.msra.mxu0 0
    %1978 = vmatprep.mubr.bf16.mxu0 0
    %1979 = vmatmul.mubr.bf16.gmra.mrb[0].mxu0 %v1941
    %v1980 = vpop.f32.mrb[0].mxu0
    %v1981 = vadd.f32 0.0, %v1980
    %v1982 = vpop.f32.mrb[0].mxu0
    %v1983 = vpop.f32.mrb[0].mxu0
    %v1984 = vpop.f32.mrb[0].mxu0
    %1985 = vdwg.mxu0
    %1986 = vrot.lane.b32.xlu0 %v1542, 112
    %v1987 = vpop.permute.xlu0 %1986
    %1988 = vrot.lane.b32.xlu0 %v1544, 80
    %v1989 = vpop.permute.xlu0 %1988
    %v1991 = vsel %vm217, %v1987, 0
    %v1994 = vsel %vm217, %v1989, 0
    %1996 = vmatprep.subr.bf16.mxu0 0
    %1997 = vmatpush1.bf16.xpose.msra.mxu0 %v1994
    %1998 = vmatprep.subr.bf16.mxu0 0
    %1999 = vmatpush1.bf16.xpose.msra.mxu0 0
    %2000 = vmatprep.subr.bf16.mxu0 0
    %2001 = vmatpush1.bf16.xpose.msra.mxu0 0
    %2002 = vmatprep.subr.bf16.mxu0 0
    %2003 = vmatpush1.bf16.xpose.msra.mxu0 0
    %2004 = vmatprep.subr.bf16.mxu0 0
    %2005 = vmatpush1.bf16.xpose.msra.mxu0 0
    %2006 = vmatprep.subr.bf16.mxu0 0
    %2007 = vmatpush1.bf16.xpose.msra.mxu0 0
    %2008 = vmatprep.subr.bf16.mxu0 0
    %2009 = vmatpush1.bf16.xpose.msra.mxu0 0
    %2010 = vmatprep.subr.bf16.mxu0 0
    %2011 = vmatpush1.bf16.xpose.msra.mxu0 0
    %2012 = vmatprep.subr.bf16.mxu0 0
    %2013 = vmatpush1.bf16.xpose.msra.mxu0 0
    %2014 = vmatprep.subr.bf16.mxu0 0
    %2015 = vmatpush1.bf16.xpose.msra.mxu0 0
    %2016 = vmatprep.subr.bf16.mxu0 0
    %2017 = vmatpush1.bf16.xpose.msra.mxu0 0
    %2018 = vmatprep.subr.bf16.mxu0 0
    %2019 = vmatpush1.bf16.xpose.msra.mxu0 0
    %2020 = vmatprep.subr.bf16.mxu0 0
    %2021 = vmatpush1.bf16.xpose.msra.mxu0 0
    %2022 = vmatprep.subr.bf16.mxu0 0
    %2023 = vmatpush1.bf16.xpose.msra.mxu0 0
    %2024 = vmatprep.subr.bf16.mxu0 0
    %2025 = vmatpush1.bf16.xpose.msra.mxu0 0
    %2026 = vmatprep.subr.bf16.mxu0 0
    %2027 = vmatpush1.bf16.xpose.msra.mxu0 0
    %2028 = vmatprep.mubr.bf16.mxu0 0
    %2029 = vmatmul.mubr.bf16.gmra.mrb[0].mxu0 %v1991
    %v2030 = vpop.f32.mrb[0].mxu0
    %v2031 = vadd.f32 0.0, %v2030
    %v2032 = vpop.f32.mrb[0].mxu0
    %v2033 = vpop.f32.mrb[0].mxu0
    %v2034 = vpop.f32.mrb[0].mxu0
    %2035 = vdwg.mxu0
    %2036 = vrot.lane.b32.xlu0 %v1543, 112
    %v2037 = vpop.permute.xlu0 %2036
    %2038 = vrot.lane.b32.xlu0 %v1545, 80
    %v2039 = vpop.permute.xlu0 %2038
    %v2041 = vsel %vm217, %v2037, 0
    %v2044 = vsel %vm217, %v2039, 0
    %2046 = vmatprep.subr.bf16.mxu0 0
    %2047 = vmatpush1.bf16.xpose.msra.mxu0 %v2044
    %2048 = vmatprep.subr.bf16.mxu0 0
    %2049 = vmatpush1.bf16.xpose.msra.mxu0 0
    %2050 = vmatprep.subr.bf16.mxu0 0
    %2051 = vmatpush1.bf16.xpose.msra.mxu0 0
    %2052 = vmatprep.subr.bf16.mxu0 0
    %2053 = vmatpush1.bf16.xpose.msra.mxu0 0
    %2054 = vmatprep.subr.bf16.mxu0 0
    %2055 = vmatpush1.bf16.xpose.msra.mxu0 0
    %2056 = vmatprep.subr.bf16.mxu0 0
    %2057 = vmatpush1.bf16.xpose.msra.mxu0 0
    %2058 = vmatprep.subr.bf16.mxu0 0
    %2059 = vmatpush1.bf16.xpose.msra.mxu0 0
    %2060 = vmatprep.subr.bf16.mxu0 0
    %2061 = vmatpush1.bf16.xpose.msra.mxu0 0
    %2062 = vmatprep.subr.bf16.mxu0 0
    %2063 = vmatpush1.bf16.xpose.msra.mxu0 0
    %2064 = vmatprep.subr.bf16.mxu0 0
    %2065 = vmatpush1.bf16.xpose.msra.mxu0 0
    %2066 = vmatprep.subr.bf16.mxu0 0
    %2067 = vmatpush1.bf16.xpose.msra.mxu0 0
    %2068 = vmatprep.subr.bf16.mxu0 0
    %2069 = vmatpush1.bf16.xpose.msra.mxu0 0
    %2070 = vmatprep.subr.bf16.mxu0 0
    %2071 = vmatpush1.bf16.xpose.msra.mxu0 0
    %2072 = vmatprep.subr.bf16.mxu0 0
    %2073 = vmatpush1.bf16.xpose.msra.mxu0 0
    %2074 = vmatprep.subr.bf16.mxu0 0
    %2075 = vmatpush1.bf16.xpose.msra.mxu0 0
    %2076 = vmatprep.subr.bf16.mxu0 0
    %2077 = vmatpush1.bf16.xpose.msra.mxu0 0
    %2078 = vmatprep.mubr.bf16.mxu0 0
    %2079 = vmatmul.mubr.bf16.gmra.mrb[0].mxu0 %v2041
    %v2080 = vpop.f32.mrb[0].mxu0
    %v2081 = vadd.f32 0.0, %v2080
    %v2082 = vpop.f32.mrb[0].mxu0
    %v2083 = vpop.f32.mrb[0].mxu0
    %v2084 = vpop.f32.mrb[0].mxu0
    %2085 = vdwg.mxu0
    %v2086 = vsel %vm217, %v2031, -inf
    %2087 = vmax.xlane.f32.xlu0 %v2086
    %v2088 = vpop.xlane.xlu0 %2087
    %v2089 = vsel %vm217, %v2081, -inf
    %2090 = vmax.xlane.f32.xlu0 %v2089
    %v2091 = vpop.xlane.xlu0 %2090
    %v2092 = vsub.f32 %v2031, %v2088
    %v2093 = vsub.f32 %v2081, %v2091
    %v2094 = vmul.f32 %v2092, 1.442695
    %v2095 = vpow.pop %v2094
    %v2096 = vmul.f32 %v2093, 1.442695
    %v2097 = vpow.pop %v2096
    %v2098 = vsel %vm217, %v2095, 0.0
    %2099 = vadd.xlane.f32.xlu0 %v2098
    %v2100 = vpop.xlane.xlu0 %2099
    %v2101 = vsel %vm217, %v2097, 0.0
    %2102 = vadd.xlane.f32.xlu0 %v2101
    %v2103 = vpop.xlane.xlu0 %2102
    %v2104 = vrcp.pop %v2100
    %v2105 = vrcp.pop %v2103
    %v2106 = vmul.f32 %v2095, %v2104
    %v2107 = vmul.f32 %v2097, %v2105
    %v2108 = vpack.c.bf16 %v2106, %v2106
    %v2109 = vpack.c.bf16 %v2107, %v2107
    %2110 = vrot.lane.b32.xlu0 %v1544, 48
    %v2111 = vpop.permute.xlu0 %2110
    %v2113 = vsel %vm217, %v2108, 0
    %v2116 = vsel %vm342, %v2111, 0
    %2118 = vmatprep.subr.bf16.mxu0 0
    %2119 = vmatpush1.bf16.msra.mxu0 %v2116
    %2120 = vmatprep.subr.bf16.mxu0 0
    %2121 = vmatpush1.bf16.msra.mxu0 0
    %2122 = vmatprep.subr.bf16.mxu0 0
    %2123 = vmatpush1.bf16.msra.mxu0 0
    %2124 = vmatprep.subr.bf16.mxu0 0
    %2125 = vmatpush1.bf16.msra.mxu0 0
    %2126 = vmatprep.subr.bf16.mxu0 0
    %2127 = vmatpush1.bf16.msra.mxu0 0
    %2128 = vmatprep.subr.bf16.mxu0 0
    %2129 = vmatpush1.bf16.msra.mxu0 0
    %2130 = vmatprep.subr.bf16.mxu0 0
    %2131 = vmatpush1.bf16.msra.mxu0 0
    %2132 = vmatprep.subr.bf16.mxu0 0
    %2133 = vmatpush1.bf16.msra.mxu0 0
    %2134 = vmatprep.subr.bf16.mxu0 0
    %2135 = vmatpush1.bf16.msra.mxu0 0
    %2136 = vmatprep.subr.bf16.mxu0 0
    %2137 = vmatpush1.bf16.msra.mxu0 0
    %2138 = vmatprep.subr.bf16.mxu0 0
    %2139 = vmatpush1.bf16.msra.mxu0 0
    %2140 = vmatprep.subr.bf16.mxu0 0
    %2141 = vmatpush1.bf16.msra.mxu0 0
    %2142 = vmatprep.subr.bf16.mxu0 0
    %2143 = vmatpush1.bf16.msra.mxu0 0
    %2144 = vmatprep.subr.bf16.mxu0 0
    %2145 = vmatpush1.bf16.msra.mxu0 0
    %2146 = vmatprep.subr.bf16.mxu0 0
    %2147 = vmatpush1.bf16.msra.mxu0 0
    %2148 = vmatprep.subr.bf16.mxu0 0
    %2149 = vmatpush1.bf16.msra.mxu0 0
    %2150 = vmatprep.mubr.bf16.mxu0 0
    %2151 = vmatmul.mubr.bf16.gmra.mrb[0].mxu0 %v2113
    %v2152 = vpop.f32.mrb[0].mxu0
    %v2153 = vadd.f32 0.0, %v2152
    %v2154 = vpop.f32.mrb[0].mxu0
    %v2155 = vpop.f32.mrb[0].mxu0
    %v2156 = vpop.f32.mrb[0].mxu0
    %2157 = vdwg.mxu0
    %2158 = vrot.lane.b32.xlu0 %v1545, 48
    %v2159 = vpop.permute.xlu0 %2158
    %v2161 = vsel %vm217, %v2109, 0
    %v2164 = vsel %vm342, %v2159, 0
    %2166 = vmatprep.subr.bf16.mxu0 0
    %2167 = vmatpush1.bf16.msra.mxu0 %v2164
    %2168 = vmatprep.subr.bf16.mxu0 0
    %2169 = vmatpush1.bf16.msra.mxu0 0
    %2170 = vmatprep.subr.bf16.mxu0 0
    %2171 = vmatpush1.bf16.msra.mxu0 0
    %2172 = vmatprep.subr.bf16.mxu0 0
    %2173 = vmatpush1.bf16.msra.mxu0 0
    %2174 = vmatprep.subr.bf16.mxu0 0
    %2175 = vmatpush1.bf16.msra.mxu0 0
    %2176 = vmatprep.subr.bf16.mxu0 0
    %2177 = vmatpush1.bf16.msra.mxu0 0
    %2178 = vmatprep.subr.bf16.mxu0 0
    %2179 = vmatpush1.bf16.msra.mxu0 0
    %2180 = vmatprep.subr.bf16.mxu0 0
    %2181 = vmatpush1.bf16.msra.mxu0 0
    %2182 = vmatprep.subr.bf16.mxu0 0
    %2183 = vmatpush1.bf16.msra.mxu0 0
    %2184 = vmatprep.subr.bf16.mxu0 0
    %2185 = vmatpush1.bf16.msra.mxu0 0
    %2186 = vmatprep.subr.bf16.mxu0 0
    %2187 = vmatpush1.bf16.msra.mxu0 0
    %2188 = vmatprep.subr.bf16.mxu0 0
    %2189 = vmatpush1.bf16.msra.mxu0 0
    %2190 = vmatprep.subr.bf16.mxu0 0
    %2191 = vmatpush1.bf16.msra.mxu0 0
    %2192 = vmatprep.subr.bf16.mxu0 0
    %2193 = vmatpush1.bf16.msra.mxu0 0
    %2194 = vmatprep.subr.bf16.mxu0 0
    %2195 = vmatpush1.bf16.msra.mxu0 0
    %2196 = vmatprep.subr.bf16.mxu0 0
    %2197 = vmatpush1.bf16.msra.mxu0 0
    %2198 = vmatprep.mubr.bf16.mxu0 0
    %2199 = vmatmul.mubr.bf16.gmra.mrb[0].mxu0 %v2161
    %v2200 = vpop.f32.mrb[0].mxu0
    %v2201 = vadd.f32 0.0, %v2200
    %v2202 = vpop.f32.mrb[0].mxu0
    %v2203 = vpop.f32.mrb[0].mxu0
    %v2204 = vpop.f32.mrb[0].mxu0
    %2205 = vdwg.mxu0
    %2206 = vrot.lane.b32.xlu0 %v1542, 104
    %v2207 = vpop.permute.xlu0 %2206
    %2208 = vrot.lane.b32.xlu0 %v1544, 72
    %v2209 = vpop.permute.xlu0 %2208
    %v2211 = vsel %vm217, %v2207, 0
    %v2214 = vsel %vm217, %v2209, 0
    %2216 = vmatprep.subr.bf16.mxu0 0
    %2217 = vmatpush1.bf16.xpose.msra.mxu0 %v2214
    %2218 = vmatprep.subr.bf16.mxu0 0
    %2219 = vmatpush1.bf16.xpose.msra.mxu0 0
    %2220 = vmatprep.subr.bf16.mxu0 0
    %2221 = vmatpush1.bf16.xpose.msra.mxu0 0
    %2222 = vmatprep.subr.bf16.mxu0 0
    %2223 = vmatpush1.bf16.xpose.msra.mxu0 0
    %2224 = vmatprep.subr.bf16.mxu0 0
    %2225 = vmatpush1.bf16.xpose.msra.mxu0 0
    %2226 = vmatprep.subr.bf16.mxu0 0
    %2227 = vmatpush1.bf16.xpose.msra.mxu0 0
    %2228 = vmatprep.subr.bf16.mxu0 0
    %2229 = vmatpush1.bf16.xpose.msra.mxu0 0
    %2230 = vmatprep.subr.bf16.mxu0 0
    %2231 = vmatpush1.bf16.xpose.msra.mxu0 0
    %2232 = vmatprep.subr.bf16.mxu0 0
    %2233 = vmatpush1.bf16.xpose.msra.mxu0 0
    %2234 = vmatprep.subr.bf16.mxu0 0
    %2235 = vmatpush1.bf16.xpose.msra.mxu0 0
    %2236 = vmatprep.subr.bf16.mxu0 0
    %2237 = vmatpush1.bf16.xpose.msra.mxu0 0
    %2238 = vmatprep.subr.bf16.mxu0 0
    %2239 = vmatpush1.bf16.xpose.msra.mxu0 0
    %2240 = vmatprep.subr.bf16.mxu0 0
    %2241 = vmatpush1.bf16.xpose.msra.mxu0 0
    %2242 = vmatprep.subr.bf16.mxu0 0
    %2243 = vmatpush1.bf16.xpose.msra.mxu0 0
    %2244 = vmatprep.subr.bf16.mxu0 0
    %2245 = vmatpush1.bf16.xpose.msra.mxu0 0
    %2246 = vmatprep.subr.bf16.mxu0 0
    %2247 = vmatpush1.bf16.xpose.msra.mxu0 0
    %2248 = vmatprep.mubr.bf16.mxu0 0
    %2249 = vmatmul.mubr.bf16.gmra.mrb[0].mxu0 %v2211
    %v2250 = vpop.f32.mrb[0].mxu0
    %v2251 = vadd.f32 0.0, %v2250
    %v2252 = vpop.f32.mrb[0].mxu0
    %v2253 = vpop.f32.mrb[0].mxu0
    %v2254 = vpop.f32.mrb[0].mxu0
    %2255 = vdwg.mxu0
    %2256 = vrot.lane.b32.xlu0 %v1543, 104
    %v2257 = vpop.permute.xlu0 %2256
    %2258 = vrot.lane.b32.xlu0 %v1545, 72
    %v2259 = vpop.permute.xlu0 %2258
    %v2261 = vsel %vm217, %v2257, 0
    %v2264 = vsel %vm217, %v2259, 0
    %2266 = vmatprep.subr.bf16.mxu0 0
    %2267 = vmatpush1.bf16.xpose.msra.mxu0 %v2264
    %2268 = vmatprep.subr.bf16.mxu0 0
    %2269 = vmatpush1.bf16.xpose.msra.mxu0 0
    %2270 = vmatprep.subr.bf16.mxu0 0
    %2271 = vmatpush1.bf16.xpose.msra.mxu0 0
    %2272 = vmatprep.subr.bf16.mxu0 0
    %2273 = vmatpush1.bf16.xpose.msra.mxu0 0
    %2274 = vmatprep.subr.bf16.mxu0 0
    %2275 = vmatpush1.bf16.xpose.msra.mxu0 0
    %2276 = vmatprep.subr.bf16.mxu0 0
    %2277 = vmatpush1.bf16.xpose.msra.mxu0 0
    %2278 = vmatprep.subr.bf16.mxu0 0
    %2279 = vmatpush1.bf16.xpose.msra.mxu0 0
    %2280 = vmatprep.subr.bf16.mxu0 0
    %2281 = vmatpush1.bf16.xpose.msra.mxu0 0
    %2282 = vmatprep.subr.bf16.mxu0 0
    %2283 = vmatpush1.bf16.xpose.msra.mxu0 0
    %2284 = vmatprep.subr.bf16.mxu0 0
    %2285 = vmatpush1.bf16.xpose.msra.mxu0 0
    %2286 = vmatprep.subr.bf16.mxu0 0
    %2287 = vmatpush1.bf16.xpose.msra.mxu0 0
    %2288 = vmatprep.subr.bf16.mxu0 0
    %2289 = vmatpush1.bf16.xpose.msra.mxu0 0
    %2290 = vmatprep.subr.bf16.mxu0 0
    %2291 = vmatpush1.bf16.xpose.msra.mxu0 0
    %2292 = vmatprep.subr.bf16.mxu0 0
    %2293 = vmatpush1.bf16.xpose.msra.mxu0 0
    %2294 = vmatprep.subr.bf16.mxu0 0
    %2295 = vmatpush1.bf16.xpose.msra.mxu0 0
    %2296 = vmatprep.subr.bf16.mxu0 0
    %2297 = vmatpush1.bf16.xpose.msra.mxu0 0
    %2298 = vmatprep.mubr.bf16.mxu0 0
    %2299 = vmatmul.mubr.bf16.gmra.mrb[0].mxu0 %v2261
    %v2300 = vpop.f32.mrb[0].mxu0
    %v2301 = vadd.f32 0.0, %v2300
    %v2302 = vpop.f32.mrb[0].mxu0
    %v2303 = vpop.f32.mrb[0].mxu0
    %v2304 = vpop.f32.mrb[0].mxu0
    %2305 = vdwg.mxu0
    %v2306 = vsel %vm217, %v2251, -inf
    %2307 = vmax.xlane.f32.xlu0 %v2306
    %v2308 = vpop.xlane.xlu0 %2307
    %v2309 = vsel %vm217, %v2301, -inf
    %2310 = vmax.xlane.f32.xlu0 %v2309
    %v2311 = vpop.xlane.xlu0 %2310
    %v2312 = vsub.f32 %v2251, %v2308
    %v2313 = vsub.f32 %v2301, %v2311
    %v2314 = vmul.f32 %v2312, 1.442695
    %v2315 = vpow.pop %v2314
    %v2316 = vmul.f32 %v2313, 1.442695
    %v2317 = vpow.pop %v2316
    %v2318 = vsel %vm217, %v2315, 0.0
    %2319 = vadd.xlane.f32.xlu0 %v2318
    %v2320 = vpop.xlane.xlu0 %2319
    %v2321 = vsel %vm217, %v2317, 0.0
    %2322 = vadd.xlane.f32.xlu0 %v2321
    %v2323 = vpop.xlane.xlu0 %2322
    %v2324 = vrcp.pop %v2320
    %v2325 = vrcp.pop %v2323
    %v2326 = vmul.f32 %v2315, %v2324
    %v2327 = vmul.f32 %v2317, %v2325
    %v2328 = vpack.c.bf16 %v2326, %v2326
    %v2329 = vpack.c.bf16 %v2327, %v2327
    %2330 = vrot.lane.b32.xlu0 %v1544, 40
    %v2331 = vpop.permute.xlu0 %2330
    %v2333 = vsel %vm217, %v2328, 0
    %v2336 = vsel %vm342, %v2331, 0
    %2338 = vmatprep.subr.bf16.mxu0 0
    %2339 = vmatpush1.bf16.msra.mxu0 %v2336
    %2340 = vmatprep.subr.bf16.mxu0 0
    %2341 = vmatpush1.bf16.msra.mxu0 0
    %2342 = vmatprep.subr.bf16.mxu0 0
    %2343 = vmatpush1.bf16.msra.mxu0 0
    %2344 = vmatprep.subr.bf16.mxu0 0
    %2345 = vmatpush1.bf16.msra.mxu0 0
    %2346 = vmatprep.subr.bf16.mxu0 0
    %2347 = vmatpush1.bf16.msra.mxu0 0
    %2348 = vmatprep.subr.bf16.mxu0 0
    %2349 = vmatpush1.bf16.msra.mxu0 0
    %2350 = vmatprep.subr.bf16.mxu0 0
    %2351 = vmatpush1.bf16.msra.mxu0 0
    %2352 = vmatprep.subr.bf16.mxu0 0
    %2353 = vmatpush1.bf16.msra.mxu0 0
    %2354 = vmatprep.subr.bf16.mxu0 0
    %2355 = vmatpush1.bf16.msra.mxu0 0
    %2356 = vmatprep.subr.bf16.mxu0 0
    %2357 = vmatpush1.bf16.msra.mxu0 0
    %2358 = vmatprep.subr.bf16.mxu0 0
    %2359 = vmatpush1.bf16.msra.mxu0 0
    %2360 = vmatprep.subr.bf16.mxu0 0
    %2361 = vmatpush1.bf16.msra.mxu0 0
    %2362 = vmatprep.subr.bf16.mxu0 0
    %2363 = vmatpush1.bf16.msra.mxu0 0
    %2364 = vmatprep.subr.bf16.mxu0 0
    %2365 = vmatpush1.bf16.msra.mxu0 0
    %2366 = vmatprep.subr.bf16.mxu0 0
    %2367 = vmatpush1.bf16.msra.mxu0 0
    %2368 = vmatprep.subr.bf16.mxu0 0
    %2369 = vmatpush1.bf16.msra.mxu0 0
    %2370 = vmatprep.mubr.bf16.mxu0 0
    %2371 = vmatmul.mubr.bf16.gmra.mrb[0].mxu0 %v2333
    %v2372 = vpop.f32.mrb[0].mxu0
    %v2373 = vadd.f32 0.0, %v2372
    %v2374 = vpop.f32.mrb[0].mxu0
    %v2375 = vpop.f32.mrb[0].mxu0
    %v2376 = vpop.f32.mrb[0].mxu0
    %2377 = vdwg.mxu0
    %2378 = vrot.lane.b32.xlu0 %v1545, 40
    %v2379 = vpop.permute.xlu0 %2378
    %v2381 = vsel %vm217, %v2329, 0
    %v2384 = vsel %vm342, %v2379, 0
    %2386 = vmatprep.subr.bf16.mxu0 0
    %2387 = vmatpush1.bf16.msra.mxu0 %v2384
    %2388 = vmatprep.subr.bf16.mxu0 0
    %2389 = vmatpush1.bf16.msra.mxu0 0
    %2390 = vmatprep.subr.bf16.mxu0 0
    %2391 = vmatpush1.bf16.msra.mxu0 0
    %2392 = vmatprep.subr.bf16.mxu0 0
    %2393 = vmatpush1.bf16.msra.mxu0 0
    %2394 = vmatprep.subr.bf16.mxu0 0
    %2395 = vmatpush1.bf16.msra.mxu0 0
    %2396 = vmatprep.subr.bf16.mxu0 0
    %2397 = vmatpush1.bf16.msra.mxu0 0
    %2398 = vmatprep.subr.bf16.mxu0 0
    %2399 = vmatpush1.bf16.msra.mxu0 0
    %2400 = vmatprep.subr.bf16.mxu0 0
    %2401 = vmatpush1.bf16.msra.mxu0 0
    %2402 = vmatprep.subr.bf16.mxu0 0
    %2403 = vmatpush1.bf16.msra.mxu0 0
    %2404 = vmatprep.subr.bf16.mxu0 0
    %2405 = vmatpush1.bf16.msra.mxu0 0
    %2406 = vmatprep.subr.bf16.mxu0 0
    %2407 = vmatpush1.bf16.msra.mxu0 0
    %2408 = vmatprep.subr.bf16.mxu0 0
    %2409 = vmatpush1.bf16.msra.mxu0 0
    %2410 = vmatprep.subr.bf16.mxu0 0
    %2411 = vmatpush1.bf16.msra.mxu0 0
    %2412 = vmatprep.subr.bf16.mxu0 0
    %2413 = vmatpush1.bf16.msra.mxu0 0
    %2414 = vmatprep.subr.bf16.mxu0 0
    %2415 = vmatpush1.bf16.msra.mxu0 0
    %2416 = vmatprep.subr.bf16.mxu0 0
    %2417 = vmatpush1.bf16.msra.mxu0 0
    %2418 = vmatprep.mubr.bf16.mxu0 0
    %2419 = vmatmul.mubr.bf16.gmra.mrb[0].mxu0 %v2381
    %v2420 = vpop.f32.mrb[0].mxu0
    %v2421 = vadd.f32 0.0, %v2420
    %v2422 = vpop.f32.mrb[0].mxu0
    %v2423 = vpop.f32.mrb[0].mxu0
    %v2424 = vpop.f32.mrb[0].mxu0
    %2425 = vdwg.mxu0
    %2428 = vrot.lane.b32.xlu0 %v1933, 8
    %v2429 = vpop.permute.xlu0 %2428
    %2430 = vrot.lane.b32.xlu0 %v1981, 8
    %v2431 = vpop.permute.xlu0 %2430
    %2436 = vrot.lane.b32.xlu0 %v2153, 16
    %v2437 = vpop.permute.xlu0 %2436
    %2438 = vrot.lane.b32.xlu0 %v2201, 16
    %v2439 = vpop.permute.xlu0 %2438
    %2444 = vrot.lane.b32.xlu0 %v2373, 24
    %v2445 = vpop.permute.xlu0 %2444
    %2446 = vrot.lane.b32.xlu0 %v2421, 24
    %v2447 = vpop.permute.xlu0 %2446
    %v2450 = vsel %vm217, %v1711, %v2429
    %v2451 = vsel %vm217, %v1759, %v2431
    %v2452 = vsel %vm1122, %v2450, %v2437
    %v2453 = vsel %vm1122, %v2451, %v2439
    %v2454 = vsel %vm1125, %v2452, %v2445
    %v2455 = vsel %vm1125, %v2453, %v2447
    %v2456 = vpack.c.bf16 %v2455, %v2454
    %v2458 = vlaneseq
    %v2459 = vshrl.u32 %v2458, 7
    %v2460 = vsub.s32 0, %v2459
    %v2461 = vrot.slane %v1450, %v2460
    %v2467 = vunpack.c.l.b16 %v1445
    %v2468 = vunpack.c.l.b16 %v1446
    %v2469 = vunpack.c.l.b16 %v1447
    %v2470 = vunpack.c.l.b16 %v1448
    %v2471 = vpack.c.b16 %v2468, %v2467
    %v2472 = vpack.c.b16 %v2470, %v2469
    %v2476 = vsel %vm163, %v2456, 0
    %2478 = vmatprep.subr.bf16.mxu0 0
    %2479 = vmatpush1.bf16.msra.mxu0 %v2471
    %2480 = vmatprep.subr.bf16.mxu0 0
    %2481 = vmatpush1.bf16.msra.mxu0 %v2472
    %2482 = vmatprep.subr.bf16.mxu0 0
    %2483 = vmatpush1.bf16.msra.mxu0 0
    %2484 = vmatprep.subr.bf16.mxu0 0
    %2485 = vmatpush1.bf16.msra.mxu0 0
    %2486 = vmatprep.subr.bf16.mxu0 0
    %2487 = vmatpush1.bf16.msra.mxu0 0
    %2488 = vmatprep.subr.bf16.mxu0 0
    %2489 = vmatpush1.bf16.msra.mxu0 0
    %2490 = vmatprep.subr.bf16.mxu0 0
    %2491 = vmatpush1.bf16.msra.mxu0 0
    %2492 = vmatprep.subr.bf16.mxu0 0
    %2493 = vmatpush1.bf16.msra.mxu0 0
    %2494 = vmatprep.subr.bf16.mxu0 0
    %2495 = vmatpush1.bf16.msra.mxu0 0
    %2496 = vmatprep.subr.bf16.mxu0 0
    %2497 = vmatpush1.bf16.msra.mxu0 0
    %2498 = vmatprep.subr.bf16.mxu0 0
    %2499 = vmatpush1.bf16.msra.mxu0 0
    %2500 = vmatprep.subr.bf16.mxu0 0
    %2501 = vmatpush1.bf16.msra.mxu0 0
    %2502 = vmatprep.subr.bf16.mxu0 0
    %2503 = vmatpush1.bf16.msra.mxu0 0
    %2504 = vmatprep.subr.bf16.mxu0 0
    %2505 = vmatpush1.bf16.msra.mxu0 0
    %2506 = vmatprep.subr.bf16.mxu0 0
    %2507 = vmatpush1.bf16.msra.mxu0 0
    %2508 = vmatprep.subr.bf16.mxu0 0
    %2509 = vmatpush1.bf16.msra.mxu0 0
    %2510 = vmatprep.mubr.bf16.mxu0 0
    %2511 = vmatmul.mubr.bf16.gmra.mrb[0].mxu0 %v2476
    %v2512 = vpop.f32.mrb[0].mxu0
    %v2513 = vadd.f32 %v2461, %v2512
    %v2514 = vpop.f32.mrb[0].mxu0
    %v2515 = vpop.f32.mrb[0].mxu0
    %v2516 = vadd.f32 %v2461, %v2515
    %v2517 = vpop.f32.mrb[0].mxu0
    %2518 = vdwg.mxu0
    %v2519 = vadd.f32 %v1435, %v2513
    %v2520 = vadd.f32 %v1436, %v2516
    %v2521 = vsel %vm163, %v2519, 0.0
    %2522 = vadd.xlane.f32.xlu0 %v2521
    %v2523 = vpop.xlane.xlu0 %2522
    %v2524 = vsel %vm163, %v2520, 0.0
    %2525 = vadd.xlane.f32.xlu0 %v2524
    %v2526 = vpop.xlane.xlu0 %2525
    %v2527 = vmul.f32 %v2523, %v1199
    %v2528 = vmul.f32 %v2526, %v1199
    %v2529 = vsub.f32 %v2519, %v2527
    %v2530 = vsub.f32 %v2520, %v2528
    %v2531 = vmul.f32 %v2529, %v2529
    %v2532 = vmul.f32 %v2530, %v2530
    %v2533 = vsel %vm163, %v2531, 0.0
    %2534 = vadd.xlane.f32.xlu0 %v2533
    %v2535 = vpop.xlane.xlu0 %2534
    %v2536 = vsel %vm163, %v2532, 0.0
    %2537 = vadd.xlane.f32.xlu0 %v2536
    %v2538 = vpop.xlane.xlu0 %2537
    %v2539 = vmul.f32 %v2535, %v1199
    %v2540 = vmul.f32 %v2538, %v1199
    %v2541 = vadd.f32 %v2539, 1e-05
    %v2542 = vadd.f32 %v2540, 1e-05
    %v2543 = vrsqrt.pop %v2541
    %v2544 = vrsqrt.pop %v2542
    %v2545 = vmul.f32 %v2529, %v2543
    %v2546 = vmul.f32 %v2530, %v2544
    %v2548 = vlaneseq
    %v2549 = vshrl.u32 %v2548, 7
    %v2550 = vsub.s32 0, %v2549
    %v2551 = vrot.slane %v1452, %v2550
    %v2553 = vmul.f32 %v2545, %v2551
    %v2554 = vmul.f32 %v2546, %v2551
    %v2556 = vlaneseq
    %v2557 = vshrl.u32 %v2556, 7
    %v2558 = vsub.s32 0, %v2557
    %v2559 = vrot.slane %v1454, %v2558
    %v2561 = vadd.f32 %v2553, %v2559
    %v2562 = vadd.f32 %v2554, %v2559
    %v2563 = vpack.c.bf16 %v2562, %v2561
    %v2565 = vlaneseq
    %v2566 = vshrl.u32 %v2565, 7
    %v2567 = vsub.s32 0, %v2566
    %v2568 = vrot.slane %v1461, %v2567
    %v2574 = vunpack.c.l.b16 %v1456
    %v2575 = vunpack.c.l.b16 %v1457
    %v2576 = vunpack.c.l.b16 %v1458
    %v2577 = vunpack.c.l.b16 %v1459
    %v2578 = vpack.c.b16 %v2575, %v2574
    %v2579 = vpack.c.b16 %v2577, %v2576
    %v2583 = vsel %vm163, %v2563, 0
    %2585 = vmatprep.subr.bf16.mxu0 0
    %2586 = vmatpush1.bf16.msra.mxu0 %v2578
    %2587 = vmatprep.subr.bf16.mxu0 0
    %2588 = vmatpush1.bf16.msra.mxu0 %v2579
    %2589 = vmatprep.subr.bf16.mxu0 0
    %2590 = vmatpush1.bf16.msra.mxu0 0
    %2591 = vmatprep.subr.bf16.mxu0 0
    %2592 = vmatpush1.bf16.msra.mxu0 0
    %2593 = vmatprep.subr.bf16.mxu0 0
    %2594 = vmatpush1.bf16.msra.mxu0 0
    %2595 = vmatprep.subr.bf16.mxu0 0
    %2596 = vmatpush1.bf16.msra.mxu0 0
    %2597 = vmatprep.subr.bf16.mxu0 0
    %2598 = vmatpush1.bf16.msra.mxu0 0
    %2599 = vmatprep.subr.bf16.mxu0 0
    %2600 = vmatpush1.bf16.msra.mxu0 0
    %2601 = vmatprep.subr.bf16.mxu0 0
    %2602 = vmatpush1.bf16.msra.mxu0 0
    %2603 = vmatprep.subr.bf16.mxu0 0
    %2604 = vmatpush1.bf16.msra.mxu0 0
    %2605 = vmatprep.subr.bf16.mxu0 0
    %2606 = vmatpush1.bf16.msra.mxu0 0
    %2607 = vmatprep.subr.bf16.mxu0 0
    %2608 = vmatpush1.bf16.msra.mxu0 0
    %2609 = vmatprep.subr.bf16.mxu0 0
    %2610 = vmatpush1.bf16.msra.mxu0 0
    %2611 = vmatprep.subr.bf16.mxu0 0
    %2612 = vmatpush1.bf16.msra.mxu0 0
    %2613 = vmatprep.subr.bf16.mxu0 0
    %2614 = vmatpush1.bf16.msra.mxu0 0
    %2615 = vmatprep.subr.bf16.mxu0 0
    %2616 = vmatpush1.bf16.msra.mxu0 0
    %2617 = vmatprep.mubr.bf16.mxu0 0
    %2618 = vmatmul.mubr.bf16.gmra.mrb[0].mxu0 %v2583
    %v2619 = vpop.f32.mrb[0].mxu0
    %v2620 = vadd.f32 %v2568, %v2619
    %v2621 = vpop.f32.mrb[0].mxu0
    %v2622 = vpop.f32.mrb[0].mxu0
    %v2623 = vadd.f32 %v2568, %v2622
    %v2624 = vpop.f32.mrb[0].mxu0
    %2625 = vdwg.mxu0
    %v2626 = vmul.f32 %v2620, 0.5
    %v2627 = vmul.f32 %v2623, 0.5
    %v2628 = vmul.f32 %v2620, 0.044715
    %v2629 = vmul.f32 %v2623, 0.044715
    %v2630 = vmul.f32 %v2628, %v2620
    %v2631 = vmul.f32 %v2629, %v2623
    %v2632 = vmul.f32 %v2630, %v2620
    %v2633 = vmul.f32 %v2631, %v2623
    %v2634 = vadd.f32 %v2620, %v2632
    %v2635 = vadd.f32 %v2623, %v2633
    %v2636 = vmul.f32 %v2634, 0.7978846
    %v2637 = vmul.f32 %v2635, 0.7978846
    %v2638 = vtanh.pop %v2636
    %v2639 = vtanh.pop %v2637
    %v2640 = vadd.f32 %v2638, 1.0
    %v2641 = vadd.f32 %v2639, 1.0
    %v2642 = vmul.f32 %v2626, %v2640
    %v2643 = vmul.f32 %v2627, %v2641
    %v2644 = vpack.c.bf16 %v2643, %v2642
    %v2646 = vlaneseq
    %v2647 = vshrl.u32 %v2646, 7
    %v2648 = vsub.s32 0, %v2647
    %v2649 = vrot.slane %v1472, %v2648
    %v2659 = vunpack.c.l.b16 %v1463
    %v2660 = vunpack.c.l.b16 %v1464
    %v2661 = vunpack.c.l.b16 %v1465
    %v2662 = vunpack.c.l.b16 %v1466
    %v2663 = vunpack.c.l.b16 %v1467
    %v2664 = vunpack.c.l.b16 %v1468
    %v2665 = vunpack.c.l.b16 %v1469
    %v2666 = vunpack.c.l.b16 %v1470
    %v2667 = vpack.c.b16 %v2660, %v2659
    %v2668 = vpack.c.b16 %v2662, %v2661
    %v2669 = vpack.c.b16 %v2664, %v2663
    %v2670 = vpack.c.b16 %v2666, %v2665
    %v2676 = vsel %vm1348, %v2644, 0
    %2678 = vmatprep.subr.bf16.mxu0 0
    %2679 = vmatpush1.bf16.msra.mxu0 %v2667
    %2680 = vmatprep.subr.bf16.mxu0 0
    %2681 = vmatpush1.bf16.msra.mxu0 %v2668
    %2682 = vmatprep.subr.bf16.mxu0 0
    %2683 = vmatpush1.bf16.msra.mxu0 %v2669
    %2684 = vmatprep.subr.bf16.mxu0 0
    %2685 = vmatpush1.bf16.msra.mxu0 %v2670
    %2686 = vmatprep.subr.bf16.mxu0 0
    %2687 = vmatpush1.bf16.msra.mxu0 0
    %2688 = vmatprep.subr.bf16.mxu0 0
    %2689 = vmatpush1.bf16.msra.mxu0 0
    %2690 = vmatprep.subr.bf16.mxu0 0
    %2691 = vmatpush1.bf16.msra.mxu0 0
    %2692 = vmatprep.subr.bf16.mxu0 0
    %2693 = vmatpush1.bf16.msra.mxu0 0
    %2694 = vmatprep.subr.bf16.mxu0 0
    %2695 = vmatpush1.bf16.msra.mxu0 0
    %2696 = vmatprep.subr.bf16.mxu0 0
    %2697 = vmatpush1.bf16.msra.mxu0 0
    %2698 = vmatprep.subr.bf16.mxu0 0
    %2699 = vmatpush1.bf16.msra.mxu0 0
    %2700 = vmatprep.subr.bf16.mxu0 0
    %2701 = vmatpush1.bf16.msra.mxu0 0
    %2702 = vmatprep.subr.bf16.mxu0 0
    %2703 = vmatpush1.bf16.msra.mxu0 0
    %2704 = vmatprep.subr.bf16.mxu0 0
    %2705 = vmatpush1.bf16.msra.mxu0 0
    %2706 = vmatprep.subr.bf16.mxu0 0
    %2707 = vmatpush1.bf16.msra.mxu0 0
    %2708 = vmatprep.subr.bf16.mxu0 0
    %2709 = vmatpush1.bf16.msra.mxu0 0
    %2710 = vmatprep.mubr.bf16.mxu0 0
    %2711 = vmatmul.mubr.bf16.gmra.mrb[0].mxu0 %v2676
    %v2712 = vpop.f32.mrb[0].mxu0
    %v2713 = vadd.f32 %v2649, %v2712
    %v2714 = vpop.f32.mrb[0].mxu0
    %v2715 = vpop.f32.mrb[0].mxu0
    %v2716 = vadd.f32 %v2649, %v2715
    %v2717 = vpop.f32.mrb[0].mxu0
    %2718 = vdwg.mxu0
    %v2719 = vadd.f32 %v2561, %v2713
    %v2720 = vadd.f32 %v2562, %v2716
    %v2721 = vsel %vm163, %v2719, 0.0
    %2722 = vadd.xlane.f32.xlu0 %v2721
    %v2723 = vpop.xlane.xlu0 %2722
    %v2724 = vsel %vm163, %v2720, 0.0
    %2725 = vadd.xlane.f32.xlu0 %v2724
    %v2726 = vpop.xlane.xlu0 %2725
    %v2727 = vmul.f32 %v2723, %v1199
    %v2728 = vmul.f32 %v2726, %v1199
    %v2729 = vsub.f32 %v2719, %v2727
    %v2730 = vsub.f32 %v2720, %v2728
    %v2731 = vmul.f32 %v2729, %v2729
    %v2732 = vmul.f32 %v2730, %v2730
    %v2733 = vsel %vm163, %v2731, 0.0
    %2734 = vadd.xlane.f32.xlu0 %v2733
    %v2735 = vpop.xlane.xlu0 %2734
    %v2736 = vsel %vm163, %v2732, 0.0
    %2737 = vadd.xlane.f32.xlu0 %v2736
    %v2738 = vpop.xlane.xlu0 %2737
    %v2739 = vmul.f32 %v2735, %v1199
    %v2740 = vmul.f32 %v2738, %v1199
    %v2741 = vadd.f32 %v2739, 1e-05
    %v2742 = vadd.f32 %v2740, 1e-05
    %v2743 = vrsqrt.pop %v2741
    %v2744 = vrsqrt.pop %v2742
    %v2745 = vmul.f32 %v2729, %v2743
    %v2746 = vmul.f32 %v2730, %v2744
    %v2748 = vlaneseq
    %v2749 = vshrl.u32 %v2748, 7
    %v2750 = vsub.s32 0, %v2749
    %v2751 = vrot.slane %v1474, %v2750
    %v2753 = vmul.f32 %v2745, %v2751
    %v2754 = vmul.f32 %v2746, %v2751
    %v2756 = vlaneseq
    %v2757 = vshrl.u32 %v2756, 7
    %v2758 = vsub.s32 0, %v2757
    %v2759 = vrot.slane %v1476, %v2758
    %v2761 = vadd.f32 %v2753, %v2759
    %v2762 = vadd.f32 %v2754, %v2759
    %2763 = vst.msk [vmem:[#allocation11] sm:$0xff] %vm163, %v2761
    %2764 = vst.msk [vmem:[#allocation11 + $0x8] sm:$0xff] %vm163, %v2762
    // Predicated region
    $region74: #{tpu_custom_call.1} parent=1 // pred_check
      _
    $region75: #{tpu_custom_call.1} parent=1 // pred_check_branch
      %2766 = sbr.rel (0) target = $region77
    $region76: #{tpu_custom_call.1} parent=1 // pred_region
      %s2768 = ssub.s32 256, 256
      %2769 = vsyncadd [#allocation4], %s2768
      %s2770 = sshll.u32 [#allocation11], 4
      %s2771 = int_to_ptr.vmem [resolvable:$true] %s2770
      %2776 = dma.vmem_to_hbm [thread:$0]  %s2771, 256, %s13, [#allocation4], 128, 128, 8
    $region77: #{tpu_custom_call.1} parent=1 // pred_fallthru
      _
    // Predicated region
    $region78: #{tpu_custom_call.1} parent=1 // pred_check
      _
    $region79: #{tpu_custom_call.1} parent=1 // pred_check_branch
      %2778 = sbr.rel (0) target = $region81
    $region80: #{tpu_custom_call.1} parent=1 // pred_region
      %2779 = dma.done [#allocation4], 256
    $region81: #{tpu_custom_call.1} parent=1 // pred_fallthru
      _
    %2780 = vsyncpa [#allocation3], 1
    %2781 = vsyncpa [#allocation6], 1
    %2782 = vsyncpa [#allocation9], 1
    %2783 = vsyncpa [#allocation4], 1

</llo_original>
